<compile_context>
chip_gen: v5e
topology: v5e:2x2
jax: 0.10.0
libtpu: 0.0.40
codegen_flags: <defaults>
</compile_context>

<pallas_src>
import functools

import jax
import jax.numpy as jnp
from jax.experimental import pallas as pl
from jax.experimental.pallas import tpu as pltpu

EPS = 1e-6  # timm ViT LayerNorm eps


def _layernorm(x, g, b, eps=EPS):
    """Row-wise LayerNorm in f32. g, b are (1, D)."""
    x = x.astype(jnp.float32)
    mean = jnp.mean(x, axis=-1, keepdims=True)
    xc = x - mean
    var = jnp.mean(xc * xc, axis=-1, keepdims=True)
    return xc * jax.lax.rsqrt(var + eps) * g + b


# ---------------------------------------------------------------------------
# Kernel 1: fused patch embed = im2col-matmul (MXU) + cls row + pos_embed + norm_pre
# ---------------------------------------------------------------------------
def _embed_kernel(p_ref, w_ref, pos_ref, cls_ref, ln_ref, o_ref):
    # p_ref: (1, nP, Kpad) bf16   w_ref: (Kpad, D) bf16
    # pos_ref: (N, D) f32         cls_ref: (1, D) f32      ln_ref: (2, D) f32
    patches = jnp.dot(p_ref[0], w_ref[...], preferred_element_type=jnp.float32)  # (nP, D)
    tok = jnp.concatenate([cls_ref[...], patches], axis=0) + pos_ref[...]        # (N, D)
    o_ref[0] = _layernorm(tok, ln_ref[0:1, :], ln_ref[1:2, :]).astype(o_ref.dtype)


# ---------------------------------------------------------------------------
# Kernel 2: full transformer stack, grid=(B, depth), residual stream in VMEM
# ---------------------------------------------------------------------------
def _block_kernel(x_ref, ln1_ref, wqkv_ref, bqkv_ref, wproj_ref, bproj_ref,
                  ln2_ref, wfc1_ref, bfc1_ref, wfc2_ref, bfc2_ref,
                  o_ref, acc_ref, *, heads):
    d = pl.program_id(1)

    @pl.when(d == 0)
    def _():  # load the residual stream once per image; stays in VMEM across depth
        acc_ref[...] = x_ref[0].astype(jnp.float32)

    x = acc_ref[...]                                                   # (N, D) f32
    N, D = x.shape
    hd = D // heads

    # ---- attention branch: LN1 fused as prologue, fused QKV matmul ----
    h = _layernorm(x, ln1_ref[0, 0:1, :], ln1_ref[0, 1:2, :]).astype(jnp.bfloat16)
    qkv = jnp.dot(h, wqkv_ref[0], preferred_element_type=jnp.float32) + bqkv_ref[0]
    # 1/sqrt(hd) is pre-folded into the q columns of wqkv/bqkv (see init_params).
    q = qkv[:, 0:D].astype(jnp.bfloat16)
    k = qkv[:, D:2 * D].astype(jnp.bfloat16)
    v = qkv[:, 2 * D:3 * D].astype(jnp.bfloat16)

    dn = (((1,), (1,)), ((), ()))  # q @ k^T without materializing k.T
    heads_out = []
    for hh in range(heads):
        sl = slice(hh * hd, (hh + 1) * hd)
        s = jax.lax.dot_general(q[:, sl], k[:, sl], dn,
                                preferred_element_type=jnp.float32)    # (N, N)
        s = s - jnp.max(s, axis=-1, keepdims=True)
        p = jnp.exp(s)
        p = p * pl.reciprocal(jnp.sum(p, axis=-1, keepdims=True), approx=True)
        heads_out.append(jnp.dot(p.astype(jnp.bfloat16), v[:, sl],
                                 preferred_element_type=jnp.float32))  # (N, hd)
    # Merged output projection: one (N,D)@(D,D) MXU matmul (full-K contraction).
    attn = jnp.concatenate(heads_out, axis=-1).astype(jnp.bfloat16)    # (N, D)
    x = x + jnp.dot(attn, wproj_ref[0],
                    preferred_element_type=jnp.float32) + bproj_ref[0]

    # ---- MLP branch: LN2 fused as prologue ----
    h2 = _layernorm(x, ln2_ref[0, 0:1, :], ln2_ref[0, 1:2, :]).astype(jnp.bfloat16)
    f1 = jnp.dot(h2, wfc1_ref[0], preferred_element_type=jnp.float32) + bfc1_ref[0]
    # TODO(synk): timm nn.GELU is erf-exact; tanh approximation used here (EUP path).
    f1 = jax.nn.gelu(f1, approximate=True).astype(jnp.bfloat16)
    f2 = jnp.dot(f1, wfc2_ref[0], preferred_element_type=jnp.float32) + bfc2_ref[0]
    acc_ref[...] = x + f2                                              # residual epilogue

    @pl.when(d == pl.num_programs(1) - 1)
    def _():  # write back to HBM only once, after the last block
        o_ref[0] = acc_ref[...].astype(o_ref.dtype)


# ---------------------------------------------------------------------------
# Kernel 3: fused head = mean over patch tokens (exclude cls) + fc_norm(LN)
# ---------------------------------------------------------------------------
def _pool_head_kernel(x_ref, ln_ref, o_ref, *, inv_np):
    x = x_ref[0].astype(jnp.float32)                                   # (N, D)
    # sum-minus-row0 instead of x[1:] slice (avoids a near-full VMEM copy)
    pooled = (jnp.sum(x, axis=0, keepdims=True) - x[0:1, :]) * inv_np  # (1, D)
    o_ref[0] = _layernorm(pooled, ln_ref[0:1, :], ln_ref[1:2, :]).astype(o_ref.dtype)


# ---------------------------------------------------------------------------
# Glue: im2col, parameter setup, forward wiring
# ---------------------------------------------------------------------------
def _round_up(x, m):
    return ((x + m - 1) // m) * m


def extract_patches(x, P, k_pad):
    """NCHW -> (B, nP, k_pad) with (C, ph, pw) flatten order (matches nn.Conv2d weight),
    zero-padded on the last axis to a lane-aligned K."""
    B, C, H, W = x.shape
    x = x.reshape(B, C, H // P, P, W // P, P)
    x = x.transpose(0, 2, 4, 1, 3, 5)
    x = x.reshape(B, (H // P) * (W // P), C * P * P)
    pad = k_pad - C * P * P
    if pad:
        x = jnp.pad(x, ((0, 0), (0, 0), (0, pad)))
    return x


def init_params(key, *, C, P, D, depth, mlp, n_tokens, heads):
    # TODO(synk): pretrained laion2b weights cannot be loaded in-script; parameters
    # are synthesized deterministically with matching shapes / layout.
    Cpp = C * P * P
    Cpp_pad = _round_up(Cpp, 128)
    hd = D // heads
    scale = hd ** -0.5

    kp, kc, kpos, kq, kpr, kf1, kf2 = jax.random.split(key, 7)

    def w(k, shape, s=0.02):
        return s * jax.random.normal(k, shape, jnp.float32)

    def ln_stack(n):
        one = jnp.concatenate([jnp.ones((1, D), jnp.float32),
                               jnp.zeros((1, D), jnp.float32)], axis=0)   # (2, D)
        return jnp.tile(one[None], (n, 1, 1)) if n else one

    # Patch conv weight (D, C, P, P) flattened+T; bias=False (pre_norm). K padded with zeros.
    patch_w = jnp.zeros((Cpp_pad, D), jnp.float32).at[:Cpp].set(w(kp, (Cpp, D)))

    # Fused QKV, with attention scale folded into the q columns (weights AND bias).
    scale_cols = jnp.concatenate([jnp.full((D,), scale, jnp.float32),
                                  jnp.ones((2 * D,), jnp.float32)])
    wqkv = w(kq, (depth, D, 3 * D)) * scale_cols
    bqkv = jnp.zeros((depth, 1, 3 * D), jnp.float32) * scale_cols

    params = {
        "patch_w": patch_w.astype(jnp.bfloat16),
        "cls": w(kc, (1, D)),
        "pos": w(kpos, (n_tokens, D)),
        "pre_ln": ln_stack(0),
        "fc_ln": ln_stack(0),
        # stacked per-block params, leading depth axis (indexed by the depth grid axis)
        "ln1": ln_stack(depth),
        "wqkv": wqkv.astype(jnp.bfloat16),
        "bqkv": bqkv,
        "wproj": w(kpr, (depth, D, D)).astype(jnp.bfloat16),
        "bproj": jnp.zeros((depth, 1, D), jnp.float32),
        "ln2": ln_stack(depth),
        "wfc1": w(kf1, (depth, D, mlp)).astype(jnp.bfloat16),
        "bfc1": jnp.zeros((depth, 1, mlp), jnp.float32),
        "wfc2": w(kf2, (depth, mlp, D)).astype(jnp.bfloat16),
        "bfc2": jnp.zeros((depth, 1, D), jnp.float32),
    }
    return params


def image_encoder_forward(params, x, *, patch, heads):
    B, C, H, W = x.shape
    D = params["pos"].shape[-1]
    nP = (H // patch) * (W // patch)
    N = nP + 1
    Kpad = params["patch_w"].shape[0]
    depth = params["ln1"].shape[0]
    F = params["wfc1"].shape[-1]
    par1 = pltpu.CompilerParams(dimension_semantics=("parallel",))

    # --- patch embed: im2col (glue) + fused [matmul + cls + pos_embed + norm_pre] ---
    patches = extract_patches(x, patch, Kpad).astype(jnp.bfloat16)      # (B, nP, Kpad)
    tok = pl.pallas_call(
        _embed_kernel,
        out_shape=jax.ShapeDtypeStruct((B, N, D), jnp.bfloat16),
        grid=(B,),
        in_specs=[
            pl.BlockSpec((1, nP, Kpad), lambda b: (b, 0, 0)),
            pl.BlockSpec((Kpad, D), lambda b: (0, 0)),
            pl.BlockSpec((N, D), lambda b: (0, 0)),
            pl.BlockSpec((1, D), lambda b: (0, 0)),
            pl.BlockSpec((2, D), lambda b: (0, 0)),
        ],
        out_specs=pl.BlockSpec((1, N, D), lambda b: (b, 0, 0)),
        compiler_params=par1,
    )(patches, params["patch_w"], params["pos"], params["cls"], params["pre_ln"])

    # --- transformer stack: ONE pallas_call, grid=(B, depth) ---
    tok_spec = pl.BlockSpec((1, N, D), lambda b, d: (b, 0, 0))
    wspec = lambda shape: pl.BlockSpec((1,) + shape, lambda b, d: (d, 0, 0))

    tok = pl.pallas_call(
        functools.partial(_block_kernel, heads=heads),
        out_shape=jax.ShapeDtypeStruct((B, N, D), jnp.bfloat16),
        grid=(B, depth),
        in_specs=[
            tok_spec,
            wspec((2, D)),
            wspec((D, 3 * D)), wspec((1, 3 * D)),
            wspec((D, D)), wspec((1, D)),
            wspec((2, D)),
            wspec((D, F)), wspec((1, F)),
            wspec((F, D)), wspec((1, D)),
        ],
        out_specs=tok_spec,
        scratch_shapes=[pltpu.VMEM((N, D), jnp.float32)],   # persistent residual stream
        compiler_params=pltpu.CompilerParams(
            dimension_semantics=("parallel", "arbitrary"),
            vmem_limit_bytes=48 * 1024 * 1024),
    )(tok, params["ln1"], params["wqkv"], params["bqkv"],
      params["wproj"], params["bproj"], params["ln2"],
      params["wfc1"], params["bfc1"], params["wfc2"], params["bfc2"])

    # --- head: mean over patch tokens (cls excluded) + fc_norm, fused ---
    pooled = pl.pallas_call(
        functools.partial(_pool_head_kernel, inv_np=1.0 / nP),
        out_shape=jax.ShapeDtypeStruct((B, 1, D), jnp.float32),
        grid=(B,),
        in_specs=[pl.BlockSpec((1, N, D), lambda b: (b, 0, 0)),
                  pl.BlockSpec((2, D), lambda b: (0, 0))],
        out_specs=pl.BlockSpec((1, 1, D), lambda b: (b, 0, 0)),
        compiler_params=par1,
    )(tok, params["fc_ln"])
    return pooled.reshape(B, D)


# ---------------------------------------------------------------------------
# Demo
# ---------------------------------------------------------------------------
if __name__ == "__main__":
    # Small ViT config consistent with the module's forward:
    # image 32x32x3, patch 8 -> 16 patch tokens (+1 cls), embed 128 (lane-dense),
    # 2 blocks, 4 heads (head_dim 32), MLP 4x.
    B, C, IMG, P = 2, 3, 32, 8
    D, DEPTH, HEADS = 128, 2, 4
    MLP = 4 * D
    N_TOKENS = (IMG // P) * (IMG // P) + 1

    x = jax.random.normal(jax.random.PRNGKey(0), (B, C, IMG, IMG), jnp.float32)
    params = init_params(jax.random.PRNGKey(1), C=C, P=P, D=D, depth=DEPTH,
                         mlp=MLP, n_tokens=N_TOKENS, heads=HEADS)

    fwd = jax.jit(functools.partial(image_encoder_forward, patch=P, heads=HEADS))
    out = jax.block_until_ready(fwd(params, x))

    assert out.shape == (B, D), out.shape
    assert bool(jnp.all(jnp.isfinite(out)))
    print("KERNEL_OK")
</pallas_src>

<mosaic_0001>
module attributes {stable_mosaic.version = 11 : i64} {
  func.func @_block_kernel(%arg0: i32, %arg1: i32, %arg2: memref<1x17x128xbf16, #tpu.memory_space<vmem>>, %arg3: memref<1x2x128xf32, #tpu.memory_space<vmem>>, %arg4: memref<1x128x384xbf16, #tpu.memory_space<vmem>>, %arg5: memref<1x1x384xf32, #tpu.memory_space<vmem>>, %arg6: memref<1x128x128xbf16, #tpu.memory_space<vmem>>, %arg7: memref<1x1x128xf32, #tpu.memory_space<vmem>>, %arg8: memref<1x2x128xf32, #tpu.memory_space<vmem>>, %arg9: memref<1x128x512xbf16, #tpu.memory_space<vmem>>, %arg10: memref<1x1x512xf32, #tpu.memory_space<vmem>>, %arg11: memref<1x512x128xbf16, #tpu.memory_space<vmem>>, %arg12: memref<1x1x128xf32, #tpu.memory_space<vmem>>, %arg13: memref<1x17x128xbf16, #tpu.memory_space<vmem>>, %arg14: memref<17x128xf32, #tpu.memory_space<vmem>>) attributes {dimension_semantics = [#tpu.dimension_semantics<parallel>, #tpu.dimension_semantics<arbitrary>], iteration_bounds = array<i64: 2, 2>, scalar_prefetch = 0 : i64, scratch_operands = 1 : i64, tpu.core_type = #tpu.core_type<tc>, window_params = [{transform_indices = @transform_0, window_bounds = array<i64: 1, 17, 128>}, {transform_indices = @transform_1, window_bounds = array<i64: 1, 2, 128>}, {transform_indices = @transform_2, window_bounds = array<i64: 1, 128, 384>}, {transform_indices = @transform_3, window_bounds = array<i64: 1, 1, 384>}, {transform_indices = @transform_4, window_bounds = array<i64: 1, 128, 128>}, {transform_indices = @transform_5, window_bounds = array<i64: 1, 1, 128>}, {transform_indices = @transform_6, window_bounds = array<i64: 1, 2, 128>}, {transform_indices = @transform_7, window_bounds = array<i64: 1, 128, 512>}, {transform_indices = @transform_8, window_bounds = array<i64: 1, 1, 512>}, {transform_indices = @transform_9, window_bounds = array<i64: 1, 512, 128>}, {transform_indices = @transform_10, window_bounds = array<i64: 1, 1, 128>}, {transform_indices = @transform_11, window_bounds = array<i64: 1, 17, 128>}]} {
    %c0_i32 = arith.constant 0 : i32
    %0 = arith.cmpi eq, %arg1, %c0_i32 : i32
    %1 = arith.extui %0 : i1 to i32
    %c0_i32_0 = arith.constant 0 : i32
    %2 = arith.cmpi ne, %1, %c0_i32_0 : i32
    scf.if %2 {
      %c0_73 = arith.constant 0 : index
      %c0_74 = arith.constant 0 : index
      %c0_75 = arith.constant 0 : index
      %174 = vector.load %arg2[%c0_73, %c0_74, %c0_75] : memref<1x17x128xbf16, #tpu.memory_space<vmem>>, vector<1x17x128xbf16>
      %175 = vector.shape_cast %174 : vector<1x17x128xbf16> to vector<17x128xbf16>
      %176 = arith.extf %175 : vector<17x128xbf16> to vector<17x128xf32>
      %c0_76 = arith.constant 0 : index
      %c0_77 = arith.constant 0 : index
      %177 = vector.load %arg14[%c0_76, %c0_77] : memref<17x128xf32, #tpu.memory_space<vmem>>, vector<17x128xf32>
      tpu.vector_store %arg14[%c0_76, %c0_77], %176 {strides = array<i32>} : memref<17x128xf32, #tpu.memory_space<vmem>>, vector<17x128xf32>,
    } else {
    }
    %c0 = arith.constant 0 : index
    %c0_1 = arith.constant 0 : index
    %3 = vector.load %arg14[%c0, %c0_1] : memref<17x128xf32, #tpu.memory_space<vmem>>, vector<17x128xf32>
    %c0_2 = arith.constant 0 : index
    %c0_3 = arith.constant 0 : index
    %c0_4 = arith.constant 0 : index
    %4 = vector.load %arg3[%c0_2, %c0_3, %c0_4] : memref<1x2x128xf32, #tpu.memory_space<vmem>>, vector<1x1x128xf32>
    %5 = vector.shape_cast %4 : vector<1x1x128xf32> to vector<1x128xf32>
    %c0_5 = arith.constant 0 : index
    %c1 = arith.constant 1 : index
    %c0_6 = arith.constant 0 : index
    %6 = vector.load %arg3[%c0_5, %c1, %c0_6] : memref<1x2x128xf32, #tpu.memory_space<vmem>>, vector<1x1x128xf32>
    %7 = vector.shape_cast %6 : vector<1x1x128xf32> to vector<1x128xf32>
    %cst = arith.constant dense<0.000000e+00> : vector<17xf32>
    %8 = vector.multi_reduction <add>, %3, %cst [1] : vector<17x128xf32> to vector<17xf32>
    %9 = vector.shape_cast %8 : vector<17xf32> to vector<17x1xf32>
    %cst_7 = arith.constant 1.280000e+02 : f32
    %10 = vector.broadcast %cst_7 : f32 to vector<17x1xf32>
    %11 = arith.divf %9, %10 : vector<17x1xf32>
    %12 = vector.broadcast %11 : vector<17x1xf32> to vector<17x128xf32>
    %13 = arith.subf %3, %12 : vector<17x128xf32>
    %14 = arith.mulf %13, %13 : vector<17x128xf32>
    %cst_8 = arith.constant dense<0.000000e+00> : vector<17xf32>
    %15 = vector.multi_reduction <add>, %14, %cst_8 [1] : vector<17x128xf32> to vector<17xf32>
    %16 = vector.shape_cast %15 : vector<17xf32> to vector<17x1xf32>
    %cst_9 = arith.constant 1.280000e+02 : f32
    %17 = vector.broadcast %cst_9 : f32 to vector<17x1xf32>
    %18 = arith.divf %16, %17 : vector<17x1xf32>
    %cst_10 = arith.constant 9.99999997E-7 : f32
    %19 = vector.broadcast %cst_10 : f32 to vector<17x1xf32>
    %20 = arith.addf %18, %19 : vector<17x1xf32>
    %21 = math.rsqrt %20 : vector<17x1xf32>
    %22 = vector.broadcast %21 : vector<17x1xf32> to vector<17x128xf32>
    %23 = arith.mulf %13, %22 : vector<17x128xf32>
    %24 = vector.broadcast %5 : vector<1x128xf32> to vector<17x128xf32>
    %25 = arith.mulf %23, %24 : vector<17x128xf32>
    %26 = vector.broadcast %7 : vector<1x128xf32> to vector<17x128xf32>
    %27 = arith.addf %25, %26 : vector<17x128xf32>
    %28 = arith.truncf %27 : vector<17x128xf32> to vector<17x128xbf16>
    %c0_11 = arith.constant 0 : index
    %c0_12 = arith.constant 0 : index
    %c0_13 = arith.constant 0 : index
    %29 = vector.load %arg4[%c0_11, %c0_12, %c0_13] : memref<1x128x384xbf16, #tpu.memory_space<vmem>>, vector<1x128x384xbf16>
    %30 = vector.shape_cast %29 : vector<1x128x384xbf16> to vector<128x384xbf16>
    %cst_14 = arith.constant dense<0.000000e+00> : vector<17x384xf32>
    %31 = tpu.matmul %28, %30, %cst_14 {dimension_numbers = #tpu.dot_dimension_numbers<[1], [0], [0], [1], [0, 0, 1, 1], [], []>} : vector<17x128xbf16>, vector<128x384xbf16>, vector<17x384xf32> -> vector<17x384xf32>
    %c0_15 = arith.constant 0 : index
    %c0_16 = arith.constant 0 : index
    %c0_17 = arith.constant 0 : index
    %32 = vector.load %arg5[%c0_15, %c0_16, %c0_17] : memref<1x1x384xf32, #tpu.memory_space<vmem>>, vector<1x1x384xf32>
    %33 = vector.shape_cast %32 : vector<1x1x384xf32> to vector<1x384xf32>
    %34 = vector.broadcast %33 : vector<1x384xf32> to vector<17x384xf32>
    %35 = arith.addf %31, %34 : vector<17x384xf32>
    %36 = vector.extract_strided_slice %35 {offsets = [0, 0], sizes = [17, 128], strides = [1, 1]} : vector<17x384xf32> to vector<17x128xf32>
    %37 = arith.truncf %36 : vector<17x128xf32> to vector<17x128xbf16>
    %38 = vector.extract_strided_slice %35 {offsets = [0, 128], sizes = [17, 128], strides = [1, 1]} : vector<17x384xf32> to vector<17x128xf32>
    %39 = arith.truncf %38 : vector<17x128xf32> to vector<17x128xbf16>
    %40 = vector.extract_strided_slice %35 {offsets = [0, 256], sizes = [17, 128], strides = [1, 1]} : vector<17x384xf32> to vector<17x128xf32>
    %41 = arith.truncf %40 : vector<17x128xf32> to vector<17x128xbf16>
    %42 = vector.extract_strided_slice %37 {offsets = [0, 0], sizes = [17, 32], strides = [1, 1]} : vector<17x128xbf16> to vector<17x32xbf16>
    %43 = vector.extract_strided_slice %39 {offsets = [0, 0], sizes = [17, 32], strides = [1, 1]} : vector<17x128xbf16> to vector<17x32xbf16>
    %cst_18 = arith.constant dense<0.000000e+00> : vector<17x17xf32>
    %44 = tpu.matmul %42, %43, %cst_18 {dimension_numbers = #tpu.dot_dimension_numbers<[1], [1], [0], [0], [0, 0, 1, 0], [], []>} : vector<17x32xbf16>, vector<17x32xbf16>, vector<17x17xf32> -> vector<17x17xf32>
    %cst_19 = arith.constant dense<0xFF800000> : vector<17xf32>
    %45 = vector.multi_reduction <maximumf>, %44, %cst_19 [1] : vector<17x17xf32> to vector<17xf32>
    %46 = vector.shape_cast %45 : vector<17xf32> to vector<17x1xf32>
    %47 = vector.broadcast %46 : vector<17x1xf32> to vector<17x17xf32>
    %48 = arith.subf %44, %47 : vector<17x17xf32>
    %49 = math.exp %48 : vector<17x17xf32>
    %cst_20 = arith.constant dense<0.000000e+00> : vector<17xf32>
    %50 = vector.multi_reduction <add>, %49, %cst_20 [1] : vector<17x17xf32> to vector<17xf32>
    %51 = vector.shape_cast %50 : vector<17xf32> to vector<17x1xf32>
    %52 = tpu.reciprocal %51 {approx = true} : vector<17x1xf32> -> vector<17x1xf32>
    %53 = vector.broadcast %52 : vector<17x1xf32> to vector<17x17xf32>
    %54 = arith.mulf %49, %53 : vector<17x17xf32>
    %55 = arith.truncf %54 : vector<17x17xf32> to vector<17x17xbf16>
    %56 = vector.extract_strided_slice %41 {offsets = [0, 0], sizes = [17, 32], strides = [1, 1]} : vector<17x128xbf16> to vector<17x32xbf16>
    %cst_21 = arith.constant dense<0.000000e+00> : vector<17x32xf32>
    %57 = tpu.matmul %55, %56, %cst_21 {dimension_numbers = #tpu.dot_dimension_numbers<[1], [0], [0], [1], [0, 0, 1, 1], [], []>} : vector<17x17xbf16>, vector<17x32xbf16>, vector<17x32xf32> -> vector<17x32xf32>
    %58 = vector.extract_strided_slice %37 {offsets = [0, 32], sizes = [17, 32], strides = [1, 1]} : vector<17x128xbf16> to vector<17x32xbf16>
    %59 = vector.extract_strided_slice %39 {offsets = [0, 32], sizes = [17, 32], strides = [1, 1]} : vector<17x128xbf16> to vector<17x32xbf16>
    %cst_22 = arith.constant dense<0.000000e+00> : vector<17x17xf32>
    %60 = tpu.matmul %58, %59, %cst_22 {dimension_numbers = #tpu.dot_dimension_numbers<[1], [1], [0], [0], [0, 0, 1, 0], [], []>} : vector<17x32xbf16>, vector<17x32xbf16>, vector<17x17xf32> -> vector<17x17xf32>
    %cst_23 = arith.constant dense<0xFF800000> : vector<17xf32>
    %61 = vector.multi_reduction <maximumf>, %60, %cst_23 [1] : vector<17x17xf32> to vector<17xf32>
    %62 = vector.shape_cast %61 : vector<17xf32> to vector<17x1xf32>
    %63 = vector.broadcast %62 : vector<17x1xf32> to vector<17x17xf32>
    %64 = arith.subf %60, %63 : vector<17x17xf32>
    %65 = math.exp %64 : vector<17x17xf32>
    %cst_24 = arith.constant dense<0.000000e+00> : vector<17xf32>
    %66 = vector.multi_reduction <add>, %65, %cst_24 [1] : vector<17x17xf32> to vector<17xf32>
    %67 = vector.shape_cast %66 : vector<17xf32> to vector<17x1xf32>
    %68 = tpu.reciprocal %67 {approx = true} : vector<17x1xf32> -> vector<17x1xf32>
    %69 = vector.broadcast %68 : vector<17x1xf32> to vector<17x17xf32>
    %70 = arith.mulf %65, %69 : vector<17x17xf32>
    %71 = arith.truncf %70 : vector<17x17xf32> to vector<17x17xbf16>
    %72 = vector.extract_strided_slice %41 {offsets = [0, 32], sizes = [17, 32], strides = [1, 1]} : vector<17x128xbf16> to vector<17x32xbf16>
    %cst_25 = arith.constant dense<0.000000e+00> : vector<17x32xf32>
    %73 = tpu.matmul %71, %72, %cst_25 {dimension_numbers = #tpu.dot_dimension_numbers<[1], [0], [0], [1], [0, 0, 1, 1], [], []>} : vector<17x17xbf16>, vector<17x32xbf16>, vector<17x32xf32> -> vector<17x32xf32>
    %74 = vector.extract_strided_slice %37 {offsets = [0, 64], sizes = [17, 32], strides = [1, 1]} : vector<17x128xbf16> to vector<17x32xbf16>
    %75 = vector.extract_strided_slice %39 {offsets = [0, 64], sizes = [17, 32], strides = [1, 1]} : vector<17x128xbf16> to vector<17x32xbf16>
    %cst_26 = arith.constant dense<0.000000e+00> : vector<17x17xf32>
    %76 = tpu.matmul %74, %75, %cst_26 {dimension_numbers = #tpu.dot_dimension_numbers<[1], [1], [0], [0], [0, 0, 1, 0], [], []>} : vector<17x32xbf16>, vector<17x32xbf16>, vector<17x17xf32> -> vector<17x17xf32>
    %cst_27 = arith.constant dense<0xFF800000> : vector<17xf32>
    %77 = vector.multi_reduction <maximumf>, %76, %cst_27 [1] : vector<17x17xf32> to vector<17xf32>
    %78 = vector.shape_cast %77 : vector<17xf32> to vector<17x1xf32>
    %79 = vector.broadcast %78 : vector<17x1xf32> to vector<17x17xf32>
    %80 = arith.subf %76, %79 : vector<17x17xf32>
    %81 = math.exp %80 : vector<17x17xf32>
    %cst_28 = arith.constant dense<0.000000e+00> : vector<17xf32>
    %82 = vector.multi_reduction <add>, %81, %cst_28 [1] : vector<17x17xf32> to vector<17xf32>
    %83 = vector.shape_cast %82 : vector<17xf32> to vector<17x1xf32>
    %84 = tpu.reciprocal %83 {approx = true} : vector<17x1xf32> -> vector<17x1xf32>
    %85 = vector.broadcast %84 : vector<17x1xf32> to vector<17x17xf32>
    %86 = arith.mulf %81, %85 : vector<17x17xf32>
    %87 = arith.truncf %86 : vector<17x17xf32> to vector<17x17xbf16>
    %88 = vector.extract_strided_slice %41 {offsets = [0, 64], sizes = [17, 32], strides = [1, 1]} : vector<17x128xbf16> to vector<17x32xbf16>
    %cst_29 = arith.constant dense<0.000000e+00> : vector<17x32xf32>
    %89 = tpu.matmul %87, %88, %cst_29 {dimension_numbers = #tpu.dot_dimension_numbers<[1], [0], [0], [1], [0, 0, 1, 1], [], []>} : vector<17x17xbf16>, vector<17x32xbf16>, vector<17x32xf32> -> vector<17x32xf32>
    %90 = vector.extract_strided_slice %37 {offsets = [0, 96], sizes = [17, 32], strides = [1, 1]} : vector<17x128xbf16> to vector<17x32xbf16>
    %91 = vector.extract_strided_slice %39 {offsets = [0, 96], sizes = [17, 32], strides = [1, 1]} : vector<17x128xbf16> to vector<17x32xbf16>
    %cst_30 = arith.constant dense<0.000000e+00> : vector<17x17xf32>
    %92 = tpu.matmul %90, %91, %cst_30 {dimension_numbers = #tpu.dot_dimension_numbers<[1], [1], [0], [0], [0, 0, 1, 0], [], []>} : vector<17x32xbf16>, vector<17x32xbf16>, vector<17x17xf32> -> vector<17x17xf32>
    %cst_31 = arith.constant dense<0xFF800000> : vector<17xf32>
    %93 = vector.multi_reduction <maximumf>, %92, %cst_31 [1] : vector<17x17xf32> to vector<17xf32>
    %94 = vector.shape_cast %93 : vector<17xf32> to vector<17x1xf32>
    %95 = vector.broadcast %94 : vector<17x1xf32> to vector<17x17xf32>
    %96 = arith.subf %92, %95 : vector<17x17xf32>
    %97 = math.exp %96 : vector<17x17xf32>
    %cst_32 = arith.constant dense<0.000000e+00> : vector<17xf32>
    %98 = vector.multi_reduction <add>, %97, %cst_32 [1] : vector<17x17xf32> to vector<17xf32>
    %99 = vector.shape_cast %98 : vector<17xf32> to vector<17x1xf32>
    %100 = tpu.reciprocal %99 {approx = true} : vector<17x1xf32> -> vector<17x1xf32>
    %101 = vector.broadcast %100 : vector<17x1xf32> to vector<17x17xf32>
    %102 = arith.mulf %97, %101 : vector<17x17xf32>
    %103 = arith.truncf %102 : vector<17x17xf32> to vector<17x17xbf16>
    %104 = vector.extract_strided_slice %41 {offsets = [0, 96], sizes = [17, 32], strides = [1, 1]} : vector<17x128xbf16> to vector<17x32xbf16>
    %cst_33 = arith.constant dense<0.000000e+00> : vector<17x32xf32>
    %105 = tpu.matmul %103, %104, %cst_33 {dimension_numbers = #tpu.dot_dimension_numbers<[1], [0], [0], [1], [0, 0, 1, 1], [], []>} : vector<17x17xbf16>, vector<17x32xbf16>, vector<17x32xf32> -> vector<17x32xf32>
    %106 = tpu.concatenate %57, %73, %89, %105 in 1 : vector<17x32xf32>, vector<17x32xf32>, vector<17x32xf32>, vector<17x32xf32> -> vector<17x128xf32>
    %107 = arith.truncf %106 : vector<17x128xf32> to vector<17x128xbf16>
    %c0_34 = arith.constant 0 : index
    %c0_35 = arith.constant 0 : index
    %c0_36 = arith.constant 0 : index
    %108 = vector.load %arg6[%c0_34, %c0_35, %c0_36] : memref<1x128x128xbf16, #tpu.memory_space<vmem>>, vector<1x128x128xbf16>
    %109 = vector.shape_cast %108 : vector<1x128x128xbf16> to vector<128x128xbf16>
    %cst_37 = arith.constant dense<0.000000e+00> : vector<17x128xf32>
    %110 = tpu.matmul %107, %109, %cst_37 {dimension_numbers = #tpu.dot_dimension_numbers<[1], [0], [0], [1], [0, 0, 1, 1], [], []>} : vector<17x128xbf16>, vector<128x128xbf16>, vector<17x128xf32> -> vector<17x128xf32>
    %111 = arith.addf %3, %110 : vector<17x128xf32>
    %c0_38 = arith.constant 0 : index
    %c0_39 = arith.constant 0 : index
    %c0_40 = arith.constant 0 : index
    %112 = vector.load %arg7[%c0_38, %c0_39, %c0_40] : memref<1x1x128xf32, #tpu.memory_space<vmem>>, vector<1x1x128xf32>
    %113 = vector.shape_cast %112 : vector<1x1x128xf32> to vector<1x128xf32>
    %114 = vector.broadcast %113 : vector<1x128xf32> to vector<17x128xf32>
    %115 = arith.addf %111, %114 : vector<17x128xf32>
    %c0_41 = arith.constant 0 : index
    %c0_42 = arith.constant 0 : index
    %c0_43 = arith.constant 0 : index
    %116 = vector.load %arg8[%c0_41, %c0_42, %c0_43] : memref<1x2x128xf32, #tpu.memory_space<vmem>>, vector<1x1x128xf32>
    %117 = vector.shape_cast %116 : vector<1x1x128xf32> to vector<1x128xf32>
    %c0_44 = arith.constant 0 : index
    %c1_45 = arith.constant 1 : index
    %c0_46 = arith.constant 0 : index
    %118 = vector.load %arg8[%c0_44, %c1_45, %c0_46] : memref<1x2x128xf32, #tpu.memory_space<vmem>>, vector<1x1x128xf32>
    %119 = vector.shape_cast %118 : vector<1x1x128xf32> to vector<1x128xf32>
    %cst_47 = arith.constant dense<0.000000e+00> : vector<17xf32>
    %120 = vector.multi_reduction <add>, %115, %cst_47 [1] : vector<17x128xf32> to vector<17xf32>
    %121 = vector.shape_cast %120 : vector<17xf32> to vector<17x1xf32>
    %cst_48 = arith.constant 1.280000e+02 : f32
    %122 = vector.broadcast %cst_48 : f32 to vector<17x1xf32>
    %123 = arith.divf %121, %122 : vector<17x1xf32>
    %124 = vector.broadcast %123 : vector<17x1xf32> to vector<17x128xf32>
    %125 = arith.subf %115, %124 : vector<17x128xf32>
    %126 = arith.mulf %125, %125 : vector<17x128xf32>
    %cst_49 = arith.constant dense<0.000000e+00> : vector<17xf32>
    %127 = vector.multi_reduction <add>, %126, %cst_49 [1] : vector<17x128xf32> to vector<17xf32>
    %128 = vector.shape_cast %127 : vector<17xf32> to vector<17x1xf32>
    %cst_50 = arith.constant 1.280000e+02 : f32
    %129 = vector.broadcast %cst_50 : f32 to vector<17x1xf32>
    %130 = arith.divf %128, %129 : vector<17x1xf32>
    %cst_51 = arith.constant 9.99999997E-7 : f32
    %131 = vector.broadcast %cst_51 : f32 to vector<17x1xf32>
    %132 = arith.addf %130, %131 : vector<17x1xf32>
    %133 = math.rsqrt %132 : vector<17x1xf32>
    %134 = vector.broadcast %133 : vector<17x1xf32> to vector<17x128xf32>
    %135 = arith.mulf %125, %134 : vector<17x128xf32>
    %136 = vector.broadcast %117 : vector<1x128xf32> to vector<17x128xf32>
    %137 = arith.mulf %135, %136 : vector<17x128xf32>
    %138 = vector.broadcast %119 : vector<1x128xf32> to vector<17x128xf32>
    %139 = arith.addf %137, %138 : vector<17x128xf32>
    %140 = arith.truncf %139 : vector<17x128xf32> to vector<17x128xbf16>
    %c0_52 = arith.constant 0 : index
    %c0_53 = arith.constant 0 : index
    %c0_54 = arith.constant 0 : index
    %141 = vector.load %arg9[%c0_52, %c0_53, %c0_54] : memref<1x128x512xbf16, #tpu.memory_space<vmem>>, vector<1x128x512xbf16>
    %142 = vector.shape_cast %141 : vector<1x128x512xbf16> to vector<128x512xbf16>
    %cst_55 = arith.constant dense<0.000000e+00> : vector<17x512xf32>
    %143 = tpu.matmul %140, %142, %cst_55 {dimension_numbers = #tpu.dot_dimension_numbers<[1], [0], [0], [1], [0, 0, 1, 1], [], []>} : vector<17x128xbf16>, vector<128x512xbf16>, vector<17x512xf32> -> vector<17x512xf32>
    %c0_56 = arith.constant 0 : index
    %c0_57 = arith.constant 0 : index
    %c0_58 = arith.constant 0 : index
    %144 = vector.load %arg10[%c0_56, %c0_57, %c0_58] : memref<1x1x512xf32, #tpu.memory_space<vmem>>, vector<1x1x512xf32>
    %145 = vector.shape_cast %144 : vector<1x1x512xf32> to vector<1x512xf32>
    %146 = vector.broadcast %145 : vector<1x512xf32> to vector<17x512xf32>
    %147 = arith.addf %143, %146 : vector<17x512xf32>
    %148 = arith.mulf %147, %147 : vector<17x512xf32>
    %149 = arith.mulf %147, %148 : vector<17x512xf32>
    %cst_59 = arith.constant 4.471500e-02 : f32
    %150 = vector.broadcast %cst_59 : f32 to vector<17x512xf32>
    %151 = arith.mulf %150, %149 : vector<17x512xf32>
    %152 = arith.addf %147, %151 : vector<17x512xf32>
    %cst_60 = arith.constant 0.797884583 : f32
    %153 = vector.broadcast %cst_60 : f32 to vector<17x512xf32>
    %154 = arith.mulf %153, %152 : vector<17x512xf32>
    %155 = math.tanh %154 : vector<17x512xf32>
    %cst_61 = arith.constant 1.000000e+00 : f32
    %156 = vector.broadcast %cst_61 : f32 to vector<17x512xf32>
    %157 = arith.addf %156, %155 : vector<17x512xf32>
    %cst_62 = arith.constant 5.000000e-01 : f32
    %158 = vector.broadcast %cst_62 : f32 to vector<17x512xf32>
    %159 = arith.mulf %158, %157 : vector<17x512xf32>
    %160 = arith.mulf %147, %159 : vector<17x512xf32>
    %161 = arith.truncf %160 : vector<17x512xf32> to vector<17x512xbf16>
    %c0_63 = arith.constant 0 : index
    %c0_64 = arith.constant 0 : index
    %c0_65 = arith.constant 0 : index
    %162 = vector.load %arg11[%c0_63, %c0_64, %c0_65] : memref<1x512x128xbf16, #tpu.memory_space<vmem>>, vector<1x512x128xbf16>
    %163 = vector.shape_cast %162 : vector<1x512x128xbf16> to vector<512x128xbf16>
    %cst_66 = arith.constant dense<0.000000e+00> : vector<17x128xf32>
    %164 = tpu.matmul %161, %163, %cst_66 {dimension_numbers = #tpu.dot_dimension_numbers<[1], [0], [0], [1], [0, 0, 1, 1], [], []>} : vector<17x512xbf16>, vector<512x128xbf16>, vector<17x128xf32> -> vector<17x128xf32>
    %c0_67 = arith.constant 0 : index
    %c0_68 = arith.constant 0 : index
    %c0_69 = arith.constant 0 : index
    %165 = vector.load %arg12[%c0_67, %c0_68, %c0_69] : memref<1x1x128xf32, #tpu.memory_space<vmem>>, vector<1x1x128xf32>
    %166 = vector.shape_cast %165 : vector<1x1x128xf32> to vector<1x128xf32>
    %167 = vector.broadcast %166 : vector<1x128xf32> to vector<17x128xf32>
    %168 = arith.addf %164, %167 : vector<17x128xf32>
    %169 = arith.addf %115, %168 : vector<17x128xf32>
    %c0_70 = arith.constant 0 : index
    %c0_71 = arith.constant 0 : index
    %170 = vector.load %arg14[%c0_70, %c0_71] : memref<17x128xf32, #tpu.memory_space<vmem>>, vector<17x128xf32>
    tpu.vector_store %arg14[%c0_70, %c0_71], %169 {strides = array<i32>} : memref<17x128xf32, #tpu.memory_space<vmem>>, vector<17x128xf32>,
    %c1_i32 = arith.constant 1 : i32
    %171 = arith.cmpi eq, %arg1, %c1_i32 : i32
    %172 = arith.extui %171 : i1 to i32
    %c0_i32_72 = arith.constant 0 : i32
    %173 = arith.cmpi ne, %172, %c0_i32_72 : i32
    scf.if %173 {
      %c0_73 = arith.constant 0 : index
      %c0_74 = arith.constant 0 : index
      %174 = vector.load %arg14[%c0_73, %c0_74] : memref<17x128xf32, #tpu.memory_space<vmem>>, vector<17x128xf32>
      %175 = arith.truncf %174 : vector<17x128xf32> to vector<17x128xbf16>
      %c0_75 = arith.constant 0 : index
      %c0_76 = arith.constant 0 : index
      %c0_77 = arith.constant 0 : index
      %176 = vector.load %arg13[%c0_75, %c0_76, %c0_77] : memref<1x17x128xbf16, #tpu.memory_space<vmem>>, vector<1x17x128xbf16>
      %177 = vector.shape_cast %176 : vector<1x17x128xbf16> to vector<17x128xbf16>
      %178 = vector.shape_cast %175 : vector<17x128xbf16> to vector<1x17x128xbf16>
      tpu.vector_store %arg13[%c0_75, %c0_76, %c0_77], %178 {strides = array<i32>} : memref<1x17x128xbf16, #tpu.memory_space<vmem>>, vector<1x17x128xbf16>,
    } else {
    }
    return
  }
  func.func @transform_0(%arg0: i32, %arg1: i32) -> (i32, i32, i32) {
    %c0_i32 = arith.constant 0 : i32
    %c0_i32_0 = arith.constant 0 : i32
    %c0_i32_1 = arith.constant 0 : i32
    return %arg0, %c0_i32, %c0_i32_0 : i32, i32, i32
  }
  func.func @transform_1(%arg0: i32, %arg1: i32) -> (i32, i32, i32) {
    %c0_i32 = arith.constant 0 : i32
    %c0_i32_0 = arith.constant 0 : i32
    %c0_i32_1 = arith.constant 0 : i32
    return %arg1, %c0_i32, %c0_i32_0 : i32, i32, i32
  }
  func.func @transform_2(%arg0: i32, %arg1: i32) -> (i32, i32, i32) {
    %c0_i32 = arith.constant 0 : i32
    %c0_i32_0 = arith.constant 0 : i32
    %c0_i32_1 = arith.constant 0 : i32
    return %arg1, %c0_i32, %c0_i32_0 : i32, i32, i32
  }
  func.func @transform_3(%arg0: i32, %arg1: i32) -> (i32, i32, i32) {
    %c0_i32 = arith.constant 0 : i32
    %c0_i32_0 = arith.constant 0 : i32
    %c0_i32_1 = arith.constant 0 : i32
    return %arg1, %c0_i32, %c0_i32_0 : i32, i32, i32
  }
  func.func @transform_4(%arg0: i32, %arg1: i32) -> (i32, i32, i32) {
    %c0_i32 = arith.constant 0 : i32
    %c0_i32_0 = arith.constant 0 : i32
    %c0_i32_1 = arith.constant 0 : i32
    return %arg1, %c0_i32, %c0_i32_0 : i32, i32, i32
  }
  func.func @transform_5(%arg0: i32, %arg1: i32) -> (i32, i32, i32) {
    %c0_i32 = arith.constant 0 : i32
    %c0_i32_0 = arith.constant 0 : i32
    %c0_i32_1 = arith.constant 0 : i32
    return %arg1, %c0_i32, %c0_i32_0 : i32, i32, i32
  }
  func.func @transform_6(%arg0: i32, %arg1: i32) -> (i32, i32, i32) {
    %c0_i32 = arith.constant 0 : i32
    %c0_i32_0 = arith.constant 0 : i32
    %c0_i32_1 = arith.constant 0 : i32
    return %arg1, %c0_i32, %c0_i32_0 : i32, i32, i32
  }
  func.func @transform_7(%arg0: i32, %arg1: i32) -> (i32, i32, i32) {
    %c0_i32 = arith.constant 0 : i32
    %c0_i32_0 = arith.constant 0 : i32
    %c0_i32_1 = arith.constant 0 : i32
    return %arg1, %c0_i32, %c0_i32_0 : i32, i32, i32
  }
  func.func @transform_8(%arg0: i32, %arg1: i32) -> (i32, i32, i32) {
    %c0_i32 = arith.constant 0 : i32
    %c0_i32_0 = arith.constant 0 : i32
    %c0_i32_1 = arith.constant 0 : i32
    return %arg1, %c0_i32, %c0_i32_0 : i32, i32, i32
  }
  func.func @transform_9(%arg0: i32, %arg1: i32) -> (i32, i32, i32) {
    %c0_i32 = arith.constant 0 : i32
    %c0_i32_0 = arith.constant 0 : i32
    %c0_i32_1 = arith.constant 0 : i32
    return %arg1, %c0_i32, %c0_i32_0 : i32, i32, i32
  }
  func.func @transform_10(%arg0: i32, %arg1: i32) -> (i32, i32, i32) {
    %c0_i32 = arith.constant 0 : i32
    %c0_i32_0 = arith.constant 0 : i32
    %c0_i32_1 = arith.constant 0 : i32
    return %arg1, %c0_i32, %c0_i32_0 : i32, i32, i32
  }
  func.func @transform_11(%arg0: i32, %arg1: i32) -> (i32, i32, i32) {
    %c0_i32 = arith.constant 0 : i32
    %c0_i32_0 = arith.constant 0 : i32
    %c0_i32_1 = arith.constant 0 : i32
    return %arg0, %c0_i32, %c0_i32_0 : i32, i32, i32
  }
}

module attributes {stable_mosaic.version = 11 : i64} {
  func.func @_embed_kernel(%arg0: i32, %arg1: memref<1x16x256xbf16, #tpu.memory_space<vmem>>, %arg2: memref<256x128xbf16, #tpu.memory_space<vmem>>, %arg3: memref<17x128xf32, #tpu.memory_space<vmem>>, %arg4: memref<1x128xf32, #tpu.memory_space<vmem>>, %arg5: memref<2x128xf32, #tpu.memory_space<vmem>>, %arg6: memref<1x17x128xbf16, #tpu.memory_space<vmem>>) attributes {dimension_semantics = [#tpu.dimension_semantics<parallel>], iteration_bounds = array<i64: 2>, scalar_prefetch = 0 : i64, scratch_operands = 0 : i64, tpu.core_type = #tpu.core_type<tc>, window_params = [{transform_indices = @transform_0, window_bounds = array<i64: 1, 16, 256>}, {pipeline_mode = #tpu.pipeline_mode<synchronous>, transform_indices = @transform_1, window_bounds = array<i64: 256, 128>}, {pipeline_mode = #tpu.pipeline_mode<synchronous>, transform_indices = @transform_2, window_bounds = array<i64: 17, 128>}, {pipeline_mode = #tpu.pipeline_mode<synchronous>, transform_indices = @transform_3, window_bounds = array<i64: 1, 128>}, {pipeline_mode = #tpu.pipeline_mode<synchronous>, transform_indices = @transform_4, window_bounds = array<i64: 2, 128>}, {transform_indices = @transform_5, window_bounds = array<i64: 1, 17, 128>}]} {
    %c0 = arith.constant 0 : index
    %c0_0 = arith.constant 0 : index
    %c0_1 = arith.constant 0 : index
    %0 = vector.load %arg1[%c0, %c0_0, %c0_1] : memref<1x16x256xbf16, #tpu.memory_space<vmem>>, vector<1x16x256xbf16>
    %1 = vector.shape_cast %0 : vector<1x16x256xbf16> to vector<16x256xbf16>
    %c0_2 = arith.constant 0 : index
    %c0_3 = arith.constant 0 : index
    %2 = vector.load %arg2[%c0_2, %c0_3] : memref<256x128xbf16, #tpu.memory_space<vmem>>, vector<256x128xbf16>
    %cst = arith.constant dense<0.000000e+00> : vector<16x128xf32>
    %3 = tpu.matmul %1, %2, %cst {dimension_numbers = #tpu.dot_dimension_numbers<[1], [0], [0], [1], [0, 0, 1, 1], [], []>} : vector<16x256xbf16>, vector<256x128xbf16>, vector<16x128xf32> -> vector<16x128xf32>
    %c0_4 = arith.constant 0 : index
    %c0_5 = arith.constant 0 : index
    %4 = vector.load %arg4[%c0_4, %c0_5] : memref<1x128xf32, #tpu.memory_space<vmem>>, vector<1x128xf32>
    %5 = tpu.concatenate %4, %3 in 0 : vector<1x128xf32>, vector<16x128xf32> -> vector<17x128xf32>
    %c0_6 = arith.constant 0 : index
    %c0_7 = arith.constant 0 : index
    %6 = vector.load %arg3[%c0_6, %c0_7] : memref<17x128xf32, #tpu.memory_space<vmem>>, vector<17x128xf32>
    %7 = arith.addf %5, %6 : vector<17x128xf32>
    %c0_8 = arith.constant 0 : index
    %c0_9 = arith.constant 0 : index
    %8 = vector.load %arg5[%c0_8, %c0_9] : memref<2x128xf32, #tpu.memory_space<vmem>>, vector<1x128xf32>
    %c1 = arith.constant 1 : index
    %c0_10 = arith.constant 0 : index
    %9 = vector.load %arg5[%c1, %c0_10] : memref<2x128xf32, #tpu.memory_space<vmem>>, vector<1x128xf32>
    %cst_11 = arith.constant dense<0.000000e+00> : vector<17xf32>
    %10 = vector.multi_reduction <add>, %7, %cst_11 [1] : vector<17x128xf32> to vector<17xf32>
    %11 = vector.shape_cast %10 : vector<17xf32> to vector<17x1xf32>
    %cst_12 = arith.constant 1.280000e+02 : f32
    %12 = vector.broadcast %cst_12 : f32 to vector<17x1xf32>
    %13 = arith.divf %11, %12 : vector<17x1xf32>
    %14 = vector.broadcast %13 : vector<17x1xf32> to vector<17x128xf32>
    %15 = arith.subf %7, %14 : vector<17x128xf32>
    %16 = arith.mulf %15, %15 : vector<17x128xf32>
    %cst_13 = arith.constant dense<0.000000e+00> : vector<17xf32>
    %17 = vector.multi_reduction <add>, %16, %cst_13 [1] : vector<17x128xf32> to vector<17xf32>
    %18 = vector.shape_cast %17 : vector<17xf32> to vector<17x1xf32>
    %cst_14 = arith.constant 1.280000e+02 : f32
    %19 = vector.broadcast %cst_14 : f32 to vector<17x1xf32>
    %20 = arith.divf %18, %19 : vector<17x1xf32>
    %cst_15 = arith.constant 9.99999997E-7 : f32
    %21 = vector.broadcast %cst_15 : f32 to vector<17x1xf32>
    %22 = arith.addf %20, %21 : vector<17x1xf32>
    %23 = math.rsqrt %22 : vector<17x1xf32>
    %24 = vector.broadcast %23 : vector<17x1xf32> to vector<17x128xf32>
    %25 = arith.mulf %15, %24 : vector<17x128xf32>
    %26 = vector.broadcast %8 : vector<1x128xf32> to vector<17x128xf32>
    %27 = arith.mulf %25, %26 : vector<17x128xf32>
    %28 = vector.broadcast %9 : vector<1x128xf32> to vector<17x128xf32>
    %29 = arith.addf %27, %28 : vector<17x128xf32>
    %30 = arith.truncf %29 : vector<17x128xf32> to vector<17x128xbf16>
    %c0_16 = arith.constant 0 : index
    %c0_17 = arith.constant 0 : index
    %c0_18 = arith.constant 0 : index
    %31 = vector.load %arg6[%c0_16, %c0_17, %c0_18] : memref<1x17x128xbf16, #tpu.memory_space<vmem>>, vector<1x17x128xbf16>
    %32 = vector.shape_cast %31 : vector<1x17x128xbf16> to vector<17x128xbf16>
    %33 = vector.shape_cast %30 : vector<17x128xbf16> to vector<1x17x128xbf16>
    tpu.vector_store %arg6[%c0_16, %c0_17, %c0_18], %33 {strides = array<i32>} : memref<1x17x128xbf16, #tpu.memory_space<vmem>>, vector<1x17x128xbf16>,
    return
  }
  func.func @transform_0(%arg0: i32) -> (i32, i32, i32) {
    %c0_i32 = arith.constant 0 : i32
    %c0_i32_0 = arith.constant 0 : i32
    %c0_i32_1 = arith.constant 0 : i32
    return %arg0, %c0_i32, %c0_i32_0 : i32, i32, i32
  }
  func.func @transform_1(%arg0: i32) -> (i32, i32) {
    %c0_i32 = arith.constant 0 : i32
    %c0_i32_0 = arith.constant 0 : i32
    %c0_i32_1 = arith.constant 0 : i32
    return %c0_i32, %c0_i32_0 : i32, i32
  }
  func.func @transform_2(%arg0: i32) -> (i32, i32) {
    %c0_i32 = arith.constant 0 : i32
    %c0_i32_0 = arith.constant 0 : i32
    %c0_i32_1 = arith.constant 0 : i32
    return %c0_i32, %c0_i32_0 : i32, i32
  }
  func.func @transform_3(%arg0: i32) -> (i32, i32) {
    %c0_i32 = arith.constant 0 : i32
    %c0_i32_0 = arith.constant 0 : i32
    %c0_i32_1 = arith.constant 0 : i32
    return %c0_i32, %c0_i32_0 : i32, i32
  }
  func.func @transform_4(%arg0: i32) -> (i32, i32) {
    %c0_i32 = arith.constant 0 : i32
    %c0_i32_0 = arith.constant 0 : i32
    %c0_i32_1 = arith.constant 0 : i32
    return %c0_i32, %c0_i32_0 : i32, i32
  }
  func.func @transform_5(%arg0: i32) -> (i32, i32, i32) {
    %c0_i32 = arith.constant 0 : i32
    %c0_i32_0 = arith.constant 0 : i32
    %c0_i32_1 = arith.constant 0 : i32
    return %arg0, %c0_i32, %c0_i32_0 : i32, i32, i32
  }
}

module attributes {stable_mosaic.version = 11 : i64} {
  func.func @_pool_head_kernel(%arg0: i32, %arg1: memref<1x17x128xbf16, #tpu.memory_space<vmem>>, %arg2: memref<2x128xf32, #tpu.memory_space<vmem>>, %arg3: memref<1x1x128xf32, #tpu.memory_space<vmem>>) attributes {dimension_semantics = [#tpu.dimension_semantics<parallel>], iteration_bounds = array<i64: 2>, scalar_prefetch = 0 : i64, scratch_operands = 0 : i64, tpu.core_type = #tpu.core_type<tc>, window_params = [{transform_indices = @transform_0, window_bounds = array<i64: 1, 17, 128>}, {pipeline_mode = #tpu.pipeline_mode<synchronous>, transform_indices = @transform_1, window_bounds = array<i64: 2, 128>}, {transform_indices = @transform_2, window_bounds = array<i64: 1, 1, 128>}]} {
    %c0 = arith.constant 0 : index
    %c0_0 = arith.constant 0 : index
    %c0_1 = arith.constant 0 : index
    %0 = vector.load %arg1[%c0, %c0_0, %c0_1] : memref<1x17x128xbf16, #tpu.memory_space<vmem>>, vector<1x17x128xbf16>
    %1 = vector.shape_cast %0 : vector<1x17x128xbf16> to vector<17x128xbf16>
    %2 = arith.extf %1 : vector<17x128xbf16> to vector<17x128xf32>
    %cst = arith.constant dense<0.000000e+00> : vector<128xf32>
    %3 = vector.multi_reduction <add>, %2, %cst [0] : vector<17x128xf32> to vector<128xf32>
    %4 = vector.shape_cast %3 : vector<128xf32> to vector<1x128xf32>
    %5 = vector.extract_strided_slice %2 {offsets = [0, 0], sizes = [1, 128], strides = [1, 1]} : vector<17x128xf32> to vector<1x128xf32>
    %6 = arith.subf %4, %5 : vector<1x128xf32>
    %cst_2 = arith.constant 6.250000e-02 : f32
    %7 = vector.broadcast %cst_2 : f32 to vector<1x128xf32>
    %8 = arith.mulf %6, %7 : vector<1x128xf32>
    %c0_3 = arith.constant 0 : index
    %c0_4 = arith.constant 0 : index
    %9 = vector.load %arg2[%c0_3, %c0_4] : memref<2x128xf32, #tpu.memory_space<vmem>>, vector<1x128xf32>
    %c1 = arith.constant 1 : index
    %c0_5 = arith.constant 0 : index
    %10 = vector.load %arg2[%c1, %c0_5] : memref<2x128xf32, #tpu.memory_space<vmem>>, vector<1x128xf32>
    %cst_6 = arith.constant dense<0.000000e+00> : vector<1xf32>
    %11 = vector.multi_reduction <add>, %8, %cst_6 [1] : vector<1x128xf32> to vector<1xf32>
    %12 = vector.shape_cast %11 : vector<1xf32> to vector<1x1xf32>
    %cst_7 = arith.constant 1.280000e+02 : f32
    %13 = vector.broadcast %cst_7 : f32 to vector<1x1xf32>
    %14 = arith.divf %12, %13 : vector<1x1xf32>
    %15 = vector.broadcast %14 : vector<1x1xf32> to vector<1x128xf32>
    %16 = arith.subf %8, %15 : vector<1x128xf32>
    %17 = arith.mulf %16, %16 : vector<1x128xf32>
    %cst_8 = arith.constant dense<0.000000e+00> : vector<1xf32>
    %18 = vector.multi_reduction <add>, %17, %cst_8 [1] : vector<1x128xf32> to vector<1xf32>
    %19 = vector.shape_cast %18 : vector<1xf32> to vector<1x1xf32>
    %cst_9 = arith.constant 1.280000e+02 : f32
    %20 = vector.broadcast %cst_9 : f32 to vector<1x1xf32>
    %21 = arith.divf %19, %20 : vector<1x1xf32>
    %cst_10 = arith.constant 9.99999997E-7 : f32
    %22 = vector.broadcast %cst_10 : f32 to vector<1x1xf32>
    %23 = arith.addf %21, %22 : vector<1x1xf32>
    %24 = math.rsqrt %23 : vector<1x1xf32>
    %25 = vector.broadcast %24 : vector<1x1xf32> to vector<1x128xf32>
    %26 = arith.mulf %16, %25 : vector<1x128xf32>
    %27 = arith.mulf %26, %9 : vector<1x128xf32>
    %28 = arith.addf %27, %10 : vector<1x128xf32>
    %c0_11 = arith.constant 0 : index
    %c0_12 = arith.constant 0 : index
    %c0_13 = arith.constant 0 : index
    %29 = vector.load %arg3[%c0_11, %c0_12, %c0_13] : memref<1x1x128xf32, #tpu.memory_space<vmem>>, vector<1x1x128xf32>
    %30 = vector.shape_cast %29 : vector<1x1x128xf32> to vector<1x128xf32>
    %31 = vector.shape_cast %28 : vector<1x128xf32> to vector<1x1x128xf32>
    tpu.vector_store %arg3[%c0_11, %c0_12, %c0_13], %31 {strides = array<i32>} : memref<1x1x128xf32, #tpu.memory_space<vmem>>, vector<1x1x128xf32>,
    return
  }
  func.func @transform_0(%arg0: i32) -> (i32, i32, i32) {
    %c0_i32 = arith.constant 0 : i32
    %c0_i32_0 = arith.constant 0 : i32
    %c0_i32_1 = arith.constant 0 : i32
    return %arg0, %c0_i32, %c0_i32_0 : i32, i32, i32
  }
  func.func @transform_1(%arg0: i32) -> (i32, i32) {
    %c0_i32 = arith.constant 0 : i32
    %c0_i32_0 = arith.constant 0 : i32
    %c0_i32_1 = arith.constant 0 : i32
    return %c0_i32, %c0_i32_0 : i32, i32
  }
  func.func @transform_2(%arg0: i32) -> (i32, i32, i32) {
    %c0_i32 = arith.constant 0 : i32
    %c0_i32_0 = arith.constant 0 : i32
    %c0_i32_1 = arith.constant 0 : i32
    return %arg0, %c0_i32, %c0_i32_0 : i32, i32, i32
  }
}

</mosaic_0001>

<llo_original>
// kernel: image_encoder_forward.5
$region0: #{image_encoder_forward.5}
  #allocation0 [shape = 'u32[]', space=smem, size = 0x4, offset = 0x4, fixed_abs, tag = 'smem constant byte address 0x4 - core index']
  #allocation1 [shape = 'u32[72,128]{1,0:T(1,128)}', space=vmem, size = 0x9000, scoped, tag = 'internal scratch']
  %s0 = inlined_call_operand.vmem [shape: bf16[2,17,128], index: 0, kind: input, shape index: {}]
  %s1 = inlined_call_operand.vmem [shape: f32[2,128], index: 1, kind: input, shape index: {}]
  %s2 = inlined_call_operand.hbm [shape: f32[2,1,128], index: 2, kind: output, shape index: {}]
  %s3 = sld [smem:[#allocation0]]
  $region41: #{image_encoder_forward.5} parent=0
    _
  %s5 = ssub.s32 1, %s3
  %s6 = scalar_select 0, %s5, %s3
  $region1: #{image_encoder_forward.5} parent=0
    #allocation2 [shape = 'u8[1024]{0}', space=vmem, size = 0x400, scoped, tag = 'output window, operand 0']
    #allocation3 [shape = 's32[2]{0}', space=sflag, size = 0x8, scoped, tag = 'scoped memory for image_encoder_forward.5']
    %7 = vsyncpa [#allocation3], 0
    %s8 = scalar_lea.sflag [#allocation3], 1
    %9 = vsyncpa %s8, 0
    loop: start=0, step=1, limit=4
    $region2: #{image_encoder_forward.5} parent=1 // loop_pre_header
      _
    $region3: #{image_encoder_forward.5} parent=1 // loop_header
      %s11 = sphi 0, %s15
      %p12 = scmp.ge.s32.totalorder %s11, 4
      %s21 = sphi 0, %s23
      %s24 = sphi 0, %s21
      %s25 = sphi 0, %s24
      %s41 = sphi 0, %s25
      %s45 = sphi 0, %s45
      %s47 = sphi 0, %s45
      %s48 = sphi 0, %s47
      %s62 = sphi 0, %s48
      %s68 = sphi 0, %s70
      %s71 = sphi 0, %s68
      %s72 = sphi 0, %s71
      %s88 = sphi 0, %s72
    $region4: #{image_encoder_forward.5} parent=1 // loop_header_branch
      %14 = sbr.rel (%p12) target = $region8
    $region5: #{image_encoder_forward.5} parent=1 // loop_body
      %s16 = ssub.s32 %s11, 1
      %s17 = ssub.s32 %s11, 2
      %s18 = sadd.s32 %s11, 1
      %s19 = ssub.s32 %s11, %s18
      %p20 = scmp.eq.s32.totalorder %s19, 0
      %s22 = sadd.s32 %s21, 1
      %s23 = scalar_select %p20, %s21, %s22
      %p26 = pneg %p20
      %p27 = scmp.eq.s32.totalorder %s11, 1
      %p28 = por %p26, %p27
      %p29 = scmp.ne.s32.totalorder %s21, %s24
      %p30 = scmp.eq.s32.totalorder %s11, 0
      %p31 = por %p29, %p30
      %p32 = scmp.ne.s32.totalorder %s21, %s24
      %p33 = scmp.eq.s32.totalorder %s16, 1
      %p34 = por %p32, %p33
      %p35 = scmp.ne.s32.totalorder %s24, %s25
      %p36 = scmp.eq.s32.totalorder %s16, 0
      %p37 = por %p35, %p36
      %p38 = scmp.ne.s32.totalorder %s24, %s25
      %p39 = scmp.eq.s32.totalorder %s17, 1
      %p40 = por %p38, %p39
      %p42 = scmp.ne.s32.totalorder %s25, %s41
      %p43 = scmp.eq.s32.totalorder %s17, 0
      %p44 = por %p42, %p43
      %s46 = sadd.s32 %s45, 1
      %p49 = scmp.eq.s32.totalorder %s11, 1
      %p50 = scmp.ne.s32.totalorder %s45, %s47
      %p51 = scmp.eq.s32.totalorder %s11, 0
      %p52 = por %p50, %p51
      %p53 = scmp.ne.s32.totalorder %s45, %s47
      %p54 = scmp.eq.s32.totalorder %s16, 1
      %p55 = por %p53, %p54
      %p56 = scmp.ne.s32.totalorder %s47, %s48
      %p57 = scmp.eq.s32.totalorder %s16, 0
      %p58 = por %p56, %p57
      %p59 = scmp.ne.s32.totalorder %s47, %s48
      %p60 = scmp.eq.s32.totalorder %s17, 1
      %p61 = por %p59, %p60
      %p63 = scmp.ne.s32.totalorder %s48, %s62
      %p64 = scmp.eq.s32.totalorder %s17, 0
      %p65 = por %p63, %p64
      %s66 = ssub.s32 %s11, %s18
      %p67 = scmp.eq.s32.totalorder %s66, 0
      %s69 = sadd.s32 %s68, 1
      %s70 = scalar_select %p67, %s68, %s69
      %p73 = pneg %p67
      %p74 = scmp.eq.s32.totalorder %s11, 1
      %p75 = por %p73, %p74
      %p76 = scmp.ne.s32.totalorder %s68, %s71
      %p77 = scmp.eq.s32.totalorder %s11, 0
      %p78 = por %p76, %p77
      %p79 = scmp.ne.s32.totalorder %s68, %s71
      %p80 = scmp.eq.s32.totalorder %s16, 1
      %p81 = por %p79, %p80
      %p82 = scmp.ne.s32.totalorder %s71, %s72
      %p83 = scmp.eq.s32.totalorder %s16, 0
      %p84 = por %p82, %p83
      %p85 = scmp.ne.s32.totalorder %s71, %s72
      %p86 = scmp.eq.s32.totalorder %s17, 1
      %p87 = por %p85, %p86
      %p89 = scmp.ne.s32.totalorder %s72, %s88
      %p90 = scmp.eq.s32.totalorder %s17, 0
      %p91 = por %p89, %p90
      %p92 = scmp.le.s32.totalorder 1, %s11
      %p93 = scmp.lt.s32.totalorder %s11, 3
      %p94 = pnand %p92, %p93
      %p95 = pneg %p94
      // Predicated region
      $region9: #{image_encoder_forward.5} parent=5 // pred_check
        _
      $region10: #{image_encoder_forward.5} parent=5 // pred_check_branch
        %97 = sbr.rel (%p94) target = $region12
      $region11: #{image_encoder_forward.5} parent=5 // pred_region
        %s98 = ssub.s32 %s11, 1
        // Predicated region
        $region13: #{image_encoder_forward.5} parent=11 // pred_check
          %p99 = pneg %p58
        $region14: #{image_encoder_forward.5} parent=11 // pred_check_branch
          %101 = sbr.rel (%p99) target = $region16
        $region15: #{image_encoder_forward.5} parent=11 // pred_region
          _
        $region16: #{image_encoder_forward.5} parent=11 // pred_fallthru
          _
      $region12: #{image_encoder_forward.5} parent=5 // pred_fallthru
        _
      %p102 = scmp.lt.s32.totalorder %s11, 2
      // Predicated region
      $region17: #{image_encoder_forward.5} parent=5 // pred_check
        %p103 = pneg %p102
      $region18: #{image_encoder_forward.5} parent=5 // pred_check_branch
        %105 = sbr.rel (%p103) target = $region20
      $region19: #{image_encoder_forward.5} parent=5 // pred_region
        // Predicated region
        $region21: #{image_encoder_forward.5} parent=19 // pred_check
          %p106 = pneg %p31
        $region22: #{image_encoder_forward.5} parent=19 // pred_check_branch
          %108 = sbr.rel (%p106) target = $region24
        $region23: #{image_encoder_forward.5} parent=19 // pred_region
          %p109 = scmp.lt.s32.totalorder %s11, 1
          %s110 = scalar_select %p109, %s11, 1
          %s111 = smul.addr %s110, 3
          %s112 = smul.addr %s111, 4
          %s113 = scalar_lea.vmem %s0, %s112
        $region24: #{image_encoder_forward.5} parent=19 // pred_fallthru
          _
      $region20: #{image_encoder_forward.5} parent=5 // pred_fallthru
        _
      %p114 = scmp.le.s32.totalorder 1, %s11
      %p115 = scmp.lt.s32.totalorder %s11, 3
      %p116 = pnand %p114, %p115
      %p117 = pneg %p116
      // Predicated region
      $region25: #{image_encoder_forward.5} parent=5 // pred_check
        _
      $region26: #{image_encoder_forward.5} parent=5 // pred_check_branch
        %119 = sbr.rel (%p116) target = $region28
      $region27: #{image_encoder_forward.5} parent=5 // pred_region
        %s120 = ssub.s32 %s11, 1
        %p121 = scmp.lt.s32.totalorder %s16, 1
        %s122 = scalar_select %p121, %s16, 1
        %s123 = smul.addr %s122, 3
        %s124 = smul.addr %s123, 4
        %s125 = scalar_lea.vmem %s0, %s124
        %p126 = pneg %p37
        %p127 = pneg %p34
        %p128 = pneg %p58
        %p129 = pneg %p55
        %p130 = pneg %p84
        %p131 = pneg %p81
        %s132 = sand.u32 %s71, 1
        %s133 = scalar_lea.sflag [#allocation3], %s132
        %s134 = sand.u32 %s71, 1
        %s135 = scalar_lea.vmem [#allocation2], %s134
        %p136 = scmp.lt.s32.totalorder %s16, 1
        %s137 = scalar_select %p136, %s16, 1
        %s138 = smul.addr %s137, 3
        %s139 = smul.addr %s138, 4
        %s140 = scalar_lea.vmem %s0, %s139
        %v141 = vld [vmem:[%s140] sm:$0xf]
        %v142 = vld [vmem:[%s140 + $0x4] sm:$0xf]
        %v143 = vld [vmem:[%s140 + $0x8] sm:$0x1]
        %v144 = vunpack.c.l.bf16 %v141
        %v145 = vunpack.c.l.bf16 %v142
        %v146 = vunpack.c.l.bf16 %v143
        %v147 = vadd.f32 %v144, %v145
        %vm148 = vcmask 1040384
        %v149 = vsel %vm148, %v146, 0.0
        %v150 = vadd.f32 %v147, %v149
        %v151 = vrot.slane %v150, 4
        %v152 = vadd.f32 %v150, %v151
        %v153 = vrot.slane %v152, 2
        %v154 = vadd.f32 %v152, %v153
        %v155 = vrot.slane %v154, 1
        %v156 = vadd.f32 %v154, %v155
        %v157 = vsub.f32 %v156, %v144
        %v158 = vmul.f32 %v157, 0.0625
        %v159 = vld [vmem:[%s1] sm:$0x1]
        %v160 = vld [vmem:[%s1 + $0x1] sm:$0x1]
        %v161 = vsel %vm148, %v158, 0.0
        %162 = vadd.xlane.f32.xlu0 %v161
        %v163 = vpop.xlane.xlu0 %162
        %v164 = vrcp.pop 128.0
        %v165 = vmul.f32 128.0, %v164
        %v166 = vsub.f32 1.0, %v165
        %v167 = vmul.f32 %v164, %v166
        %v168 = vadd.f32 %v164, %v167
        %vm169 = vweird.f32 %v164
        %v170 = vsel %vm169, %v164, %v168
        %v171 = vmul.f32 %v163, %v170
        %v172 = vsub.f32 %v158, %v171
        %v173 = vmul.f32 %v172, %v172
        %v174 = vsel %vm148, %v173, 0.0
        %175 = vadd.xlane.f32.xlu0 %v174
        %v176 = vpop.xlane.xlu0 %175
        %v177 = vmul.f32 %v176, %v170
        %v178 = vadd.f32 %v177, 1e-06
        %v179 = vrsqrt.pop %v178
        %v180 = vmul.f32 %v179, %v178
        %v181 = vmul.f32 %v180, %v179
        %v182 = vmul.f32 0.5, %v181
        %v183 = vsub.f32 1.5, %v182
        %v184 = vmul.f32 %v179, %v183
        %vm185 = vweird.f32 %v178
        %vm186 = vweird.f32 %v179
        %vm187 = vmor %vm185, %vm186
        %v188 = vsel %vm187, %v179, %v184
        %v189 = vmul.f32 %v172, %v188
        %v190 = vmul.f32 %v189, %v159
        %v191 = vadd.f32 %v190, %v160
        %192 = vst [vmem:[%s135] sm:$0x1] %v191
        %s193 = sand.u32 %s71, 1
        %s194 = scalar_lea.sflag [#allocation3], %s193
        %s195 = sand.u32 %s71, 1
        %s196 = scalar_lea.vmem [#allocation2], %s195
        // Predicated region
        $region29: #{image_encoder_forward.5} parent=27 // pred_check
          %p197 = pneg %p81
        $region30: #{image_encoder_forward.5} parent=27 // pred_check_branch
          %199 = sbr.rel (%p197) target = $region32
        $region31: #{image_encoder_forward.5} parent=27 // pred_region
          %201 = vsyncadd %s194, 0
          %s202 = scalar_lea.hbm %s2, %s16
          %s204 = sshll.u32 %s196, 4
          %s205 = int_to_ptr.vmem [resolvable:$true] %s204
          %s206 = sshll.u32 %s202, 4
          %s207 = int_to_ptr.hbm [resolvable:$true] %s206
          %209 = dma.vmem_to_hbm [thread:$0]  %s205, 16, %s207, %s194
        $region32: #{image_encoder_forward.5} parent=27 // pred_fallthru
          _
      $region28: #{image_encoder_forward.5} parent=5 // pred_fallthru
        _
      %p210 = scmp.le.s32.totalorder 2, %s11
      // Predicated region
      $region33: #{image_encoder_forward.5} parent=5 // pred_check
        %p211 = pneg %p210
      $region34: #{image_encoder_forward.5} parent=5 // pred_check_branch
        %213 = sbr.rel (%p211) target = $region36
      $region35: #{image_encoder_forward.5} parent=5 // pred_region
        %s214 = ssub.s32 %s11, 2
        // Predicated region
        $region37: #{image_encoder_forward.5} parent=35 // pred_check
          %p215 = pneg %p87
        $region38: #{image_encoder_forward.5} parent=35 // pred_check_branch
          %217 = sbr.rel (%p215) target = $region40
        $region39: #{image_encoder_forward.5} parent=35 // pred_region
          %s218 = sand.u32 %s72, 1
          %s219 = scalar_lea.sflag [#allocation3], %s218
          %s220 = sand.u32 %s72, 1
          %s221 = scalar_lea.vmem [#allocation2], %s220
          %223 = dma.done %s219, 16
        $region40: #{image_encoder_forward.5} parent=35 // pred_fallthru
          _
      $region36: #{image_encoder_forward.5} parent=5 // pred_fallthru
        _
    $region6: #{image_encoder_forward.5} parent=1 // loop_footer
      %s15 = sadd.s32 1, %s11
    $region7: #{image_encoder_forward.5} parent=1 // loop_footer_branch
      %10 = sbr.rel target = $region3
    $region8: #{image_encoder_forward.5} parent=1 // loop_exit
      _
    %224 = vsyncpa [#allocation3], 1
    %s225 = scalar_lea.sflag [#allocation3], 1
    %226 = vsyncpa %s225, 1

// kernel: image_encoder_forward.3
$region0: #{image_encoder_forward.3}
  #allocation0 [shape = 'u32[]', space=smem, size = 0x4, offset = 0x4, fixed_abs, tag = 'smem constant byte address 0x4 - core index']
  #allocation1 [shape = 'u32[72,128]{1,0:T(1,128)}', space=vmem, size = 0x9000, scoped, tag = 'internal scratch']
  %s0 = inlined_call_operand.vmem [shape: bf16[2,16,256], index: 0, kind: input, shape index: {}]
  %s1 = inlined_call_operand.vmem [shape: bf16[256,128], index: 1, kind: input, shape index: {}]
  %s2 = inlined_call_operand.vmem [shape: f32[17,128], index: 2, kind: input, shape index: {}]
  %s3 = inlined_call_operand.vmem [shape: f32[1,128], index: 3, kind: input, shape index: {}]
  %s4 = inlined_call_operand.vmem [shape: f32[2,128], index: 4, kind: input, shape index: {}]
  %s5 = inlined_call_operand.vmem [shape: bf16[2,17,128], index: 5, kind: output, shape index: {}]
  %s6 = sld [smem:[#allocation0]]
  $region53: #{image_encoder_forward.3} parent=0
    _
  %s8 = ssub.s32 1, %s6
  %s9 = scalar_select 0, %s8, %s6
  loop: start=0, step=1, limit=4
  $region2: #{image_encoder_forward.3} parent=0 // loop_pre_header
    _
  $region3: #{image_encoder_forward.3} parent=0 // loop_header
    %s11 = sphi 0, %s15
    %p12 = scmp.ge.s32.totalorder %s11, 4
    %s21 = sphi 0, %s23
    %s24 = sphi 0, %s21
    %s25 = sphi 0, %s24
    %s41 = sphi 0, %s25
    %s45 = sphi 0, %s45
    %s47 = sphi 0, %s45
    %s48 = sphi 0, %s47
    %s62 = sphi 0, %s48
    %s66 = sphi 0, %s66
    %s68 = sphi 0, %s66
    %s69 = sphi 0, %s68
    %s83 = sphi 0, %s69
    %s87 = sphi 0, %s87
    %s89 = sphi 0, %s87
    %s90 = sphi 0, %s89
    %s104 = sphi 0, %s90
    %s108 = sphi 0, %s108
    %s110 = sphi 0, %s108
    %s111 = sphi 0, %s110
    %s125 = sphi 0, %s111
    %s131 = sphi 0, %s133
    %s134 = sphi 0, %s131
    %s135 = sphi 0, %s134
    %s151 = sphi 0, %s135
  $region4: #{image_encoder_forward.3} parent=0 // loop_header_branch
    %14 = sbr.rel (%p12) target = $region8
  $region5: #{image_encoder_forward.3} parent=0 // loop_body
    %s16 = ssub.s32 %s11, 1
    %s17 = ssub.s32 %s11, 2
    %s18 = sadd.s32 %s11, 1
    %s19 = ssub.s32 %s11, %s18
    %p20 = scmp.eq.s32.totalorder %s19, 0
    %s22 = sadd.s32 %s21, 1
    %s23 = scalar_select %p20, %s21, %s22
    %p26 = pneg %p20
    %p27 = scmp.eq.s32.totalorder %s11, 1
    %p28 = por %p26, %p27
    %p29 = scmp.ne.s32.totalorder %s21, %s24
    %p30 = scmp.eq.s32.totalorder %s11, 0
    %p31 = por %p29, %p30
    %p32 = scmp.ne.s32.totalorder %s21, %s24
    %p33 = scmp.eq.s32.totalorder %s16, 1
    %p34 = por %p32, %p33
    %p35 = scmp.ne.s32.totalorder %s24, %s25
    %p36 = scmp.eq.s32.totalorder %s16, 0
    %p37 = por %p35, %p36
    %p38 = scmp.ne.s32.totalorder %s24, %s25
    %p39 = scmp.eq.s32.totalorder %s17, 1
    %p40 = por %p38, %p39
    %p42 = scmp.ne.s32.totalorder %s25, %s41
    %p43 = scmp.eq.s32.totalorder %s17, 0
    %p44 = por %p42, %p43
    %s46 = sadd.s32 %s45, 1
    %p49 = scmp.eq.s32.totalorder %s11, 1
    %p50 = scmp.ne.s32.totalorder %s45, %s47
    %p51 = scmp.eq.s32.totalorder %s11, 0
    %p52 = por %p50, %p51
    %p53 = scmp.ne.s32.totalorder %s45, %s47
    %p54 = scmp.eq.s32.totalorder %s16, 1
    %p55 = por %p53, %p54
    %p56 = scmp.ne.s32.totalorder %s47, %s48
    %p57 = scmp.eq.s32.totalorder %s16, 0
    %p58 = por %p56, %p57
    %p59 = scmp.ne.s32.totalorder %s47, %s48
    %p60 = scmp.eq.s32.totalorder %s17, 1
    %p61 = por %p59, %p60
    %p63 = scmp.ne.s32.totalorder %s48, %s62
    %p64 = scmp.eq.s32.totalorder %s17, 0
    %p65 = por %p63, %p64
    %s67 = sadd.s32 %s66, 1
    %p70 = scmp.eq.s32.totalorder %s11, 1
    %p71 = scmp.ne.s32.totalorder %s66, %s68
    %p72 = scmp.eq.s32.totalorder %s11, 0
    %p73 = por %p71, %p72
    %p74 = scmp.ne.s32.totalorder %s66, %s68
    %p75 = scmp.eq.s32.totalorder %s16, 1
    %p76 = por %p74, %p75
    %p77 = scmp.ne.s32.totalorder %s68, %s69
    %p78 = scmp.eq.s32.totalorder %s16, 0
    %p79 = por %p77, %p78
    %p80 = scmp.ne.s32.totalorder %s68, %s69
    %p81 = scmp.eq.s32.totalorder %s17, 1
    %p82 = por %p80, %p81
    %p84 = scmp.ne.s32.totalorder %s69, %s83
    %p85 = scmp.eq.s32.totalorder %s17, 0
    %p86 = por %p84, %p85
    %s88 = sadd.s32 %s87, 1
    %p91 = scmp.eq.s32.totalorder %s11, 1
    %p92 = scmp.ne.s32.totalorder %s87, %s89
    %p93 = scmp.eq.s32.totalorder %s11, 0
    %p94 = por %p92, %p93
    %p95 = scmp.ne.s32.totalorder %s87, %s89
    %p96 = scmp.eq.s32.totalorder %s16, 1
    %p97 = por %p95, %p96
    %p98 = scmp.ne.s32.totalorder %s89, %s90
    %p99 = scmp.eq.s32.totalorder %s16, 0
    %p100 = por %p98, %p99
    %p101 = scmp.ne.s32.totalorder %s89, %s90
    %p102 = scmp.eq.s32.totalorder %s17, 1
    %p103 = por %p101, %p102
    %p105 = scmp.ne.s32.totalorder %s90, %s104
    %p106 = scmp.eq.s32.totalorder %s17, 0
    %p107 = por %p105, %p106
    %s109 = sadd.s32 %s108, 1
    %p112 = scmp.eq.s32.totalorder %s11, 1
    %p113 = scmp.ne.s32.totalorder %s108, %s110
    %p114 = scmp.eq.s32.totalorder %s11, 0
    %p115 = por %p113, %p114
    %p116 = scmp.ne.s32.totalorder %s108, %s110
    %p117 = scmp.eq.s32.totalorder %s16, 1
    %p118 = por %p116, %p117
    %p119 = scmp.ne.s32.totalorder %s110, %s111
    %p120 = scmp.eq.s32.totalorder %s16, 0
    %p121 = por %p119, %p120
    %p122 = scmp.ne.s32.totalorder %s110, %s111
    %p123 = scmp.eq.s32.totalorder %s17, 1
    %p124 = por %p122, %p123
    %p126 = scmp.ne.s32.totalorder %s111, %s125
    %p127 = scmp.eq.s32.totalorder %s17, 0
    %p128 = por %p126, %p127
    %s129 = ssub.s32 %s11, %s18
    %p130 = scmp.eq.s32.totalorder %s129, 0
    %s132 = sadd.s32 %s131, 1
    %s133 = scalar_select %p130, %s131, %s132
    %p136 = pneg %p130
    %p137 = scmp.eq.s32.totalorder %s11, 1
    %p138 = por %p136, %p137
    %p139 = scmp.ne.s32.totalorder %s131, %s134
    %p140 = scmp.eq.s32.totalorder %s11, 0
    %p141 = por %p139, %p140
    %p142 = scmp.ne.s32.totalorder %s131, %s134
    %p143 = scmp.eq.s32.totalorder %s16, 1
    %p144 = por %p142, %p143
    %p145 = scmp.ne.s32.totalorder %s134, %s135
    %p146 = scmp.eq.s32.totalorder %s16, 0
    %p147 = por %p145, %p146
    %p148 = scmp.ne.s32.totalorder %s134, %s135
    %p149 = scmp.eq.s32.totalorder %s17, 1
    %p150 = por %p148, %p149
    %p152 = scmp.ne.s32.totalorder %s135, %s151
    %p153 = scmp.eq.s32.totalorder %s17, 0
    %p154 = por %p152, %p153
    %p155 = scmp.le.s32.totalorder 1, %s11
    %p156 = scmp.lt.s32.totalorder %s11, 3
    %p157 = pnand %p155, %p156
    %p158 = pneg %p157
    // Predicated region
    $region9: #{image_encoder_forward.3} parent=5 // pred_check
      _
    $region10: #{image_encoder_forward.3} parent=5 // pred_check_branch
      %160 = sbr.rel (%p157) target = $region12
    $region11: #{image_encoder_forward.3} parent=5 // pred_region
      %s161 = ssub.s32 %s11, 1
      // Predicated region
      $region13: #{image_encoder_forward.3} parent=11 // pred_check
        %p162 = pneg %p58
      $region14: #{image_encoder_forward.3} parent=11 // pred_check_branch
        %164 = sbr.rel (%p162) target = $region16
      $region15: #{image_encoder_forward.3} parent=11 // pred_region
        _
      $region16: #{image_encoder_forward.3} parent=11 // pred_fallthru
        _
      // Predicated region
      $region17: #{image_encoder_forward.3} parent=11 // pred_check
        %p165 = pneg %p79
      $region18: #{image_encoder_forward.3} parent=11 // pred_check_branch
        %167 = sbr.rel (%p165) target = $region20
      $region19: #{image_encoder_forward.3} parent=11 // pred_region
        _
      $region20: #{image_encoder_forward.3} parent=11 // pred_fallthru
        _
      // Predicated region
      $region21: #{image_encoder_forward.3} parent=11 // pred_check
        %p168 = pneg %p100
      $region22: #{image_encoder_forward.3} parent=11 // pred_check_branch
        %170 = sbr.rel (%p168) target = $region24
      $region23: #{image_encoder_forward.3} parent=11 // pred_region
        _
      $region24: #{image_encoder_forward.3} parent=11 // pred_fallthru
        _
      // Predicated region
      $region25: #{image_encoder_forward.3} parent=11 // pred_check
        %p171 = pneg %p121
      $region26: #{image_encoder_forward.3} parent=11 // pred_check_branch
        %173 = sbr.rel (%p171) target = $region28
      $region27: #{image_encoder_forward.3} parent=11 // pred_region
        _
      $region28: #{image_encoder_forward.3} parent=11 // pred_fallthru
        _
    $region12: #{image_encoder_forward.3} parent=5 // pred_fallthru
      _
    %p174 = scmp.lt.s32.totalorder %s11, 2
    // Predicated region
    $region29: #{image_encoder_forward.3} parent=5 // pred_check
      %p175 = pneg %p174
    $region30: #{image_encoder_forward.3} parent=5 // pred_check_branch
      %177 = sbr.rel (%p175) target = $region32
    $region31: #{image_encoder_forward.3} parent=5 // pred_region
      // Predicated region
      $region33: #{image_encoder_forward.3} parent=31 // pred_check
        %p178 = pneg %p31
      $region34: #{image_encoder_forward.3} parent=31 // pred_check_branch
        %180 = sbr.rel (%p178) target = $region36
      $region35: #{image_encoder_forward.3} parent=31 // pred_region
        %p181 = scmp.lt.s32.totalorder %s11, 1
        %s182 = scalar_select %p181, %s11, 1
        %s183 = smul.addr %s182, 4
        %s184 = smul.addr %s183, 4
        %s185 = scalar_lea.vmem %s0, %s184
      $region36: #{image_encoder_forward.3} parent=31 // pred_fallthru
        _
    $region32: #{image_encoder_forward.3} parent=5 // pred_fallthru
      _
    %p186 = scmp.le.s32.totalorder 1, %s11
    %p187 = scmp.lt.s32.totalorder %s11, 3
    %p188 = pnand %p186, %p187
    %p189 = pneg %p188
    // Predicated region
    $region37: #{image_encoder_forward.3} parent=5 // pred_check
      _
    $region38: #{image_encoder_forward.3} parent=5 // pred_check_branch
      %191 = sbr.rel (%p188) target = $region40
    $region39: #{image_encoder_forward.3} parent=5 // pred_region
      %s192 = ssub.s32 %s11, 1
      %p193 = scmp.lt.s32.totalorder %s16, 1
      %s194 = scalar_select %p193, %s16, 1
      %s195 = smul.addr %s194, 4
      %s196 = smul.addr %s195, 4
      %s197 = scalar_lea.vmem %s0, %s196
      %p198 = pneg %p37
      %p199 = pneg %p34
      %p200 = pneg %p58
      %p201 = pneg %p55
      %p202 = pneg %p79
      %p203 = pneg %p76
      %p204 = pneg %p100
      %p205 = pneg %p97
      %p206 = pneg %p121
      %p207 = pneg %p118
      %p208 = pneg %p147
      %p209 = pneg %p144
      %p210 = scmp.lt.s32.totalorder %s16, 1
      %s211 = scalar_select %p210, %s16, 1
      %s212 = smul.addr %s211, 3
      %s213 = smul.addr %s212, 4
      %s214 = scalar_lea.vmem %s5, %s213
      %p215 = scmp.lt.s32.totalorder %s16, 1
      %s216 = scalar_select %p215, %s16, 1
      %s217 = smul.addr %s216, 4
      %s218 = smul.addr %s217, 4
      %s219 = scalar_lea.vmem %s0, %s218
      %p220 = scmp.lt.s32.totalorder %s16, 1
      %s221 = scalar_select %p220, %s16, 1
      %s222 = smul.addr %s221, 3
      %s223 = smul.addr %s222, 4
      %s224 = scalar_lea.vmem %s5, %s223
      %v225 = vld [vmem:[%s219] sm:$0xff]
      %v226 = vld [vmem:[%s219 + $0x8] sm:$0xff]
      %v227 = vld [vmem:[%s1] sm:$0xf]
      %v228 = vld [vmem:[%s1 + $0x4] sm:$0xf]
      %v229 = vld [vmem:[%s1 + $0x8] sm:$0xf]
      %v230 = vld [vmem:[%s1 + $0xc] sm:$0xf]
      %v231 = vld [vmem:[%s1 + $0x10] sm:$0xf]
      %v232 = vld [vmem:[%s1 + $0x14] sm:$0xf]
      %v233 = vld [vmem:[%s1 + $0x18] sm:$0xf]
      %v234 = vld [vmem:[%s1 + $0x1c] sm:$0xf]
      %v235 = vld [vmem:[%s1 + $0x20] sm:$0xf]
      %v236 = vld [vmem:[%s1 + $0x24] sm:$0xf]
      %v237 = vld [vmem:[%s1 + $0x28] sm:$0xf]
      %v238 = vld [vmem:[%s1 + $0x2c] sm:$0xf]
      %v239 = vld [vmem:[%s1 + $0x30] sm:$0xf]
      %v240 = vld [vmem:[%s1 + $0x34] sm:$0xf]
      %v241 = vld [vmem:[%s1 + $0x38] sm:$0xf]
      %v242 = vld [vmem:[%s1 + $0x3c] sm:$0xf]
      %v243 = vld [vmem:[%s1 + $0x40] sm:$0xf]
      %v244 = vld [vmem:[%s1 + $0x44] sm:$0xf]
      %v245 = vld [vmem:[%s1 + $0x48] sm:$0xf]
      %v246 = vld [vmem:[%s1 + $0x4c] sm:$0xf]
      %v247 = vld [vmem:[%s1 + $0x50] sm:$0xf]
      %v248 = vld [vmem:[%s1 + $0x54] sm:$0xf]
      %v249 = vld [vmem:[%s1 + $0x58] sm:$0xf]
      %v250 = vld [vmem:[%s1 + $0x5c] sm:$0xf]
      %v251 = vld [vmem:[%s1 + $0x60] sm:$0xf]
      %v252 = vld [vmem:[%s1 + $0x64] sm:$0xf]
      %v253 = vld [vmem:[%s1 + $0x68] sm:$0xf]
      %v254 = vld [vmem:[%s1 + $0x6c] sm:$0xf]
      %v255 = vld [vmem:[%s1 + $0x70] sm:$0xf]
      %v256 = vld [vmem:[%s1 + $0x74] sm:$0xf]
      %v257 = vld [vmem:[%s1 + $0x78] sm:$0xf]
      %v258 = vld [vmem:[%s1 + $0x7c] sm:$0xf]
      %v261 = vunpack.c.l.b16 %v225
      %v262 = vunpack.c.h.b16 %v225
      %v263 = vunpack.c.l.b16 %v226
      %v264 = vunpack.c.h.b16 %v226
      %v265 = vpack.c.b16 %v263, %v261
      %v266 = vpack.c.b16 %v264, %v262
      %v301 = vunpack.c.l.b16 %v227
      %v302 = vunpack.c.l.b16 %v228
      %v303 = vunpack.c.l.b16 %v229
      %v304 = vunpack.c.l.b16 %v230
      %v305 = vunpack.c.l.b16 %v231
      %v306 = vunpack.c.l.b16 %v232
      %v307 = vunpack.c.l.b16 %v233
      %v308 = vunpack.c.l.b16 %v234
      %v309 = vunpack.c.l.b16 %v235
      %v310 = vunpack.c.l.b16 %v236
      %v311 = vunpack.c.l.b16 %v237
      %v312 = vunpack.c.l.b16 %v238
      %v313 = vunpack.c.l.b16 %v239
      %v314 = vunpack.c.l.b16 %v240
      %v315 = vunpack.c.l.b16 %v241
      %v316 = vunpack.c.l.b16 %v242
      %v317 = vunpack.c.l.b16 %v243
      %v318 = vunpack.c.l.b16 %v244
      %v319 = vunpack.c.l.b16 %v245
      %v320 = vunpack.c.l.b16 %v246
      %v321 = vunpack.c.l.b16 %v247
      %v322 = vunpack.c.l.b16 %v248
      %v323 = vunpack.c.l.b16 %v249
      %v324 = vunpack.c.l.b16 %v250
      %v325 = vunpack.c.l.b16 %v251
      %v326 = vunpack.c.l.b16 %v252
      %v327 = vunpack.c.l.b16 %v253
      %v328 = vunpack.c.l.b16 %v254
      %v329 = vunpack.c.l.b16 %v255
      %v330 = vunpack.c.l.b16 %v256
      %v331 = vunpack.c.l.b16 %v257
      %v332 = vunpack.c.l.b16 %v258
      %v333 = vpack.c.b16 %v302, %v301
      %v334 = vpack.c.b16 %v304, %v303
      %v335 = vpack.c.b16 %v306, %v305
      %v336 = vpack.c.b16 %v308, %v307
      %v337 = vpack.c.b16 %v310, %v309
      %v338 = vpack.c.b16 %v312, %v311
      %v339 = vpack.c.b16 %v314, %v313
      %v340 = vpack.c.b16 %v316, %v315
      %v341 = vpack.c.b16 %v318, %v317
      %v342 = vpack.c.b16 %v320, %v319
      %v343 = vpack.c.b16 %v322, %v321
      %v344 = vpack.c.b16 %v324, %v323
      %v345 = vpack.c.b16 %v326, %v325
      %v346 = vpack.c.b16 %v328, %v327
      %v347 = vpack.c.b16 %v330, %v329
      %v348 = vpack.c.b16 %v332, %v331
      %365 = vmatpush.bf16.msra.mxu0 %v340
      %366 = vmatpush.bf16.msra.mxu0 %v339
      %367 = vmatpush.bf16.msra.mxu0 %v338
      %368 = vmatpush.bf16.msra.mxu0 %v337
      %369 = vmatpush.bf16.msra.mxu0 %v336
      %370 = vmatpush.bf16.msra.mxu0 %v335
      %371 = vmatpush.bf16.msra.mxu0 %v334
      %372 = vmatpush.bf16.msra.mxu0 %v333
      %373 = vmatmul.bf16.gmra.mxu0 %v265
      %v374 = vpop.f32.mrf.mxu0
      %v375 = vadd.f32 0.0, %v374
      %v376 = vpop.f32.mrf.mxu0
      %v377 = vadd.f32 0.0, %v376
      %378 = vdwg.mxu0
      %379 = vmatpush.bf16.msra.mxu0 %v348
      %380 = vmatpush.bf16.msra.mxu0 %v347
      %381 = vmatpush.bf16.msra.mxu0 %v346
      %382 = vmatpush.bf16.msra.mxu0 %v345
      %383 = vmatpush.bf16.msra.mxu0 %v344
      %384 = vmatpush.bf16.msra.mxu0 %v343
      %385 = vmatpush.bf16.msra.mxu0 %v342
      %386 = vmatpush.bf16.msra.mxu0 %v341
      %387 = vmatmul.bf16.gmra.mxu0 %v266
      %v388 = vpop.f32.mrf.mxu0
      %v389 = vadd.f32 %v375, %v388
      %v390 = vpop.f32.mrf.mxu0
      %v391 = vadd.f32 %v377, %v390
      %392 = vdwg.mxu0
      %v393 = vld [vmem:[%s3] sm:$0x1]
      %vm396 = vcmask 1040384
      %v397 = vrot.slane %v389, 7
      %v398 = vrot.slane %v391, 7
      %v399 = vsel %vm396, %v397, %v398
      %v403 = vsel %vm396, %v393, %v397
      %v404 = vld [vmem:[%s2] sm:$0xff]
      %v405 = vld [vmem:[%s2 + $0x8] sm:$0xff]
      %v406 = vld [vmem:[%s2 + $0x10] sm:$0x1]
      %v407 = vadd.f32 %v403, %v404
      %v408 = vadd.f32 %v399, %v405
      %v409 = vadd.f32 %v398, %v406
      %v410 = vld [vmem:[%s4] sm:$0x1]
      %v411 = vld [vmem:[%s4 + $0x1] sm:$0x1]
      %412 = vadd.xlane.f32.xlu0 %v407
      %v413 = vpop.xlane.xlu0 %412
      %414 = vadd.xlane.f32.xlu0 %v408
      %v415 = vpop.xlane.xlu0 %414
      %v416 = vsel %vm396, %v409, 0.0
      %417 = vadd.xlane.f32.xlu0 %v416
      %v418 = vpop.xlane.xlu0 %417
      %v419 = vrcp.pop 128.0
      %v420 = vmul.f32 128.0, %v419
      %v421 = vsub.f32 1.0, %v420
      %v422 = vmul.f32 %v419, %v421
      %v423 = vadd.f32 %v419, %v422
      %vm424 = vweird.f32 %v419
      %v425 = vsel %vm424, %v419, %v423
      %v426 = vmul.f32 %v413, %v425
      %v427 = vmul.f32 %v415, %v425
      %v428 = vmul.f32 %v418, %v425
      %v429 = vsub.f32 %v407, %v426
      %v430 = vsub.f32 %v408, %v427
      %v431 = vsub.f32 %v409, %v428
      %v432 = vmul.f32 %v429, %v429
      %v433 = vmul.f32 %v430, %v430
      %v434 = vmul.f32 %v431, %v431
      %435 = vadd.xlane.f32.xlu0 %v432
      %v436 = vpop.xlane.xlu0 %435
      %437 = vadd.xlane.f32.xlu0 %v433
      %v438 = vpop.xlane.xlu0 %437
      %v439 = vsel %vm396, %v434, 0.0
      %440 = vadd.xlane.f32.xlu0 %v439
      %v441 = vpop.xlane.xlu0 %440
      %v442 = vmul.f32 %v436, %v425
      %v443 = vmul.f32 %v438, %v425
      %v444 = vmul.f32 %v441, %v425
      %v445 = vadd.f32 %v442, 1e-06
      %v446 = vadd.f32 %v443, 1e-06
      %v447 = vadd.f32 %v444, 1e-06
      %v448 = vrsqrt.pop %v445
      %v449 = vmul.f32 %v448, %v445
      %v450 = vmul.f32 %v449, %v448
      %v451 = vmul.f32 0.5, %v450
      %v452 = vsub.f32 1.5, %v451
      %v453 = vmul.f32 %v448, %v452
      %vm454 = vweird.f32 %v445
      %vm455 = vweird.f32 %v448
      %vm456 = vmor %vm454, %vm455
      %v457 = vsel %vm456, %v448, %v453
      %v458 = vrsqrt.pop %v446
      %v459 = vmul.f32 %v458, %v446
      %v460 = vmul.f32 %v459, %v458
      %v461 = vmul.f32 0.5, %v460
      %v462 = vsub.f32 1.5, %v461
      %v463 = vmul.f32 %v458, %v462
      %vm464 = vweird.f32 %v446
      %vm465 = vweird.f32 %v458
      %vm466 = vmor %vm464, %vm465
      %v467 = vsel %vm466, %v458, %v463
      %v468 = vrsqrt.pop %v447
      %v469 = vmul.f32 %v468, %v447
      %v470 = vmul.f32 %v469, %v468
      %v471 = vmul.f32 0.5, %v470
      %v472 = vsub.f32 1.5, %v471
      %v473 = vmul.f32 %v468, %v472
      %vm474 = vweird.f32 %v447
      %vm475 = vweird.f32 %v468
      %vm476 = vmor %vm474, %vm475
      %v477 = vsel %vm476, %v468, %v473
      %v478 = vmul.f32 %v429, %v457
      %v479 = vmul.f32 %v430, %v467
      %v480 = vmul.f32 %v431, %v477
      %v481 = vperm.slane %v410, 0
      %v482 = vmul.f32 %v478, %v481
      %v483 = vmul.f32 %v479, %v481
      %v484 = vmul.f32 %v480, %v481
      %v485 = vperm.slane %v411, 0
      %v486 = vadd.f32 %v482, %v485
      %v487 = vadd.f32 %v483, %v485
      %v488 = vadd.f32 %v484, %v485
      %v489 = vpack.c.bf16 %v486, %v486
      %v490 = vpack.c.bf16 %v487, %v487
      %v491 = vpack.c.bf16 %v488, %v488
      %492 = vst [vmem:[%s224] sm:$0xf] %v489
      %493 = vst [vmem:[%s224 + $0x4] sm:$0xf] %v490
      %vm494 = vcmask 1040384
      %vm495 = vsmask.f32 256
      %vm496 = vmand %vm494, %vm495
      %v497 = vld [vmem:[%s224 + $0x8] sm:$0x1]
      %v498 = vsel %vm496, %v491, %v497
      %499 = vst [vmem:[%s224 + $0x8] sm:$0x1] %v498
      %p500 = scmp.lt.s32.totalorder %s16, 1
      %s501 = scalar_select %p500, %s16, 1
      %s502 = smul.addr %s501, 3
      %s503 = smul.addr %s502, 4
      %s504 = scalar_lea.vmem %s5, %s503
      // Predicated region
      $region41: #{image_encoder_forward.3} parent=39 // pred_check
        %p505 = pneg %p144
      $region42: #{image_encoder_forward.3} parent=39 // pred_check_branch
        %507 = sbr.rel (%p505) target = $region44
      $region43: #{image_encoder_forward.3} parent=39 // pred_region
        _
      $region44: #{image_encoder_forward.3} parent=39 // pred_fallthru
        _
    $region40: #{image_encoder_forward.3} parent=5 // pred_fallthru
      _
    %p508 = scmp.le.s32.totalorder 2, %s11
    // Predicated region
    $region45: #{image_encoder_forward.3} parent=5 // pred_check
      %p509 = pneg %p508
    $region46: #{image_encoder_forward.3} parent=5 // pred_check_branch
      %511 = sbr.rel (%p509) target = $region48
    $region47: #{image_encoder_forward.3} parent=5 // pred_region
      %s512 = ssub.s32 %s11, 2
      // Predicated region
      $region49: #{image_encoder_forward.3} parent=47 // pred_check
        %p513 = pneg %p150
      $region50: #{image_encoder_forward.3} parent=47 // pred_check_branch
        %515 = sbr.rel (%p513) target = $region52
      $region51: #{image_encoder_forward.3} parent=47 // pred_region
        %p516 = scmp.lt.s32.totalorder %s17, 1
        %s517 = scalar_select %p516, %s17, 1
        %s518 = smul.addr %s517, 3
        %s519 = smul.addr %s518, 4
        %s520 = scalar_lea.vmem %s5, %s519
      $region52: #{image_encoder_forward.3} parent=47 // pred_fallthru
        _
    $region48: #{image_encoder_forward.3} parent=5 // pred_fallthru
      _
  $region6: #{image_encoder_forward.3} parent=0 // loop_footer
    %s15 = sadd.s32 1, %s11
  $region7: #{image_encoder_forward.3} parent=0 // loop_footer_branch
    %10 = sbr.rel target = $region3
  $region8: #{image_encoder_forward.3} parent=0 // loop_exit
    _

// kernel: image_encoder_forward.4
$region0: #{image_encoder_forward.4}
  #allocation0 [shape = 'u32[]', space=smem, size = 0x4, offset = 0x4, fixed_abs, tag = 'smem constant byte address 0x4 - core index']
  #allocation1 [shape = 'u32[72,128]{1,0:T(1,128)}', space=vmem, size = 0x9000, scoped, tag = 'internal scratch']
  #allocation2 [shape = 'f32[17,128]{1,0:T(8,128)}', space=vmem, size = 0x3000, scoped, tag = 'scratch operand']
  %s0 = inlined_call_operand.vmem [shape: bf16[2,17,128], index: 0, kind: input, shape index: {}]
  %s1 = inlined_call_operand.vmem [shape: f32[2,2,128], index: 1, kind: input, shape index: {}]
  %s2 = inlined_call_operand.vmem [shape: bf16[2,128,384], index: 2, kind: input, shape index: {}]
  %s3 = inlined_call_operand.vmem [shape: f32[2,1,384], index: 3, kind: input, shape index: {}]
  %s4 = inlined_call_operand.vmem [shape: bf16[2,128,128], index: 4, kind: input, shape index: {}]
  %s5 = inlined_call_operand.vmem [shape: f32[2,1,128], index: 5, kind: input, shape index: {}]
  %s6 = inlined_call_operand.vmem [shape: f32[2,2,128], index: 6, kind: input, shape index: {}]
  %s7 = inlined_call_operand.vmem [shape: bf16[2,128,512], index: 7, kind: input, shape index: {}]
  %s8 = inlined_call_operand.vmem [shape: f32[2,1,512], index: 8, kind: input, shape index: {}]
  %s9 = inlined_call_operand.vmem [shape: bf16[2,512,128], index: 9, kind: input, shape index: {}]
  %s10 = inlined_call_operand.vmem [shape: f32[2,1,128], index: 10, kind: input, shape index: {}]
  %s11 = inlined_call_operand.vmem [shape: bf16[2,17,128], index: 11, kind: output, shape index: {}]
  %s12 = sld [smem:[#allocation0]]
  $region85: #{image_encoder_forward.4} parent=0
    _
  %s14 = ssub.s32 1, %s12
  %s15 = scalar_select 0, %s14, %s12
  loop: start=0, step=1, limit=6
  $region2: #{image_encoder_forward.4} parent=0 // loop_pre_header
    _
  $region3: #{image_encoder_forward.4} parent=0 // loop_header
    %s17 = sphi 0, %s21
    %p18 = scmp.ge.s32.totalorder %s17, 6
    %s24 = sphi 0, %s36
    %s25 = sphi 0, %s32
    %s26 = sphi 0, %s24
    %s27 = sphi 0, %s25
    %s28 = sphi 0, %s26
    %s29 = sphi 0, %s27
    %s39 = sphi 0, %s41
    %s42 = sphi 0, %s39
    %s43 = sphi 0, %s42
    %s59 = sphi 0, %s43
    %s65 = sphi 0, %s67
    %s68 = sphi 0, %s65
    %s69 = sphi 0, %s68
    %s85 = sphi 0, %s69
    %s91 = sphi 0, %s93
    %s94 = sphi 0, %s91
    %s95 = sphi 0, %s94
    %s111 = sphi 0, %s95
    %s117 = sphi 0, %s119
    %s120 = sphi 0, %s117
    %s121 = sphi 0, %s120
    %s137 = sphi 0, %s121
    %s143 = sphi 0, %s145
    %s146 = sphi 0, %s143
    %s147 = sphi 0, %s146
    %s163 = sphi 0, %s147
    %s169 = sphi 0, %s171
    %s172 = sphi 0, %s169
    %s173 = sphi 0, %s172
    %s189 = sphi 0, %s173
    %s195 = sphi 0, %s197
    %s198 = sphi 0, %s195
    %s199 = sphi 0, %s198
    %s215 = sphi 0, %s199
    %s221 = sphi 0, %s223
    %s224 = sphi 0, %s221
    %s225 = sphi 0, %s224
    %s241 = sphi 0, %s225
    %s247 = sphi 0, %s249
    %s250 = sphi 0, %s247
    %s251 = sphi 0, %s250
    %s267 = sphi 0, %s251
    %s273 = sphi 0, %s275
    %s276 = sphi 0, %s273
    %s277 = sphi 0, %s276
    %s293 = sphi 0, %s277
    %s299 = sphi 0, %s301
    %s302 = sphi 0, %s299
    %s303 = sphi 0, %s302
    %s319 = sphi 0, %s303
    %s325 = sphi 0, %s327
    %s328 = sphi 0, %s325
    %s329 = sphi 0, %s328
    %s345 = sphi 0, %s329
  $region4: #{image_encoder_forward.4} parent=0 // loop_header_branch
    %20 = sbr.rel (%p18) target = $region8
  $region5: #{image_encoder_forward.4} parent=0 // loop_body
    %s22 = ssub.s32 %s17, 1
    %s23 = ssub.s32 %s17, 2
    %s30 = sadd.s32 1, %s25
    %p31 = scmp.ge.s32.totalorder %s30, 2
    %s32 = scalar_select %p31, 0, %s30
    %s33 = sadd.s32 1, %s24
    %s34 = scalar_select %p31, %s33, %s24
    %p35 = scmp.ge.s32.totalorder %s34, 2
    %s36 = scalar_select %p35, 0, %s34
    %s37 = ssub.s32 %s24, %s36
    %p38 = scmp.eq.s32.totalorder %s37, 0
    %s40 = sadd.s32 %s39, 1
    %s41 = scalar_select %p38, %s39, %s40
    %p44 = pneg %p38
    %p45 = scmp.eq.s32.totalorder %s17, 3
    %p46 = por %p44, %p45
    %p47 = scmp.ne.s32.totalorder %s39, %s42
    %p48 = scmp.eq.s32.totalorder %s17, 0
    %p49 = por %p47, %p48
    %p50 = scmp.ne.s32.totalorder %s39, %s42
    %p51 = scmp.eq.s32.totalorder %s22, 3
    %p52 = por %p50, %p51
    %p53 = scmp.ne.s32.totalorder %s42, %s43
    %p54 = scmp.eq.s32.totalorder %s22, 0
    %p55 = por %p53, %p54
    %p56 = scmp.ne.s32.totalorder %s42, %s43
    %p57 = scmp.eq.s32.totalorder %s23, 3
    %p58 = por %p56, %p57
    %p60 = scmp.ne.s32.totalorder %s43, %s59
    %p61 = scmp.eq.s32.totalorder %s23, 0
    %p62 = por %p60, %p61
    %s63 = ssub.s32 %s25, %s32
    %p64 = scmp.eq.s32.totalorder %s63, 0
    %s66 = sadd.s32 %s65, 1
    %s67 = scalar_select %p64, %s65, %s66
    %p70 = pneg %p64
    %p71 = scmp.eq.s32.totalorder %s17, 3
    %p72 = por %p70, %p71
    %p73 = scmp.ne.s32.totalorder %s65, %s68
    %p74 = scmp.eq.s32.totalorder %s17, 0
    %p75 = por %p73, %p74
    %p76 = scmp.ne.s32.totalorder %s65, %s68
    %p77 = scmp.eq.s32.totalorder %s22, 3
    %p78 = por %p76, %p77
    %p79 = scmp.ne.s32.totalorder %s68, %s69
    %p80 = scmp.eq.s32.totalorder %s22, 0
    %p81 = por %p79, %p80
    %p82 = scmp.ne.s32.totalorder %s68, %s69
    %p83 = scmp.eq.s32.totalorder %s23, 3
    %p84 = por %p82, %p83
    %p86 = scmp.ne.s32.totalorder %s69, %s85
    %p87 = scmp.eq.s32.totalorder %s23, 0
    %p88 = por %p86, %p87
    %s89 = ssub.s32 %s25, %s32
    %p90 = scmp.eq.s32.totalorder %s89, 0
    %s92 = sadd.s32 %s91, 1
    %s93 = scalar_select %p90, %s91, %s92
    %p96 = pneg %p90
    %p97 = scmp.eq.s32.totalorder %s17, 3
    %p98 = por %p96, %p97
    %p99 = scmp.ne.s32.totalorder %s91, %s94
    %p100 = scmp.eq.s32.totalorder %s17, 0
    %p101 = por %p99, %p100
    %p102 = scmp.ne.s32.totalorder %s91, %s94
    %p103 = scmp.eq.s32.totalorder %s22, 3
    %p104 = por %p102, %p103
    %p105 = scmp.ne.s32.totalorder %s94, %s95
    %p106 = scmp.eq.s32.totalorder %s22, 0
    %p107 = por %p105, %p106
    %p108 = scmp.ne.s32.totalorder %s94, %s95
    %p109 = scmp.eq.s32.totalorder %s23, 3
    %p110 = por %p108, %p109
    %p112 = scmp.ne.s32.totalorder %s95, %s111
    %p113 = scmp.eq.s32.totalorder %s23, 0
    %p114 = por %p112, %p113
    %s115 = ssub.s32 %s25, %s32
    %p116 = scmp.eq.s32.totalorder %s115, 0
    %s118 = sadd.s32 %s117, 1
    %s119 = scalar_select %p116, %s117, %s118
    %p122 = pneg %p116
    %p123 = scmp.eq.s32.totalorder %s17, 3
    %p124 = por %p122, %p123
    %p125 = scmp.ne.s32.totalorder %s117, %s120
    %p126 = scmp.eq.s32.totalorder %s17, 0
    %p127 = por %p125, %p126
    %p128 = scmp.ne.s32.totalorder %s117, %s120
    %p129 = scmp.eq.s32.totalorder %s22, 3
    %p130 = por %p128, %p129
    %p131 = scmp.ne.s32.totalorder %s120, %s121
    %p132 = scmp.eq.s32.totalorder %s22, 0
    %p133 = por %p131, %p132
    %p134 = scmp.ne.s32.totalorder %s120, %s121
    %p135 = scmp.eq.s32.totalorder %s23, 3
    %p136 = por %p134, %p135
    %p138 = scmp.ne.s32.totalorder %s121, %s137
    %p139 = scmp.eq.s32.totalorder %s23, 0
    %p140 = por %p138, %p139
    %s141 = ssub.s32 %s25, %s32
    %p142 = scmp.eq.s32.totalorder %s141, 0
    %s144 = sadd.s32 %s143, 1
    %s145 = scalar_select %p142, %s143, %s144
    %p148 = pneg %p142
    %p149 = scmp.eq.s32.totalorder %s17, 3
    %p150 = por %p148, %p149
    %p151 = scmp.ne.s32.totalorder %s143, %s146
    %p152 = scmp.eq.s32.totalorder %s17, 0
    %p153 = por %p151, %p152
    %p154 = scmp.ne.s32.totalorder %s143, %s146
    %p155 = scmp.eq.s32.totalorder %s22, 3
    %p156 = por %p154, %p155
    %p157 = scmp.ne.s32.totalorder %s146, %s147
    %p158 = scmp.eq.s32.totalorder %s22, 0
    %p159 = por %p157, %p158
    %p160 = scmp.ne.s32.totalorder %s146, %s147
    %p161 = scmp.eq.s32.totalorder %s23, 3
    %p162 = por %p160, %p161
    %p164 = scmp.ne.s32.totalorder %s147, %s163
    %p165 = scmp.eq.s32.totalorder %s23, 0
    %p166 = por %p164, %p165
    %s167 = ssub.s32 %s25, %s32
    %p168 = scmp.eq.s32.totalorder %s167, 0
    %s170 = sadd.s32 %s169, 1
    %s171 = scalar_select %p168, %s169, %s170
    %p174 = pneg %p168
    %p175 = scmp.eq.s32.totalorder %s17, 3
    %p176 = por %p174, %p175
    %p177 = scmp.ne.s32.totalorder %s169, %s172
    %p178 = scmp.eq.s32.totalorder %s17, 0
    %p179 = por %p177, %p178
    %p180 = scmp.ne.s32.totalorder %s169, %s172
    %p181 = scmp.eq.s32.totalorder %s22, 3
    %p182 = por %p180, %p181
    %p183 = scmp.ne.s32.totalorder %s172, %s173
    %p184 = scmp.eq.s32.totalorder %s22, 0
    %p185 = por %p183, %p184
    %p186 = scmp.ne.s32.totalorder %s172, %s173
    %p187 = scmp.eq.s32.totalorder %s23, 3
    %p188 = por %p186, %p187
    %p190 = scmp.ne.s32.totalorder %s173, %s189
    %p191 = scmp.eq.s32.totalorder %s23, 0
    %p192 = por %p190, %p191
    %s193 = ssub.s32 %s25, %s32
    %p194 = scmp.eq.s32.totalorder %s193, 0
    %s196 = sadd.s32 %s195, 1
    %s197 = scalar_select %p194, %s195, %s196
    %p200 = pneg %p194
    %p201 = scmp.eq.s32.totalorder %s17, 3
    %p202 = por %p200, %p201
    %p203 = scmp.ne.s32.totalorder %s195, %s198
    %p204 = scmp.eq.s32.totalorder %s17, 0
    %p205 = por %p203, %p204
    %p206 = scmp.ne.s32.totalorder %s195, %s198
    %p207 = scmp.eq.s32.totalorder %s22, 3
    %p208 = por %p206, %p207
    %p209 = scmp.ne.s32.totalorder %s198, %s199
    %p210 = scmp.eq.s32.totalorder %s22, 0
    %p211 = por %p209, %p210
    %p212 = scmp.ne.s32.totalorder %s198, %s199
    %p213 = scmp.eq.s32.totalorder %s23, 3
    %p214 = por %p212, %p213
    %p216 = scmp.ne.s32.totalorder %s199, %s215
    %p217 = scmp.eq.s32.totalorder %s23, 0
    %p218 = por %p216, %p217
    %s219 = ssub.s32 %s25, %s32
    %p220 = scmp.eq.s32.totalorder %s219, 0
    %s222 = sadd.s32 %s221, 1
    %s223 = scalar_select %p220, %s221, %s222
    %p226 = pneg %p220
    %p227 = scmp.eq.s32.totalorder %s17, 3
    %p228 = por %p226, %p227
    %p229 = scmp.ne.s32.totalorder %s221, %s224
    %p230 = scmp.eq.s32.totalorder %s17, 0
    %p231 = por %p229, %p230
    %p232 = scmp.ne.s32.totalorder %s221, %s224
    %p233 = scmp.eq.s32.totalorder %s22, 3
    %p234 = por %p232, %p233
    %p235 = scmp.ne.s32.totalorder %s224, %s225
    %p236 = scmp.eq.s32.totalorder %s22, 0
    %p237 = por %p235, %p236
    %p238 = scmp.ne.s32.totalorder %s224, %s225
    %p239 = scmp.eq.s32.totalorder %s23, 3
    %p240 = por %p238, %p239
    %p242 = scmp.ne.s32.totalorder %s225, %s241
    %p243 = scmp.eq.s32.totalorder %s23, 0
    %p244 = por %p242, %p243
    %s245 = ssub.s32 %s25, %s32
    %p246 = scmp.eq.s32.totalorder %s245, 0
    %s248 = sadd.s32 %s247, 1
    %s249 = scalar_select %p246, %s247, %s248
    %p252 = pneg %p246
    %p253 = scmp.eq.s32.totalorder %s17, 3
    %p254 = por %p252, %p253
    %p255 = scmp.ne.s32.totalorder %s247, %s250
    %p256 = scmp.eq.s32.totalorder %s17, 0
    %p257 = por %p255, %p256
    %p258 = scmp.ne.s32.totalorder %s247, %s250
    %p259 = scmp.eq.s32.totalorder %s22, 3
    %p260 = por %p258, %p259
    %p261 = scmp.ne.s32.totalorder %s250, %s251
    %p262 = scmp.eq.s32.totalorder %s22, 0
    %p263 = por %p261, %p262
    %p264 = scmp.ne.s32.totalorder %s250, %s251
    %p265 = scmp.eq.s32.totalorder %s23, 3
    %p266 = por %p264, %p265
    %p268 = scmp.ne.s32.totalorder %s251, %s267
    %p269 = scmp.eq.s32.totalorder %s23, 0
    %p270 = por %p268, %p269
    %s271 = ssub.s32 %s25, %s32
    %p272 = scmp.eq.s32.totalorder %s271, 0
    %s274 = sadd.s32 %s273, 1
    %s275 = scalar_select %p272, %s273, %s274
    %p278 = pneg %p272
    %p279 = scmp.eq.s32.totalorder %s17, 3
    %p280 = por %p278, %p279
    %p281 = scmp.ne.s32.totalorder %s273, %s276
    %p282 = scmp.eq.s32.totalorder %s17, 0
    %p283 = por %p281, %p282
    %p284 = scmp.ne.s32.totalorder %s273, %s276
    %p285 = scmp.eq.s32.totalorder %s22, 3
    %p286 = por %p284, %p285
    %p287 = scmp.ne.s32.totalorder %s276, %s277
    %p288 = scmp.eq.s32.totalorder %s22, 0
    %p289 = por %p287, %p288
    %p290 = scmp.ne.s32.totalorder %s276, %s277
    %p291 = scmp.eq.s32.totalorder %s23, 3
    %p292 = por %p290, %p291
    %p294 = scmp.ne.s32.totalorder %s277, %s293
    %p295 = scmp.eq.s32.totalorder %s23, 0
    %p296 = por %p294, %p295
    %s297 = ssub.s32 %s25, %s32
    %p298 = scmp.eq.s32.totalorder %s297, 0
    %s300 = sadd.s32 %s299, 1
    %s301 = scalar_select %p298, %s299, %s300
    %p304 = pneg %p298
    %p305 = scmp.eq.s32.totalorder %s17, 3
    %p306 = por %p304, %p305
    %p307 = scmp.ne.s32.totalorder %s299, %s302
    %p308 = scmp.eq.s32.totalorder %s17, 0
    %p309 = por %p307, %p308
    %p310 = scmp.ne.s32.totalorder %s299, %s302
    %p311 = scmp.eq.s32.totalorder %s22, 3
    %p312 = por %p310, %p311
    %p313 = scmp.ne.s32.totalorder %s302, %s303
    %p314 = scmp.eq.s32.totalorder %s22, 0
    %p315 = por %p313, %p314
    %p316 = scmp.ne.s32.totalorder %s302, %s303
    %p317 = scmp.eq.s32.totalorder %s23, 3
    %p318 = por %p316, %p317
    %p320 = scmp.ne.s32.totalorder %s303, %s319
    %p321 = scmp.eq.s32.totalorder %s23, 0
    %p322 = por %p320, %p321
    %s323 = ssub.s32 %s24, %s36
    %p324 = scmp.eq.s32.totalorder %s323, 0
    %s326 = sadd.s32 %s325, 1
    %s327 = scalar_select %p324, %s325, %s326
    %p330 = pneg %p324
    %p331 = scmp.eq.s32.totalorder %s17, 3
    %p332 = por %p330, %p331
    %p333 = scmp.ne.s32.totalorder %s325, %s328
    %p334 = scmp.eq.s32.totalorder %s17, 0
    %p335 = por %p333, %p334
    %p336 = scmp.ne.s32.totalorder %s325, %s328
    %p337 = scmp.eq.s32.totalorder %s22, 3
    %p338 = por %p336, %p337
    %p339 = scmp.ne.s32.totalorder %s328, %s329
    %p340 = scmp.eq.s32.totalorder %s22, 0
    %p341 = por %p339, %p340
    %p342 = scmp.ne.s32.totalorder %s328, %s329
    %p343 = scmp.eq.s32.totalorder %s23, 3
    %p344 = por %p342, %p343
    %p346 = scmp.ne.s32.totalorder %s329, %s345
    %p347 = scmp.eq.s32.totalorder %s23, 0
    %p348 = por %p346, %p347
    %p349 = scmp.le.s32.totalorder 1, %s17
    %p350 = scmp.lt.s32.totalorder %s17, 5
    %p351 = pnand %p349, %p350
    %p352 = pneg %p351
    // Predicated region
    $region9: #{image_encoder_forward.4} parent=5 // pred_check
      _
    $region10: #{image_encoder_forward.4} parent=5 // pred_check_branch
      %354 = sbr.rel (%p351) target = $region12
    $region11: #{image_encoder_forward.4} parent=5 // pred_region
      %s355 = ssub.s32 %s17, 1
    $region12: #{image_encoder_forward.4} parent=5 // pred_fallthru
      _
    %p356 = scmp.lt.s32.totalorder %s17, 4
    // Predicated region
    $region13: #{image_encoder_forward.4} parent=5 // pred_check
      %p357 = pneg %p356
    $region14: #{image_encoder_forward.4} parent=5 // pred_check_branch
      %359 = sbr.rel (%p357) target = $region16
    $region15: #{image_encoder_forward.4} parent=5 // pred_region
      // Predicated region
      $region17: #{image_encoder_forward.4} parent=15 // pred_check
        %p360 = pneg %p49
      $region18: #{image_encoder_forward.4} parent=15 // pred_check_branch
        %362 = sbr.rel (%p360) target = $region20
      $region19: #{image_encoder_forward.4} parent=15 // pred_region
        %p363 = scmp.lt.s32.totalorder %s24, 1
        %s364 = scalar_select %p363, %s24, 1
        %s365 = smul.addr %s364, 3
        %s366 = smul.addr %s365, 4
        %s367 = scalar_lea.vmem %s0, %s366
      $region20: #{image_encoder_forward.4} parent=15 // pred_fallthru
        _
      // Predicated region
      $region21: #{image_encoder_forward.4} parent=15 // pred_check
        %p368 = pneg %p75
      $region22: #{image_encoder_forward.4} parent=15 // pred_check_branch
        %370 = sbr.rel (%p368) target = $region24
      $region23: #{image_encoder_forward.4} parent=15 // pred_region
        %p371 = scmp.lt.s32.totalorder %s25, 1
        %s372 = scalar_select %p371, %s25, 1
        %s373 = smul.addr %s372, 2
        %s374 = scalar_lea.vmem %s1, %s373
      $region24: #{image_encoder_forward.4} parent=15 // pred_fallthru
        _
      // Predicated region
      $region25: #{image_encoder_forward.4} parent=15 // pred_check
        %p375 = pneg %p101
      $region26: #{image_encoder_forward.4} parent=15 // pred_check_branch
        %377 = sbr.rel (%p375) target = $region28
      $region27: #{image_encoder_forward.4} parent=15 // pred_region
        %p378 = scmp.lt.s32.totalorder %s25, 1
        %s379 = scalar_select %p378, %s25, 1
        %s380 = smul.addr %s379, 48
        %s381 = smul.addr %s380, 4
        %s382 = scalar_lea.vmem %s2, %s381
      $region28: #{image_encoder_forward.4} parent=15 // pred_fallthru
        _
      // Predicated region
      $region29: #{image_encoder_forward.4} parent=15 // pred_check
        %p383 = pneg %p127
      $region30: #{image_encoder_forward.4} parent=15 // pred_check_branch
        %385 = sbr.rel (%p383) target = $region32
      $region31: #{image_encoder_forward.4} parent=15 // pred_region
        %p386 = scmp.lt.s32.totalorder %s25, 1
        %s387 = scalar_select %p386, %s25, 1
        %s388 = smul.addr %s387, 3
        %s389 = scalar_lea.vmem %s3, %s388
      $region32: #{image_encoder_forward.4} parent=15 // pred_fallthru
        _
      // Predicated region
      $region33: #{image_encoder_forward.4} parent=15 // pred_check
        %p390 = pneg %p153
      $region34: #{image_encoder_forward.4} parent=15 // pred_check_branch
        %392 = sbr.rel (%p390) target = $region36
      $region35: #{image_encoder_forward.4} parent=15 // pred_region
        %p393 = scmp.lt.s32.totalorder %s25, 1
        %s394 = scalar_select %p393, %s25, 1
        %s395 = smul.addr %s394, 16
        %s396 = smul.addr %s395, 4
        %s397 = scalar_lea.vmem %s4, %s396
      $region36: #{image_encoder_forward.4} parent=15 // pred_fallthru
        _
      // Predicated region
      $region37: #{image_encoder_forward.4} parent=15 // pred_check
        %p398 = pneg %p179
      $region38: #{image_encoder_forward.4} parent=15 // pred_check_branch
        %400 = sbr.rel (%p398) target = $region40
      $region39: #{image_encoder_forward.4} parent=15 // pred_region
        %p401 = scmp.lt.s32.totalorder %s25, 1
        %s402 = scalar_select %p401, %s25, 1
        %s403 = scalar_lea.vmem %s5, %s402
      $region40: #{image_encoder_forward.4} parent=15 // pred_fallthru
        _
      // Predicated region
      $region41: #{image_encoder_forward.4} parent=15 // pred_check
        %p404 = pneg %p205
      $region42: #{image_encoder_forward.4} parent=15 // pred_check_branch
        %406 = sbr.rel (%p404) target = $region44
      $region43: #{image_encoder_forward.4} parent=15 // pred_region
        %p407 = scmp.lt.s32.totalorder %s25, 1
        %s408 = scalar_select %p407, %s25, 1
        %s409 = smul.addr %s408, 2
        %s410 = scalar_lea.vmem %s6, %s409
      $region44: #{image_encoder_forward.4} parent=15 // pred_fallthru
        _
      // Predicated region
      $region45: #{image_encoder_forward.4} parent=15 // pred_check
        %p411 = pneg %p231
      $region46: #{image_encoder_forward.4} parent=15 // pred_check_branch
        %413 = sbr.rel (%p411) target = $region48
      $region47: #{image_encoder_forward.4} parent=15 // pred_region
        %p414 = scmp.lt.s32.totalorder %s25, 1
        %s415 = scalar_select %p414, %s25, 1
        %s416 = smul.addr %s415, 64
        %s417 = smul.addr %s416, 4
        %s418 = scalar_lea.vmem %s7, %s417
      $region48: #{image_encoder_forward.4} parent=15 // pred_fallthru
        _
      // Predicated region
      $region49: #{image_encoder_forward.4} parent=15 // pred_check
        %p419 = pneg %p257
      $region50: #{image_encoder_forward.4} parent=15 // pred_check_branch
        %421 = sbr.rel (%p419) target = $region52
      $region51: #{image_encoder_forward.4} parent=15 // pred_region
        %p422 = scmp.lt.s32.totalorder %s25, 1
        %s423 = scalar_select %p422, %s25, 1
        %s424 = smul.addr %s423, 4
        %s425 = scalar_lea.vmem %s8, %s424
      $region52: #{image_encoder_forward.4} parent=15 // pred_fallthru
        _
      // Predicated region
      $region53: #{image_encoder_forward.4} parent=15 // pred_check
        %p426 = pneg %p283
      $region54: #{image_encoder_forward.4} parent=15 // pred_check_branch
        %428 = sbr.rel (%p426) target = $region56
      $region55: #{image_encoder_forward.4} parent=15 // pred_region
        %p429 = scmp.lt.s32.totalorder %s25, 1
        %s430 = scalar_select %p429, %s25, 1
        %s431 = smul.addr %s430, 64
        %s432 = smul.addr %s431, 4
        %s433 = scalar_lea.vmem %s9, %s432
      $region56: #{image_encoder_forward.4} parent=15 // pred_fallthru
        _
      // Predicated region
      $region57: #{image_encoder_forward.4} parent=15 // pred_check
        %p434 = pneg %p309
      $region58: #{image_encoder_forward.4} parent=15 // pred_check_branch
        %436 = sbr.rel (%p434) target = $region60
      $region59: #{image_encoder_forward.4} parent=15 // pred_region
        %p437 = scmp.lt.s32.totalorder %s25, 1
        %s438 = scalar_select %p437, %s25, 1
        %s439 = scalar_lea.vmem %s10, %s438
      $region60: #{image_encoder_forward.4} parent=15 // pred_fallthru
        _
    $region16: #{image_encoder_forward.4} parent=5 // pred_fallthru
      _
    %p440 = scmp.le.s32.totalorder 1, %s17
    %p441 = scmp.lt.s32.totalorder %s17, 5
    %p442 = pnand %p440, %p441
    %p443 = pneg %p442
    // Predicated region
    $region61: #{image_encoder_forward.4} parent=5 // pred_check
      _
    $region62: #{image_encoder_forward.4} parent=5 // pred_check_branch
      %445 = sbr.rel (%p442) target = $region64
    $region63: #{image_encoder_forward.4} parent=5 // pred_region
      %s446 = ssub.s32 %s17, 1
      %p447 = scmp.lt.s32.totalorder %s26, 1
      %s448 = scalar_select %p447, %s26, 1
      %s449 = smul.addr %s448, 3
      %s450 = smul.addr %s449, 4
      %s451 = scalar_lea.vmem %s0, %s450
      %p452 = pneg %p55
      %p453 = pneg %p52
      %p454 = scmp.lt.s32.totalorder %s27, 1
      %s455 = scalar_select %p454, %s27, 1
      %s456 = smul.addr %s455, 2
      %s457 = scalar_lea.vmem %s1, %s456
      %p458 = pneg %p81
      %p459 = pneg %p78
      %p460 = scmp.lt.s32.totalorder %s27, 1
      %s461 = scalar_select %p460, %s27, 1
      %s462 = smul.addr %s461, 48
      %s463 = smul.addr %s462, 4
      %s464 = scalar_lea.vmem %s2, %s463
      %p465 = pneg %p107
      %p466 = pneg %p104
      %p467 = scmp.lt.s32.totalorder %s27, 1
      %s468 = scalar_select %p467, %s27, 1
      %s469 = smul.addr %s468, 3
      %s470 = scalar_lea.vmem %s3, %s469
      %p471 = pneg %p133
      %p472 = pneg %p130
      %p473 = scmp.lt.s32.totalorder %s27, 1
      %s474 = scalar_select %p473, %s27, 1
      %s475 = smul.addr %s474, 16
      %s476 = smul.addr %s475, 4
      %s477 = scalar_lea.vmem %s4, %s476
      %p478 = pneg %p159
      %p479 = pneg %p156
      %p480 = scmp.lt.s32.totalorder %s27, 1
      %s481 = scalar_select %p480, %s27, 1
      %s482 = scalar_lea.vmem %s5, %s481
      %p483 = pneg %p185
      %p484 = pneg %p182
      %p485 = scmp.lt.s32.totalorder %s27, 1
      %s486 = scalar_select %p485, %s27, 1
      %s487 = smul.addr %s486, 2
      %s488 = scalar_lea.vmem %s6, %s487
      %p489 = pneg %p211
      %p490 = pneg %p208
      %p491 = scmp.lt.s32.totalorder %s27, 1
      %s492 = scalar_select %p491, %s27, 1
      %s493 = smul.addr %s492, 64
      %s494 = smul.addr %s493, 4
      %s495 = scalar_lea.vmem %s7, %s494
      %p496 = pneg %p237
      %p497 = pneg %p234
      %p498 = scmp.lt.s32.totalorder %s27, 1
      %s499 = scalar_select %p498, %s27, 1
      %s500 = smul.addr %s499, 4
      %s501 = scalar_lea.vmem %s8, %s500
      %p502 = pneg %p263
      %p503 = pneg %p260
      %p504 = scmp.lt.s32.totalorder %s27, 1
      %s505 = scalar_select %p504, %s27, 1
      %s506 = smul.addr %s505, 64
      %s507 = smul.addr %s506, 4
      %s508 = scalar_lea.vmem %s9, %s507
      %p509 = pneg %p289
      %p510 = pneg %p286
      %p511 = scmp.lt.s32.totalorder %s27, 1
      %s512 = scalar_select %p511, %s27, 1
      %s513 = scalar_lea.vmem %s10, %s512
      %p514 = pneg %p315
      %p515 = pneg %p312
      %p516 = pneg %p341
      %p517 = pneg %p338
      %p518 = scmp.lt.s32.totalorder %s26, 1
      %s519 = scalar_select %p518, %s26, 1
      %s520 = smul.addr %s519, 3
      %s521 = smul.addr %s520, 4
      %s522 = scalar_lea.vmem %s11, %s521
      %p523 = scmp.lt.s32.totalorder %s26, 1
      %s524 = scalar_select %p523, %s26, 1
      %s525 = smul.addr %s524, 3
      %s526 = smul.addr %s525, 4
      %s527 = scalar_lea.vmem %s0, %s526
      %p528 = scmp.lt.s32.totalorder %s27, 1
      %s529 = scalar_select %p528, %s27, 1
      %s530 = smul.addr %s529, 2
      %s531 = scalar_lea.vmem %s1, %s530
      %p532 = scmp.lt.s32.totalorder %s27, 1
      %s533 = scalar_select %p532, %s27, 1
      %s534 = smul.addr %s533, 48
      %s535 = smul.addr %s534, 4
      %s536 = scalar_lea.vmem %s2, %s535
      %p537 = scmp.lt.s32.totalorder %s27, 1
      %s538 = scalar_select %p537, %s27, 1
      %s539 = smul.addr %s538, 3
      %s540 = scalar_lea.vmem %s3, %s539
      %p541 = scmp.lt.s32.totalorder %s27, 1
      %s542 = scalar_select %p541, %s27, 1
      %s543 = smul.addr %s542, 16
      %s544 = smul.addr %s543, 4
      %s545 = scalar_lea.vmem %s4, %s544
      %p546 = scmp.lt.s32.totalorder %s27, 1
      %s547 = scalar_select %p546, %s27, 1
      %s548 = scalar_lea.vmem %s5, %s547
      %p549 = scmp.lt.s32.totalorder %s27, 1
      %s550 = scalar_select %p549, %s27, 1
      %s551 = smul.addr %s550, 2
      %s552 = scalar_lea.vmem %s6, %s551
      %p553 = scmp.lt.s32.totalorder %s27, 1
      %s554 = scalar_select %p553, %s27, 1
      %s555 = smul.addr %s554, 64
      %s556 = smul.addr %s555, 4
      %s557 = scalar_lea.vmem %s7, %s556
      %p558 = scmp.lt.s32.totalorder %s27, 1
      %s559 = scalar_select %p558, %s27, 1
      %s560 = smul.addr %s559, 4
      %s561 = scalar_lea.vmem %s8, %s560
      %p562 = scmp.lt.s32.totalorder %s27, 1
      %s563 = scalar_select %p562, %s27, 1
      %s564 = smul.addr %s563, 64
      %s565 = smul.addr %s564, 4
      %s566 = scalar_lea.vmem %s9, %s565
      %p567 = scmp.lt.s32.totalorder %s27, 1
      %s568 = scalar_select %p567, %s27, 1
      %s569 = scalar_lea.vmem %s10, %s568
      %p570 = scmp.lt.s32.totalorder %s26, 1
      %s571 = scalar_select %p570, %s26, 1
      %s572 = smul.addr %s571, 3
      %s573 = smul.addr %s572, 4
      %s574 = scalar_lea.vmem %s11, %s573
      %p576 = scmp.eq.s32.totalorder %s27, 0
      // Predicated region
      $region65: #{image_encoder_forward.4} parent=63 // pred_check
        %p577 = pneg %p576
      $region66: #{image_encoder_forward.4} parent=63 // pred_check_branch
        %579 = sbr.rel (%p577) target = $region68
      $region67: #{image_encoder_forward.4} parent=63 // pred_region
        %v580 = vld [vmem:[%s527] sm:$0xf]
        %v581 = vld [vmem:[%s527 + $0x4] sm:$0xf]
        %v582 = vld [vmem:[%s527 + $0x8] sm:$0x1]
        %v583 = vunpack.c.l.bf16 %v580
        %v584 = vunpack.c.l.bf16 %v581
        %v585 = vunpack.c.l.bf16 %v582
        %586 = vst [vmem:[#allocation2] sm:$0xff] %v583
        %587 = vst [vmem:[#allocation2 + $0x8] sm:$0xff] %v584
        %588 = vst [vmem:[#allocation2 + $0x10] sm:$0x1] %v585
      $region68: #{image_encoder_forward.4} parent=63 // pred_fallthru
        _
      %v589 = vld [vmem:[#allocation2] sm:$0xff]
      %v590 = vld [vmem:[#allocation2 + $0x8] sm:$0xff]
      %v591 = vld [vmem:[#allocation2 + $0x10] sm:$0x1]
      %v592 = vld [vmem:[%s531] sm:$0x1]
      %v593 = vld [vmem:[%s531 + $0x1] sm:$0x1]
      %594 = vadd.xlane.f32.xlu0 %v589
      %v595 = vpop.xlane.xlu0 %594
      %596 = vadd.xlane.f32.xlu0 %v590
      %v597 = vpop.xlane.xlu0 %596
      %vm598 = vcmask 1040384
      %v599 = vsel %vm598, %v591, 0.0
      %600 = vadd.xlane.f32.xlu0 %v599
      %v601 = vpop.xlane.xlu0 %600
      %v602 = vrcp.pop 128.0
      %v603 = vmul.f32 128.0, %v602
      %v604 = vsub.f32 1.0, %v603
      %v605 = vmul.f32 %v602, %v604
      %v606 = vadd.f32 %v602, %v605
      %vm607 = vweird.f32 %v602
      %v608 = vsel %vm607, %v602, %v606
      %v609 = vmul.f32 %v595, %v608
      %v610 = vmul.f32 %v597, %v608
      %v611 = vmul.f32 %v601, %v608
      %v612 = vsub.f32 %v589, %v609
      %v613 = vsub.f32 %v590, %v610
      %v614 = vsub.f32 %v591, %v611
      %v615 = vmul.f32 %v612, %v612
      %v616 = vmul.f32 %v613, %v613
      %v617 = vmul.f32 %v614, %v614
      %618 = vadd.xlane.f32.xlu0 %v615
      %v619 = vpop.xlane.xlu0 %618
      %620 = vadd.xlane.f32.xlu0 %v616
      %v621 = vpop.xlane.xlu0 %620
      %v622 = vsel %vm598, %v617, 0.0
      %623 = vadd.xlane.f32.xlu0 %v622
      %v624 = vpop.xlane.xlu0 %623
      %v625 = vmul.f32 %v619, %v608
      %v626 = vmul.f32 %v621, %v608
      %v627 = vmul.f32 %v624, %v608
      %v628 = vadd.f32 %v625, 1e-06
      %v629 = vadd.f32 %v626, 1e-06
      %v630 = vadd.f32 %v627, 1e-06
      %v631 = vrsqrt.pop %v628
      %v632 = vmul.f32 %v631, %v628
      %v633 = vmul.f32 %v632, %v631
      %v634 = vmul.f32 0.5, %v633
      %v635 = vsub.f32 1.5, %v634
      %v636 = vmul.f32 %v631, %v635
      %vm637 = vweird.f32 %v628
      %vm638 = vweird.f32 %v631
      %vm639 = vmor %vm637, %vm638
      %v640 = vsel %vm639, %v631, %v636
      %v641 = vrsqrt.pop %v629
      %v642 = vmul.f32 %v641, %v629
      %v643 = vmul.f32 %v642, %v641
      %v644 = vmul.f32 0.5, %v643
      %v645 = vsub.f32 1.5, %v644
      %v646 = vmul.f32 %v641, %v645
      %vm647 = vweird.f32 %v629
      %vm648 = vweird.f32 %v641
      %vm649 = vmor %vm647, %vm648
      %v650 = vsel %vm649, %v641, %v646
      %v651 = vrsqrt.pop %v630
      %v652 = vmul.f32 %v651, %v630
      %v653 = vmul.f32 %v652, %v651
      %v654 = vmul.f32 0.5, %v653
      %v655 = vsub.f32 1.5, %v654
      %v656 = vmul.f32 %v651, %v655
      %vm657 = vweird.f32 %v630
      %vm658 = vweird.f32 %v651
      %vm659 = vmor %vm657, %vm658
      %v660 = vsel %vm659, %v651, %v656
      %v661 = vmul.f32 %v612, %v640
      %v662 = vmul.f32 %v613, %v650
      %v663 = vmul.f32 %v614, %v660
      %v664 = vperm.slane %v592, 0
      %v665 = vmul.f32 %v661, %v664
      %v666 = vmul.f32 %v662, %v664
      %v667 = vmul.f32 %v663, %v664
      %v668 = vperm.slane %v593, 0
      %v669 = vadd.f32 %v665, %v668
      %v670 = vadd.f32 %v666, %v668
      %v671 = vadd.f32 %v667, %v668
      %v672 = vpack.c.bf16 %v670, %v669
      %v673 = vpack.c.bf16 %v671, %v671
      %v674 = vld [vmem:[%s536] sm:$0xff]
      %v675 = vld [vmem:[%s536 + $0x8] sm:$0xf]
      %v676 = vld [vmem:[%s536 + $0xc] sm:$0xff]
      %v677 = vld [vmem:[%s536 + $0x14] sm:$0xf]
      %v678 = vld [vmem:[%s536 + $0x18] sm:$0xff]
      %v679 = vld [vmem:[%s536 + $0x20] sm:$0xf]
      %v680 = vld [vmem:[%s536 + $0x24] sm:$0xff]
      %v681 = vld [vmem:[%s536 + $0x2c] sm:$0xf]
      %v682 = vld [vmem:[%s536 + $0x30] sm:$0xff]
      %v683 = vld [vmem:[%s536 + $0x38] sm:$0xf]
      %v684 = vld [vmem:[%s536 + $0x3c] sm:$0xff]
      %v685 = vld [vmem:[%s536 + $0x44] sm:$0xf]
      %v686 = vld [vmem:[%s536 + $0x48] sm:$0xff]
      %v687 = vld [vmem:[%s536 + $0x50] sm:$0xf]
      %v688 = vld [vmem:[%s536 + $0x54] sm:$0xff]
      %v689 = vld [vmem:[%s536 + $0x5c] sm:$0xf]
      %v690 = vld [vmem:[%s536 + $0x60] sm:$0xff]
      %v691 = vld [vmem:[%s536 + $0x68] sm:$0xf]
      %v692 = vld [vmem:[%s536 + $0x6c] sm:$0xff]
      %v693 = vld [vmem:[%s536 + $0x74] sm:$0xf]
      %v694 = vld [vmem:[%s536 + $0x78] sm:$0xff]
      %v695 = vld [vmem:[%s536 + $0x80] sm:$0xf]
      %v696 = vld [vmem:[%s536 + $0x84] sm:$0xff]
      %v697 = vld [vmem:[%s536 + $0x8c] sm:$0xf]
      %v698 = vld [vmem:[%s536 + $0x90] sm:$0xff]
      %v699 = vld [vmem:[%s536 + $0x98] sm:$0xf]
      %v700 = vld [vmem:[%s536 + $0x9c] sm:$0xff]
      %v701 = vld [vmem:[%s536 + $0xa4] sm:$0xf]
      %v702 = vld [vmem:[%s536 + $0xa8] sm:$0xff]
      %v703 = vld [vmem:[%s536 + $0xb0] sm:$0xf]
      %v704 = vld [vmem:[%s536 + $0xb4] sm:$0xff]
      %v705 = vld [vmem:[%s536 + $0xbc] sm:$0xf]
      %v706 = vld [vmem:[%s540] sm:$0x7]
      %v708 = vperm.slane %v706, 0
      %v709 = vperm.slane %v706, 1
      %v710 = vperm.slane %v706, 2
      %v746 = vunpack.c.l.b16 %v674
      %v747 = vunpack.c.h.b16 %v674
      %v748 = vunpack.c.l.b16 %v675
      %v749 = vunpack.c.l.b16 %v676
      %v750 = vunpack.c.h.b16 %v676
      %v751 = vunpack.c.l.b16 %v677
      %v752 = vunpack.c.l.b16 %v678
      %v753 = vunpack.c.h.b16 %v678
      %v754 = vunpack.c.l.b16 %v679
      %v755 = vunpack.c.l.b16 %v680
      %v756 = vunpack.c.h.b16 %v680
      %v757 = vunpack.c.l.b16 %v681
      %v758 = vunpack.c.l.b16 %v682
      %v759 = vunpack.c.h.b16 %v682
      %v760 = vunpack.c.l.b16 %v683
      %v761 = vunpack.c.l.b16 %v684
      %v762 = vunpack.c.h.b16 %v684
      %v763 = vunpack.c.l.b16 %v685
      %v764 = vunpack.c.l.b16 %v686
      %v765 = vunpack.c.h.b16 %v686
      %v766 = vunpack.c.l.b16 %v687
      %v767 = vunpack.c.l.b16 %v688
      %v768 = vunpack.c.h.b16 %v688
      %v769 = vunpack.c.l.b16 %v689
      %v770 = vunpack.c.l.b16 %v690
      %v771 = vunpack.c.h.b16 %v690
      %v772 = vunpack.c.l.b16 %v691
      %v773 = vunpack.c.l.b16 %v692
      %v774 = vunpack.c.h.b16 %v692
      %v775 = vunpack.c.l.b16 %v693
      %v776 = vunpack.c.l.b16 %v694
      %v777 = vunpack.c.h.b16 %v694
      %v778 = vunpack.c.l.b16 %v695
      %v779 = vunpack.c.l.b16 %v696
      %v780 = vunpack.c.h.b16 %v696
      %v781 = vunpack.c.l.b16 %v697
      %v782 = vunpack.c.l.b16 %v698
      %v783 = vunpack.c.h.b16 %v698
      %v784 = vunpack.c.l.b16 %v699
      %v785 = vunpack.c.l.b16 %v700
      %v786 = vunpack.c.h.b16 %v700
      %v787 = vunpack.c.l.b16 %v701
      %v788 = vunpack.c.l.b16 %v702
      %v789 = vunpack.c.h.b16 %v702
      %v790 = vunpack.c.l.b16 %v703
      %v791 = vunpack.c.l.b16 %v704
      %v792 = vunpack.c.h.b16 %v704
      %v793 = vunpack.c.l.b16 %v705
      %v794 = vpack.c.b16 %v749, %v746
      %v795 = vpack.c.b16 %v750, %v747
      %v796 = vpack.c.b16 %v751, %v748
      %v797 = vpack.c.b16 %v755, %v752
      %v798 = vpack.c.b16 %v756, %v753
      %v799 = vpack.c.b16 %v757, %v754
      %v800 = vpack.c.b16 %v761, %v758
      %v801 = vpack.c.b16 %v762, %v759
      %v802 = vpack.c.b16 %v763, %v760
      %v803 = vpack.c.b16 %v767, %v764
      %v804 = vpack.c.b16 %v768, %v765
      %v805 = vpack.c.b16 %v769, %v766
      %v806 = vpack.c.b16 %v773, %v770
      %v807 = vpack.c.b16 %v774, %v771
      %v808 = vpack.c.b16 %v775, %v772
      %v809 = vpack.c.b16 %v779, %v776
      %v810 = vpack.c.b16 %v780, %v777
      %v811 = vpack.c.b16 %v781, %v778
      %v812 = vpack.c.b16 %v785, %v782
      %v813 = vpack.c.b16 %v786, %v783
      %v814 = vpack.c.b16 %v787, %v784
      %v815 = vpack.c.b16 %v791, %v788
      %v816 = vpack.c.b16 %v792, %v789
      %v817 = vpack.c.b16 %v793, %v790
      %842 = vmatpush.bf16.msra.mxu0 %v815
      %843 = vmatpush.bf16.msra.mxu0 %v812
      %844 = vmatpush.bf16.msra.mxu0 %v809
      %845 = vmatpush.bf16.msra.mxu0 %v806
      %846 = vmatpush.bf16.msra.mxu0 %v803
      %847 = vmatpush.bf16.msra.mxu0 %v800
      %848 = vmatpush.bf16.msra.mxu0 %v797
      %849 = vmatpush.bf16.msra.mxu0 %v794
      %850 = vmatmul.bf16.gmra.mxu0 %v672
      %v851 = vpop.f32.mrf.mxu0
      %v852 = vadd.f32 %v708, %v851
      %v853 = vpop.f32.mrf.mxu0
      %v854 = vadd.f32 %v708, %v853
      %855 = vmatmul.bf16.gmra.mxu0 %v673
      %v856 = vpop.f32.mrf.mxu0
      %v857 = vadd.f32 %v708, %v856
      %v858 = vpop.f32.mrf.mxu0
      %859 = vdwg.mxu0
      %860 = vmatpush.bf16.msra.mxu0 %v816
      %861 = vmatpush.bf16.msra.mxu0 %v813
      %862 = vmatpush.bf16.msra.mxu0 %v810
      %863 = vmatpush.bf16.msra.mxu0 %v807
      %864 = vmatpush.bf16.msra.mxu0 %v804
      %865 = vmatpush.bf16.msra.mxu0 %v801
      %866 = vmatpush.bf16.msra.mxu0 %v798
      %867 = vmatpush.bf16.msra.mxu0 %v795
      %868 = vmatmul.bf16.gmra.mxu0 %v672
      %v869 = vpop.f32.mrf.mxu0
      %v870 = vadd.f32 %v709, %v869
      %v871 = vpop.f32.mrf.mxu0
      %v872 = vadd.f32 %v709, %v871
      %873 = vmatmul.bf16.gmra.mxu0 %v673
      %v874 = vpop.f32.mrf.mxu0
      %v875 = vadd.f32 %v709, %v874
      %v876 = vpop.f32.mrf.mxu0
      %877 = vdwg.mxu0
      %878 = vmatpush.bf16.msra.mxu0 %v817
      %879 = vmatpush.bf16.msra.mxu0 %v814
      %880 = vmatpush.bf16.msra.mxu0 %v811
      %881 = vmatpush.bf16.msra.mxu0 %v808
      %882 = vmatpush.bf16.msra.mxu0 %v805
      %883 = vmatpush.bf16.msra.mxu0 %v802
      %884 = vmatpush.bf16.msra.mxu0 %v799
      %885 = vmatpush.bf16.msra.mxu0 %v796
      %886 = vmatmul.bf16.gmra.mxu0 %v672
      %v887 = vpop.f32.mrf.mxu0
      %v888 = vadd.f32 %v710, %v887
      %v889 = vpop.f32.mrf.mxu0
      %v890 = vadd.f32 %v710, %v889
      %891 = vmatmul.bf16.gmra.mxu0 %v673
      %v892 = vpop.f32.mrf.mxu0
      %v893 = vadd.f32 %v710, %v892
      %v894 = vpop.f32.mrf.mxu0
      %895 = vdwg.mxu0
      %v896 = vpack.c.bf16 %v852, %v852
      %v897 = vpack.c.bf16 %v854, %v854
      %v898 = vpack.c.bf16 %v857, %v857
      %v899 = vpack.c.bf16 %v870, %v870
      %v900 = vpack.c.bf16 %v872, %v872
      %v901 = vpack.c.bf16 %v875, %v875
      %v902 = vpack.c.bf16 %v888, %v888
      %v903 = vpack.c.bf16 %v890, %v890
      %v904 = vpack.c.bf16 %v893, %v893
      %v908 = vunpack.c.l.b16 %v896
      %v909 = vunpack.c.l.b16 %v897
      %v910 = vunpack.c.l.b16 %v898
      %v911 = vpack.c.b16 %v909, %v908
      %v912 = vpack.c.b16 %v910, %v910
      %v916 = vunpack.c.l.b16 %v899
      %v917 = vunpack.c.l.b16 %v900
      %v918 = vunpack.c.l.b16 %v901
      %v919 = vpack.c.b16 %v917, %v916
      %v920 = vpack.c.b16 %v918, %v918
      %vm921 = vcmask 261120
      %v923 = vsel %vm921, %v911, 0
      %v926 = vsel %vm921, %v912, 0
      %v929 = vsel %vm921, %v919, 0
      %v932 = vsel %vm921, %v920, 0
      %934 = vmatpush.bf16.xpose.msra.mxu0 0
      %935 = vmatpush.bf16.xpose.msra.mxu0 0
      %936 = vmatpush.bf16.xpose.msra.mxu0 0
      %937 = vmatpush.bf16.xpose.msra.mxu0 0
      %938 = vmatpush.bf16.xpose.msra.mxu0 0
      %939 = vmatpush.bf16.xpose.msra.mxu0 0
      %940 = vmatpush.bf16.xpose.msra.mxu0 %v932
      %941 = vmatpush.bf16.xpose.msra.mxu0 %v929
      %942 = vmatmul.bf16.gmra.mxu0 %v923
      %v943 = vpop.f32.mrf.mxu0
      %v944 = vadd.f32 0.0, %v943
      %v945 = vpop.f32.mrf.mxu0
      %v946 = vadd.f32 0.0, %v945
      %947 = vmatmul.bf16.gmra.mxu0 %v926
      %v948 = vpop.f32.mrf.mxu0
      %v949 = vadd.f32 0.0, %v948
      %v950 = vpop.f32.mrf.mxu0
      %951 = vdwg.mxu0
      %vm952 = vcmask 138240
      %v953 = vsel %vm952, %v944, -inf
      %954 = vmax.xlane.f32.xlu0 %v953
      %v955 = vpop.xlane.xlu0 %954
      %v956 = vsel %vm952, %v946, -inf
      %957 = vmax.xlane.f32.xlu0 %v956
      %v958 = vpop.xlane.xlu0 %957
      %vm959 = vcmask 131072
      %v960 = vsel %vm959, %v949, -inf
      %961 = vmax.xlane.f32.xlu0 %v960
      %v962 = vpop.xlane.xlu0 %961
      %v963 = vsub.f32 %v944, %v955
      %v964 = vsub.f32 %v946, %v958
      %v965 = vsub.f32 %v949, %v962
      %v966 = vmul.f32 %v963, 1.442695
      %v967 = vpow.pop %v966
      %v968 = vmul.f32 %v964, 1.442695
      %v969 = vpow.pop %v968
      %v970 = vmul.f32 %v965, 1.442695
      %v971 = vpow.pop %v970
      %v972 = vsel %vm952, %v967, 0.0
      %973 = vadd.xlane.f32.xlu0 %v972
      %v974 = vpop.xlane.xlu0 %973
      %v975 = vsel %vm952, %v969, 0.0
      %976 = vadd.xlane.f32.xlu0 %v975
      %v977 = vpop.xlane.xlu0 %976
      %v978 = vsel %vm959, %v971, 0.0
      %979 = vadd.xlane.f32.xlu0 %v978
      %v980 = vpop.xlane.xlu0 %979
      %v981 = vrcp.pop %v974
      %v982 = vrcp.pop %v977
      %v983 = vrcp.pop %v980
      %v984 = vmul.f32 %v967, %v981
      %v985 = vmul.f32 %v969, %v982
      %v986 = vmul.f32 %v971, %v983
      %v987 = vpack.c.bf16 %v985, %v984
      %v988 = vpack.c.bf16 %v986, %v986
      %v992 = vunpack.c.l.b16 %v902
      %v993 = vunpack.c.l.b16 %v903
      %v994 = vunpack.c.l.b16 %v904
      %v995 = vpack.c.b16 %v993, %v992
      %v996 = vpack.c.b16 %v994, %v994
      %v999 = vsel %vm952, %v987, 0
      %v1002 = vsel %vm952, %v988, 0
      %v1004 = vsel 0, 4294967295, 65535
      %v1005 = vsel %vm598, %v1004, 0
      %v1007 = vand.u32 %v996, %v1005
      %1009 = vmatpush.bf16.msra.mxu0 0
      %1010 = vmatpush.bf16.msra.mxu0 0
      %1011 = vmatpush.bf16.msra.mxu0 0
      %1012 = vmatpush.bf16.msra.mxu0 0
      %1013 = vmatpush.bf16.msra.mxu0 0
      %1014 = vmatpush.bf16.msra.mxu0 0
      %1015 = vmatpush.bf16.msra.mxu0 %v1007
      %1016 = vmatpush.bf16.msra.mxu0 %v995
      %1017 = vmatmul.bf16.gmra.mxu0 %v999
      %v1018 = vpop.f32.mrf.mxu0
      %v1019 = vadd.f32 0.0, %v1018
      %v1020 = vpop.f32.mrf.mxu0
      %v1021 = vadd.f32 0.0, %v1020
      %1022 = vmatmul.bf16.gmra.mxu0 %v1002
      %v1023 = vpop.f32.mrf.mxu0
      %v1024 = vadd.f32 0.0, %v1023
      %v1025 = vpop.f32.mrf.mxu0
      %1026 = vdwg.mxu0
      %1027 = vrot.lane.b32.xlu0 %v911, 96
      %v1028 = vpop.permute.xlu0 %1027
      %1029 = vrot.lane.b32.xlu0 %v912, 96
      %v1030 = vpop.permute.xlu0 %1029
      %1031 = vrot.lane.b32.xlu0 %v919, 96
      %v1032 = vpop.permute.xlu0 %1031
      %1033 = vrot.lane.b32.xlu0 %v920, 96
      %v1034 = vpop.permute.xlu0 %1033
      %v1036 = vsel %vm921, %v1028, 0
      %v1039 = vsel %vm921, %v1030, 0
      %v1042 = vsel %vm921, %v1032, 0
      %v1045 = vsel %vm921, %v1034, 0
      %1047 = vmatpush.bf16.xpose.msra.mxu0 0
      %1048 = vmatpush.bf16.xpose.msra.mxu0 0
      %1049 = vmatpush.bf16.xpose.msra.mxu0 0
      %1050 = vmatpush.bf16.xpose.msra.mxu0 0
      %1051 = vmatpush.bf16.xpose.msra.mxu0 0
      %1052 = vmatpush.bf16.xpose.msra.mxu0 0
      %1053 = vmatpush.bf16.xpose.msra.mxu0 %v1045
      %1054 = vmatpush.bf16.xpose.msra.mxu0 %v1042
      %1055 = vmatmul.bf16.gmra.mxu0 %v1036
      %v1056 = vpop.f32.mrf.mxu0
      %v1057 = vadd.f32 0.0, %v1056
      %v1058 = vpop.f32.mrf.mxu0
      %v1059 = vadd.f32 0.0, %v1058
      %1060 = vmatmul.bf16.gmra.mxu0 %v1039
      %v1061 = vpop.f32.mrf.mxu0
      %v1062 = vadd.f32 0.0, %v1061
      %v1063 = vpop.f32.mrf.mxu0
      %1064 = vdwg.mxu0
      %v1065 = vsel %vm952, %v1057, -inf
      %1066 = vmax.xlane.f32.xlu0 %v1065
      %v1067 = vpop.xlane.xlu0 %1066
      %v1068 = vsel %vm952, %v1059, -inf
      %1069 = vmax.xlane.f32.xlu0 %v1068
      %v1070 = vpop.xlane.xlu0 %1069
      %v1071 = vsel %vm959, %v1062, -inf
      %1072 = vmax.xlane.f32.xlu0 %v1071
      %v1073 = vpop.xlane.xlu0 %1072
      %v1074 = vsub.f32 %v1057, %v1067
      %v1075 = vsub.f32 %v1059, %v1070
      %v1076 = vsub.f32 %v1062, %v1073
      %v1077 = vmul.f32 %v1074, 1.442695
      %v1078 = vpow.pop %v1077
      %v1079 = vmul.f32 %v1075, 1.442695
      %v1080 = vpow.pop %v1079
      %v1081 = vmul.f32 %v1076, 1.442695
      %v1082 = vpow.pop %v1081
      %v1083 = vsel %vm952, %v1078, 0.0
      %1084 = vadd.xlane.f32.xlu0 %v1083
      %v1085 = vpop.xlane.xlu0 %1084
      %v1086 = vsel %vm952, %v1080, 0.0
      %1087 = vadd.xlane.f32.xlu0 %v1086
      %v1088 = vpop.xlane.xlu0 %1087
      %v1089 = vsel %vm959, %v1082, 0.0
      %1090 = vadd.xlane.f32.xlu0 %v1089
      %v1091 = vpop.xlane.xlu0 %1090
      %v1092 = vrcp.pop %v1085
      %v1093 = vrcp.pop %v1088
      %v1094 = vrcp.pop %v1091
      %v1095 = vmul.f32 %v1078, %v1092
      %v1096 = vmul.f32 %v1080, %v1093
      %v1097 = vmul.f32 %v1082, %v1094
      %v1098 = vpack.c.bf16 %v1096, %v1095
      %v1099 = vpack.c.bf16 %v1097, %v1097
      %1100 = vrot.lane.b32.xlu0 %v995, 96
      %v1101 = vpop.permute.xlu0 %1100
      %1102 = vrot.lane.b32.xlu0 %v996, 96
      %v1103 = vpop.permute.xlu0 %1102
      %v1106 = vsel %vm952, %v1098, 0
      %v1109 = vsel %vm952, %v1099, 0
      %v1112 = vand.u32 %v1103, %v1005
      %1114 = vmatpush.bf16.msra.mxu0 0
      %1115 = vmatpush.bf16.msra.mxu0 0
      %1116 = vmatpush.bf16.msra.mxu0 0
      %1117 = vmatpush.bf16.msra.mxu0 0
      %1118 = vmatpush.bf16.msra.mxu0 0
      %1119 = vmatpush.bf16.msra.mxu0 0
      %1120 = vmatpush.bf16.msra.mxu0 %v1112
      %1121 = vmatpush.bf16.msra.mxu0 %v1101
      %1122 = vmatmul.bf16.gmra.mxu0 %v1106
      %v1123 = vpop.f32.mrf.mxu0
      %v1124 = vadd.f32 0.0, %v1123
      %v1125 = vpop.f32.mrf.mxu0
      %v1126 = vadd.f32 0.0, %v1125
      %1127 = vmatmul.bf16.gmra.mxu0 %v1109
      %v1128 = vpop.f32.mrf.mxu0
      %v1129 = vadd.f32 0.0, %v1128
      %v1130 = vpop.f32.mrf.mxu0
      %1131 = vdwg.mxu0
      %1132 = vrot.lane.b32.xlu0 %v911, 64
      %v1133 = vpop.permute.xlu0 %1132
      %1134 = vrot.lane.b32.xlu0 %v912, 64
      %v1135 = vpop.permute.xlu0 %1134
      %1136 = vrot.lane.b32.xlu0 %v919, 64
      %v1137 = vpop.permute.xlu0 %1136
      %1138 = vrot.lane.b32.xlu0 %v920, 64
      %v1139 = vpop.permute.xlu0 %1138
      %v1141 = vsel %vm921, %v1133, 0
      %v1144 = vsel %vm921, %v1135, 0
      %v1147 = vsel %vm921, %v1137, 0
      %v1150 = vsel %vm921, %v1139, 0
      %1152 = vmatpush.bf16.xpose.msra.mxu0 0
      %1153 = vmatpush.bf16.xpose.msra.mxu0 0
      %1154 = vmatpush.bf16.xpose.msra.mxu0 0
      %1155 = vmatpush.bf16.xpose.msra.mxu0 0
      %1156 = vmatpush.bf16.xpose.msra.mxu0 0
      %1157 = vmatpush.bf16.xpose.msra.mxu0 0
      %1158 = vmatpush.bf16.xpose.msra.mxu0 %v1150
      %1159 = vmatpush.bf16.xpose.msra.mxu0 %v1147
      %1160 = vmatmul.bf16.gmra.mxu0 %v1141
      %v1161 = vpop.f32.mrf.mxu0
      %v1162 = vadd.f32 0.0, %v1161
      %v1163 = vpop.f32.mrf.mxu0
      %v1164 = vadd.f32 0.0, %v1163
      %1165 = vmatmul.bf16.gmra.mxu0 %v1144
      %v1166 = vpop.f32.mrf.mxu0
      %v1167 = vadd.f32 0.0, %v1166
      %v1168 = vpop.f32.mrf.mxu0
      %1169 = vdwg.mxu0
      %v1170 = vsel %vm952, %v1162, -inf
      %1171 = vmax.xlane.f32.xlu0 %v1170
      %v1172 = vpop.xlane.xlu0 %1171
      %v1173 = vsel %vm952, %v1164, -inf
      %1174 = vmax.xlane.f32.xlu0 %v1173
      %v1175 = vpop.xlane.xlu0 %1174
      %v1176 = vsel %vm959, %v1167, -inf
      %1177 = vmax.xlane.f32.xlu0 %v1176
      %v1178 = vpop.xlane.xlu0 %1177
      %v1179 = vsub.f32 %v1162, %v1172
      %v1180 = vsub.f32 %v1164, %v1175
      %v1181 = vsub.f32 %v1167, %v1178
      %v1182 = vmul.f32 %v1179, 1.442695
      %v1183 = vpow.pop %v1182
      %v1184 = vmul.f32 %v1180, 1.442695
      %v1185 = vpow.pop %v1184
      %v1186 = vmul.f32 %v1181, 1.442695
      %v1187 = vpow.pop %v1186
      %v1188 = vsel %vm952, %v1183, 0.0
      %1189 = vadd.xlane.f32.xlu0 %v1188
      %v1190 = vpop.xlane.xlu0 %1189
      %v1191 = vsel %vm952, %v1185, 0.0
      %1192 = vadd.xlane.f32.xlu0 %v1191
      %v1193 = vpop.xlane.xlu0 %1192
      %v1194 = vsel %vm959, %v1187, 0.0
      %1195 = vadd.xlane.f32.xlu0 %v1194
      %v1196 = vpop.xlane.xlu0 %1195
      %v1197 = vrcp.pop %v1190
      %v1198 = vrcp.pop %v1193
      %v1199 = vrcp.pop %v1196
      %v1200 = vmul.f32 %v1183, %v1197
      %v1201 = vmul.f32 %v1185, %v1198
      %v1202 = vmul.f32 %v1187, %v1199
      %v1203 = vpack.c.bf16 %v1201, %v1200
      %v1204 = vpack.c.bf16 %v1202, %v1202
      %1205 = vrot.lane.b32.xlu0 %v995, 64
      %v1206 = vpop.permute.xlu0 %1205
      %1207 = vrot.lane.b32.xlu0 %v996, 64
      %v1208 = vpop.permute.xlu0 %1207
      %v1211 = vsel %vm952, %v1203, 0
      %v1214 = vsel %vm952, %v1204, 0
      %v1217 = vand.u32 %v1208, %v1005
      %1219 = vmatpush.bf16.msra.mxu0 0
      %1220 = vmatpush.bf16.msra.mxu0 0
      %1221 = vmatpush.bf16.msra.mxu0 0
      %1222 = vmatpush.bf16.msra.mxu0 0
      %1223 = vmatpush.bf16.msra.mxu0 0
      %1224 = vmatpush.bf16.msra.mxu0 0
      %1225 = vmatpush.bf16.msra.mxu0 %v1217
      %1226 = vmatpush.bf16.msra.mxu0 %v1206
      %1227 = vmatmul.bf16.gmra.mxu0 %v1211
      %v1228 = vpop.f32.mrf.mxu0
      %v1229 = vadd.f32 0.0, %v1228
      %v1230 = vpop.f32.mrf.mxu0
      %v1231 = vadd.f32 0.0, %v1230
      %1232 = vmatmul.bf16.gmra.mxu0 %v1214
      %v1233 = vpop.f32.mrf.mxu0
      %v1234 = vadd.f32 0.0, %v1233
      %v1235 = vpop.f32.mrf.mxu0
      %1236 = vdwg.mxu0
      %1237 = vrot.lane.b32.xlu0 %v911, 32
      %v1238 = vpop.permute.xlu0 %1237
      %1239 = vrot.lane.b32.xlu0 %v912, 32
      %v1240 = vpop.permute.xlu0 %1239
      %1241 = vrot.lane.b32.xlu0 %v919, 32
      %v1242 = vpop.permute.xlu0 %1241
      %1243 = vrot.lane.b32.xlu0 %v920, 32
      %v1244 = vpop.permute.xlu0 %1243
      %v1246 = vsel %vm921, %v1238, 0
      %v1249 = vsel %vm921, %v1240, 0
      %v1252 = vsel %vm921, %v1242, 0
      %v1255 = vsel %vm921, %v1244, 0
      %1257 = vmatpush.bf16.xpose.msra.mxu0 0
      %1258 = vmatpush.bf16.xpose.msra.mxu0 0
      %1259 = vmatpush.bf16.xpose.msra.mxu0 0
      %1260 = vmatpush.bf16.xpose.msra.mxu0 0
      %1261 = vmatpush.bf16.xpose.msra.mxu0 0
      %1262 = vmatpush.bf16.xpose.msra.mxu0 0
      %1263 = vmatpush.bf16.xpose.msra.mxu0 %v1255
      %1264 = vmatpush.bf16.xpose.msra.mxu0 %v1252
      %1265 = vmatmul.bf16.gmra.mxu0 %v1246
      %v1266 = vpop.f32.mrf.mxu0
      %v1267 = vadd.f32 0.0, %v1266
      %v1268 = vpop.f32.mrf.mxu0
      %v1269 = vadd.f32 0.0, %v1268
      %1270 = vmatmul.bf16.gmra.mxu0 %v1249
      %v1271 = vpop.f32.mrf.mxu0
      %v1272 = vadd.f32 0.0, %v1271
      %v1273 = vpop.f32.mrf.mxu0
      %1274 = vdwg.mxu0
      %v1275 = vsel %vm952, %v1267, -inf
      %1276 = vmax.xlane.f32.xlu0 %v1275
      %v1277 = vpop.xlane.xlu0 %1276
      %v1278 = vsel %vm952, %v1269, -inf
      %1279 = vmax.xlane.f32.xlu0 %v1278
      %v1280 = vpop.xlane.xlu0 %1279
      %v1281 = vsel %vm959, %v1272, -inf
      %1282 = vmax.xlane.f32.xlu0 %v1281
      %v1283 = vpop.xlane.xlu0 %1282
      %v1284 = vsub.f32 %v1267, %v1277
      %v1285 = vsub.f32 %v1269, %v1280
      %v1286 = vsub.f32 %v1272, %v1283
      %v1287 = vmul.f32 %v1284, 1.442695
      %v1288 = vpow.pop %v1287
      %v1289 = vmul.f32 %v1285, 1.442695
      %v1290 = vpow.pop %v1289
      %v1291 = vmul.f32 %v1286, 1.442695
      %v1292 = vpow.pop %v1291
      %v1293 = vsel %vm952, %v1288, 0.0
      %1294 = vadd.xlane.f32.xlu0 %v1293
      %v1295 = vpop.xlane.xlu0 %1294
      %v1296 = vsel %vm952, %v1290, 0.0
      %1297 = vadd.xlane.f32.xlu0 %v1296
      %v1298 = vpop.xlane.xlu0 %1297
      %v1299 = vsel %vm959, %v1292, 0.0
      %1300 = vadd.xlane.f32.xlu0 %v1299
      %v1301 = vpop.xlane.xlu0 %1300
      %v1302 = vrcp.pop %v1295
      %v1303 = vrcp.pop %v1298
      %v1304 = vrcp.pop %v1301
      %v1305 = vmul.f32 %v1288, %v1302
      %v1306 = vmul.f32 %v1290, %v1303
      %v1307 = vmul.f32 %v1292, %v1304
      %v1308 = vpack.c.bf16 %v1306, %v1305
      %v1309 = vpack.c.bf16 %v1307, %v1307
      %1310 = vrot.lane.b32.xlu0 %v995, 32
      %v1311 = vpop.permute.xlu0 %1310
      %1312 = vrot.lane.b32.xlu0 %v996, 32
      %v1313 = vpop.permute.xlu0 %1312
      %v1316 = vsel %vm952, %v1308, 0
      %v1319 = vsel %vm952, %v1309, 0
      %v1322 = vand.u32 %v1313, %v1005
      %1324 = vmatpush.bf16.msra.mxu0 0
      %1325 = vmatpush.bf16.msra.mxu0 0
      %1326 = vmatpush.bf16.msra.mxu0 0
      %1327 = vmatpush.bf16.msra.mxu0 0
      %1328 = vmatpush.bf16.msra.mxu0 0
      %1329 = vmatpush.bf16.msra.mxu0 0
      %1330 = vmatpush.bf16.msra.mxu0 %v1322
      %1331 = vmatpush.bf16.msra.mxu0 %v1311
      %1332 = vmatmul.bf16.gmra.mxu0 %v1316
      %v1333 = vpop.f32.mrf.mxu0
      %v1334 = vadd.f32 0.0, %v1333
      %v1335 = vpop.f32.mrf.mxu0
      %v1336 = vadd.f32 0.0, %v1335
      %1337 = vmatmul.bf16.gmra.mxu0 %v1319
      %v1338 = vpop.f32.mrf.mxu0
      %v1339 = vadd.f32 0.0, %v1338
      %v1340 = vpop.f32.mrf.mxu0
      %1341 = vdwg.mxu0
      %1345 = vrot.lane.b32.xlu0 %v1124, 32
      %v1346 = vpop.permute.xlu0 %1345
      %1347 = vrot.lane.b32.xlu0 %v1126, 32
      %v1348 = vpop.permute.xlu0 %1347
      %1349 = vrot.lane.b32.xlu0 %v1129, 32
      %v1350 = vpop.permute.xlu0 %1349
      %1357 = vrot.lane.b32.xlu0 %v1229, 64
      %v1358 = vpop.permute.xlu0 %1357
      %1359 = vrot.lane.b32.xlu0 %v1231, 64
      %v1360 = vpop.permute.xlu0 %1359
      %1361 = vrot.lane.b32.xlu0 %v1234, 64
      %v1362 = vpop.permute.xlu0 %1361
      %1369 = vrot.lane.b32.xlu0 %v1334, 96
      %v1370 = vpop.permute.xlu0 %1369
      %1371 = vrot.lane.b32.xlu0 %v1336, 96
      %v1372 = vpop.permute.xlu0 %1371
      %1373 = vrot.lane.b32.xlu0 %v1339, 96
      %v1374 = vpop.permute.xlu0 %1373
      %v1378 = vsel %vm921, %v1019, %v1346
      %v1379 = vsel %vm921, %v1021, %v1348
      %v1380 = vsel %vm921, %v1024, %v1350
      %vm1381 = vcmask 523264
      %v1382 = vsel %vm1381, %v1378, %v1358
      %v1383 = vsel %vm1381, %v1379, %v1360
      %v1384 = vsel %vm1381, %v1380, %v1362
      %vm1385 = vcmask 785408
      %v1386 = vsel %vm1385, %v1382, %v1370
      %v1387 = vsel %vm1385, %v1383, %v1372
      %v1388 = vsel %vm1385, %v1384, %v1374
      %v1389 = vpack.c.bf16 %v1387, %v1386
      %v1390 = vpack.c.bf16 %v1388, %v1388
      %v1391 = vld [vmem:[%s545] sm:$0xf]
      %v1392 = vld [vmem:[%s545 + $0x4] sm:$0xf]
      %v1393 = vld [vmem:[%s545 + $0x8] sm:$0xf]
      %v1394 = vld [vmem:[%s545 + $0xc] sm:$0xf]
      %v1395 = vld [vmem:[%s545 + $0x10] sm:$0xf]
      %v1396 = vld [vmem:[%s545 + $0x14] sm:$0xf]
      %v1397 = vld [vmem:[%s545 + $0x18] sm:$0xf]
      %v1398 = vld [vmem:[%s545 + $0x1c] sm:$0xf]
      %v1399 = vld [vmem:[%s545 + $0x20] sm:$0xf]
      %v1400 = vld [vmem:[%s545 + $0x24] sm:$0xf]
      %v1401 = vld [vmem:[%s545 + $0x28] sm:$0xf]
      %v1402 = vld [vmem:[%s545 + $0x2c] sm:$0xf]
      %v1403 = vld [vmem:[%s545 + $0x30] sm:$0xf]
      %v1404 = vld [vmem:[%s545 + $0x34] sm:$0xf]
      %v1405 = vld [vmem:[%s545 + $0x38] sm:$0xf]
      %v1406 = vld [vmem:[%s545 + $0x3c] sm:$0xf]
      %v1423 = vunpack.c.l.b16 %v1391
      %v1424 = vunpack.c.l.b16 %v1392
      %v1425 = vunpack.c.l.b16 %v1393
      %v1426 = vunpack.c.l.b16 %v1394
      %v1427 = vunpack.c.l.b16 %v1395
      %v1428 = vunpack.c.l.b16 %v1396
      %v1429 = vunpack.c.l.b16 %v1397
      %v1430 = vunpack.c.l.b16 %v1398
      %v1431 = vunpack.c.l.b16 %v1399
      %v1432 = vunpack.c.l.b16 %v1400
      %v1433 = vunpack.c.l.b16 %v1401
      %v1434 = vunpack.c.l.b16 %v1402
      %v1435 = vunpack.c.l.b16 %v1403
      %v1436 = vunpack.c.l.b16 %v1404
      %v1437 = vunpack.c.l.b16 %v1405
      %v1438 = vunpack.c.l.b16 %v1406
      %v1439 = vpack.c.b16 %v1424, %v1423
      %v1440 = vpack.c.b16 %v1426, %v1425
      %v1441 = vpack.c.b16 %v1428, %v1427
      %v1442 = vpack.c.b16 %v1430, %v1429
      %v1443 = vpack.c.b16 %v1432, %v1431
      %v1444 = vpack.c.b16 %v1434, %v1433
      %v1445 = vpack.c.b16 %v1436, %v1435
      %v1446 = vpack.c.b16 %v1438, %v1437
      %1455 = vmatpush.bf16.msra.mxu0 %v1446
      %1456 = vmatpush.bf16.msra.mxu0 %v1445
      %1457 = vmatpush.bf16.msra.mxu0 %v1444
      %1458 = vmatpush.bf16.msra.mxu0 %v1443
      %1459 = vmatpush.bf16.msra.mxu0 %v1442
      %1460 = vmatpush.bf16.msra.mxu0 %v1441
      %1461 = vmatpush.bf16.msra.mxu0 %v1440
      %1462 = vmatpush.bf16.msra.mxu0 %v1439
      %1463 = vmatmul.bf16.gmra.mxu0 %v1389
      %v1464 = vpop.f32.mrf.mxu0
      %v1465 = vadd.f32 0.0, %v1464
      %v1466 = vpop.f32.mrf.mxu0
      %v1467 = vadd.f32 0.0, %v1466
      %1468 = vmatmul.bf16.gmra.mxu0 %v1390
      %v1469 = vpop.f32.mrf.mxu0
      %v1470 = vadd.f32 0.0, %v1469
      %v1471 = vpop.f32.mrf.mxu0
      %1472 = vdwg.mxu0
      %v1473 = vadd.f32 %v589, %v1465
      %v1474 = vadd.f32 %v590, %v1467
      %v1475 = vadd.f32 %v591, %v1470
      %v1476 = vld [vmem:[%s548] sm:$0x1]
      %v1478 = vperm.slane %v1476, 0
      %v1480 = vadd.f32 %v1473, %v1478
      %v1481 = vadd.f32 %v1474, %v1478
      %v1482 = vadd.f32 %v1475, %v1478
      %v1483 = vld [vmem:[%s552] sm:$0x1]
      %v1484 = vld [vmem:[%s552 + $0x1] sm:$0x1]
      %1485 = vadd.xlane.f32.xlu0 %v1480
      %v1486 = vpop.xlane.xlu0 %1485
      %1487 = vadd.xlane.f32.xlu0 %v1481
      %v1488 = vpop.xlane.xlu0 %1487
      %v1489 = vsel %vm598, %v1482, 0.0
      %1490 = vadd.xlane.f32.xlu0 %v1489
      %v1491 = vpop.xlane.xlu0 %1490
      %v1492 = vmul.f32 %v1486, %v608
      %v1493 = vmul.f32 %v1488, %v608
      %v1494 = vmul.f32 %v1491, %v608
      %v1495 = vsub.f32 %v1480, %v1492
      %v1496 = vsub.f32 %v1481, %v1493
      %v1497 = vsub.f32 %v1482, %v1494
      %v1498 = vmul.f32 %v1495, %v1495
      %v1499 = vmul.f32 %v1496, %v1496
      %v1500 = vmul.f32 %v1497, %v1497
      %1501 = vadd.xlane.f32.xlu0 %v1498
      %v1502 = vpop.xlane.xlu0 %1501
      %1503 = vadd.xlane.f32.xlu0 %v1499
      %v1504 = vpop.xlane.xlu0 %1503
      %v1505 = vsel %vm598, %v1500, 0.0
      %1506 = vadd.xlane.f32.xlu0 %v1505
      %v1507 = vpop.xlane.xlu0 %1506
      %v1508 = vmul.f32 %v1502, %v608
      %v1509 = vmul.f32 %v1504, %v608
      %v1510 = vmul.f32 %v1507, %v608
      %v1511 = vadd.f32 %v1508, 1e-06
      %v1512 = vadd.f32 %v1509, 1e-06
      %v1513 = vadd.f32 %v1510, 1e-06
      %v1514 = vrsqrt.pop %v1511
      %v1515 = vmul.f32 %v1514, %v1511
      %v1516 = vmul.f32 %v1515, %v1514
      %v1517 = vmul.f32 0.5, %v1516
      %v1518 = vsub.f32 1.5, %v1517
      %v1519 = vmul.f32 %v1514, %v1518
      %vm1520 = vweird.f32 %v1511
      %vm1521 = vweird.f32 %v1514
      %vm1522 = vmor %vm1520, %vm1521
      %v1523 = vsel %vm1522, %v1514, %v1519
      %v1524 = vrsqrt.pop %v1512
      %v1525 = vmul.f32 %v1524, %v1512
      %v1526 = vmul.f32 %v1525, %v1524
      %v1527 = vmul.f32 0.5, %v1526
      %v1528 = vsub.f32 1.5, %v1527
      %v1529 = vmul.f32 %v1524, %v1528
      %vm1530 = vweird.f32 %v1512
      %vm1531 = vweird.f32 %v1524
      %vm1532 = vmor %vm1530, %vm1531
      %v1533 = vsel %vm1532, %v1524, %v1529
      %v1534 = vrsqrt.pop %v1513
      %v1535 = vmul.f32 %v1534, %v1513
      %v1536 = vmul.f32 %v1535, %v1534
      %v1537 = vmul.f32 0.5, %v1536
      %v1538 = vsub.f32 1.5, %v1537
      %v1539 = vmul.f32 %v1534, %v1538
      %vm1540 = vweird.f32 %v1513
      %vm1541 = vweird.f32 %v1534
      %vm1542 = vmor %vm1540, %vm1541
      %v1543 = vsel %vm1542, %v1534, %v1539
      %v1544 = vmul.f32 %v1495, %v1523
      %v1545 = vmul.f32 %v1496, %v1533
      %v1546 = vmul.f32 %v1497, %v1543
      %v1547 = vperm.slane %v1483, 0
      %v1548 = vmul.f32 %v1544, %v1547
      %v1549 = vmul.f32 %v1545, %v1547
      %v1550 = vmul.f32 %v1546, %v1547
      %v1551 = vperm.slane %v1484, 0
      %v1552 = vadd.f32 %v1548, %v1551
      %v1553 = vadd.f32 %v1549, %v1551
      %v1554 = vadd.f32 %v1550, %v1551
      %v1555 = vpack.c.bf16 %v1553, %v1552
      %v1556 = vpack.c.bf16 %v1554, %v1554
      %v1557 = vld [vmem:[%s557] sm:$0xff]
      %v1558 = vld [vmem:[%s557 + $0x8] sm:$0xff]
      %v1559 = vld [vmem:[%s557 + $0x10] sm:$0xff]
      %v1560 = vld [vmem:[%s557 + $0x18] sm:$0xff]
      %v1561 = vld [vmem:[%s557 + $0x20] sm:$0xff]
      %v1562 = vld [vmem:[%s557 + $0x28] sm:$0xff]
      %v1563 = vld [vmem:[%s557 + $0x30] sm:$0xff]
      %v1564 = vld [vmem:[%s557 + $0x38] sm:$0xff]
      %v1565 = vld [vmem:[%s557 + $0x40] sm:$0xff]
      %v1566 = vld [vmem:[%s557 + $0x48] sm:$0xff]
      %v1567 = vld [vmem:[%s557 + $0x50] sm:$0xff]
      %v1568 = vld [vmem:[%s557 + $0x58] sm:$0xff]
      %v1569 = vld [vmem:[%s557 + $0x60] sm:$0xff]
      %v1570 = vld [vmem:[%s557 + $0x68] sm:$0xff]
      %v1571 = vld [vmem:[%s557 + $0x70] sm:$0xff]
      %v1572 = vld [vmem:[%s557 + $0x78] sm:$0xff]
      %v1573 = vld [vmem:[%s557 + $0x80] sm:$0xff]
      %v1574 = vld [vmem:[%s557 + $0x88] sm:$0xff]
      %v1575 = vld [vmem:[%s557 + $0x90] sm:$0xff]
      %v1576 = vld [vmem:[%s557 + $0x98] sm:$0xff]
      %v1577 = vld [vmem:[%s557 + $0xa0] sm:$0xff]
      %v1578 = vld [vmem:[%s557 + $0xa8] sm:$0xff]
      %v1579 = vld [vmem:[%s557 + $0xb0] sm:$0xff]
      %v1580 = vld [vmem:[%s557 + $0xb8] sm:$0xff]
      %v1581 = vld [vmem:[%s557 + $0xc0] sm:$0xff]
      %v1582 = vld [vmem:[%s557 + $0xc8] sm:$0xff]
      %v1583 = vld [vmem:[%s557 + $0xd0] sm:$0xff]
      %v1584 = vld [vmem:[%s557 + $0xd8] sm:$0xff]
      %v1585 = vld [vmem:[%s557 + $0xe0] sm:$0xff]
      %v1586 = vld [vmem:[%s557 + $0xe8] sm:$0xff]
      %v1587 = vld [vmem:[%s557 + $0xf0] sm:$0xff]
      %v1588 = vld [vmem:[%s557 + $0xf8] sm:$0xff]
      %v1589 = vld [vmem:[%s561] sm:$0xf]
      %v1591 = vperm.slane %v1589, 0
      %v1592 = vperm.slane %v1589, 1
      %v1593 = vperm.slane %v1589, 2
      %v1594 = vperm.slane %v1589, 3
      %v1631 = vunpack.c.l.b16 %v1557
      %v1632 = vunpack.c.h.b16 %v1557
      %v1633 = vunpack.c.l.b16 %v1558
      %v1634 = vunpack.c.h.b16 %v1558
      %v1635 = vunpack.c.l.b16 %v1559
      %v1636 = vunpack.c.h.b16 %v1559
      %v1637 = vunpack.c.l.b16 %v1560
      %v1638 = vunpack.c.h.b16 %v1560
      %v1639 = vunpack.c.l.b16 %v1561
      %v1640 = vunpack.c.h.b16 %v1561
      %v1641 = vunpack.c.l.b16 %v1562
      %v1642 = vunpack.c.h.b16 %v1562
      %v1643 = vunpack.c.l.b16 %v1563
      %v1644 = vunpack.c.h.b16 %v1563
      %v1645 = vunpack.c.l.b16 %v1564
      %v1646 = vunpack.c.h.b16 %v1564
      %v1647 = vunpack.c.l.b16 %v1565
      %v1648 = vunpack.c.h.b16 %v1565
      %v1649 = vunpack.c.l.b16 %v1566
      %v1650 = vunpack.c.h.b16 %v1566
      %v1651 = vunpack.c.l.b16 %v1567
      %v1652 = vunpack.c.h.b16 %v1567
      %v1653 = vunpack.c.l.b16 %v1568
      %v1654 = vunpack.c.h.b16 %v1568
      %v1655 = vunpack.c.l.b16 %v1569
      %v1656 = vunpack.c.h.b16 %v1569
      %v1657 = vunpack.c.l.b16 %v1570
      %v1658 = vunpack.c.h.b16 %v1570
      %v1659 = vunpack.c.l.b16 %v1571
      %v1660 = vunpack.c.h.b16 %v1571
      %v1661 = vunpack.c.l.b16 %v1572
      %v1662 = vunpack.c.h.b16 %v1572
      %v1663 = vunpack.c.l.b16 %v1573
      %v1664 = vunpack.c.h.b16 %v1573
      %v1665 = vunpack.c.l.b16 %v1574
      %v1666 = vunpack.c.h.b16 %v1574
      %v1667 = vunpack.c.l.b16 %v1575
      %v1668 = vunpack.c.h.b16 %v1575
      %v1669 = vunpack.c.l.b16 %v1576
      %v1670 = vunpack.c.h.b16 %v1576
      %v1671 = vunpack.c.l.b16 %v1577
      %v1672 = vunpack.c.h.b16 %v1577
      %v1673 = vunpack.c.l.b16 %v1578
      %v1674 = vunpack.c.h.b16 %v1578
      %v1675 = vunpack.c.l.b16 %v1579
      %v1676 = vunpack.c.h.b16 %v1579
      %v1677 = vunpack.c.l.b16 %v1580
      %v1678 = vunpack.c.h.b16 %v1580
      %v1679 = vunpack.c.l.b16 %v1581
      %v1680 = vunpack.c.h.b16 %v1581
      %v1681 = vunpack.c.l.b16 %v1582
      %v1682 = vunpack.c.h.b16 %v1582
      %v1683 = vunpack.c.l.b16 %v1583
      %v1684 = vunpack.c.h.b16 %v1583
      %v1685 = vunpack.c.l.b16 %v1584
      %v1686 = vunpack.c.h.b16 %v1584
      %v1687 = vunpack.c.l.b16 %v1585
      %v1688 = vunpack.c.h.b16 %v1585
      %v1689 = vunpack.c.l.b16 %v1586
      %v1690 = vunpack.c.h.b16 %v1586
      %v1691 = vunpack.c.l.b16 %v1587
      %v1692 = vunpack.c.h.b16 %v1587
      %v1693 = vunpack.c.l.b16 %v1588
      %v1694 = vunpack.c.h.b16 %v1588
      %v1695 = vpack.c.b16 %v1635, %v1631
      %v1696 = vpack.c.b16 %v1636, %v1632
      %v1697 = vpack.c.b16 %v1637, %v1633
      %v1698 = vpack.c.b16 %v1638, %v1634
      %v1699 = vpack.c.b16 %v1643, %v1639
      %v1700 = vpack.c.b16 %v1644, %v1640
      %v1701 = vpack.c.b16 %v1645, %v1641
      %v1702 = vpack.c.b16 %v1646, %v1642
      %v1703 = vpack.c.b16 %v1651, %v1647
      %v1704 = vpack.c.b16 %v1652, %v1648
      %v1705 = vpack.c.b16 %v1653, %v1649
      %v1706 = vpack.c.b16 %v1654, %v1650
      %v1707 = vpack.c.b16 %v1659, %v1655
      %v1708 = vpack.c.b16 %v1660, %v1656
      %v1709 = vpack.c.b16 %v1661, %v1657
      %v1710 = vpack.c.b16 %v1662, %v1658
      %v1711 = vpack.c.b16 %v1667, %v1663
      %v1712 = vpack.c.b16 %v1668, %v1664
      %v1713 = vpack.c.b16 %v1669, %v1665
      %v1714 = vpack.c.b16 %v1670, %v1666
      %v1715 = vpack.c.b16 %v1675, %v1671
      %v1716 = vpack.c.b16 %v1676, %v1672
      %v1717 = vpack.c.b16 %v1677, %v1673
      %v1718 = vpack.c.b16 %v1678, %v1674
      %v1719 = vpack.c.b16 %v1683, %v1679
      %v1720 = vpack.c.b16 %v1684, %v1680
      %v1721 = vpack.c.b16 %v1685, %v1681
      %v1722 = vpack.c.b16 %v1686, %v1682
      %v1723 = vpack.c.b16 %v1691, %v1687
      %v1724 = vpack.c.b16 %v1692, %v1688
      %v1725 = vpack.c.b16 %v1693, %v1689
      %v1726 = vpack.c.b16 %v1694, %v1690
      %1759 = vmatpush.bf16.msra.mxu0 %v1723
      %1760 = vmatpush.bf16.msra.mxu0 %v1719
      %1761 = vmatpush.bf16.msra.mxu0 %v1715
      %1762 = vmatpush.bf16.msra.mxu0 %v1711
      %1763 = vmatpush.bf16.msra.mxu0 %v1707
      %1764 = vmatpush.bf16.msra.mxu0 %v1703
      %1765 = vmatpush.bf16.msra.mxu0 %v1699
      %1766 = vmatpush.bf16.msra.mxu0 %v1695
      %1767 = vmatmul.bf16.gmra.mxu0 %v1555
      %v1768 = vpop.f32.mrf.mxu0
      %v1769 = vadd.f32 %v1591, %v1768
      %v1770 = vpop.f32.mrf.mxu0
      %v1771 = vadd.f32 %v1591, %v1770
      %1772 = vmatmul.bf16.gmra.mxu0 %v1556
      %v1773 = vpop.f32.mrf.mxu0
      %v1774 = vadd.f32 %v1591, %v1773
      %v1775 = vpop.f32.mrf.mxu0
      %1776 = vdwg.mxu0
      %1777 = vmatpush.bf16.msra.mxu0 %v1724
      %1778 = vmatpush.bf16.msra.mxu0 %v1720
      %1779 = vmatpush.bf16.msra.mxu0 %v1716
      %1780 = vmatpush.bf16.msra.mxu0 %v1712
      %1781 = vmatpush.bf16.msra.mxu0 %v1708
      %1782 = vmatpush.bf16.msra.mxu0 %v1704
      %1783 = vmatpush.bf16.msra.mxu0 %v1700
      %1784 = vmatpush.bf16.msra.mxu0 %v1696
      %1785 = vmatmul.bf16.gmra.mxu0 %v1555
      %v1786 = vpop.f32.mrf.mxu0
      %v1787 = vadd.f32 %v1592, %v1786
      %v1788 = vpop.f32.mrf.mxu0
      %v1789 = vadd.f32 %v1592, %v1788
      %1790 = vmatmul.bf16.gmra.mxu0 %v1556
      %v1791 = vpop.f32.mrf.mxu0
      %v1792 = vadd.f32 %v1592, %v1791
      %v1793 = vpop.f32.mrf.mxu0
      %1794 = vdwg.mxu0
      %1795 = vmatpush.bf16.msra.mxu0 %v1725
      %1796 = vmatpush.bf16.msra.mxu0 %v1721
      %1797 = vmatpush.bf16.msra.mxu0 %v1717
      %1798 = vmatpush.bf16.msra.mxu0 %v1713
      %1799 = vmatpush.bf16.msra.mxu0 %v1709
      %1800 = vmatpush.bf16.msra.mxu0 %v1705
      %1801 = vmatpush.bf16.msra.mxu0 %v1701
      %1802 = vmatpush.bf16.msra.mxu0 %v1697
      %1803 = vmatmul.bf16.gmra.mxu0 %v1555
      %v1804 = vpop.f32.mrf.mxu0
      %v1805 = vadd.f32 %v1593, %v1804
      %v1806 = vpop.f32.mrf.mxu0
      %v1807 = vadd.f32 %v1593, %v1806
      %1808 = vmatmul.bf16.gmra.mxu0 %v1556
      %v1809 = vpop.f32.mrf.mxu0
      %v1810 = vadd.f32 %v1593, %v1809
      %v1811 = vpop.f32.mrf.mxu0
      %1812 = vdwg.mxu0
      %1813 = vmatpush.bf16.msra.mxu0 %v1726
      %1814 = vmatpush.bf16.msra.mxu0 %v1722
      %1815 = vmatpush.bf16.msra.mxu0 %v1718
      %1816 = vmatpush.bf16.msra.mxu0 %v1714
      %1817 = vmatpush.bf16.msra.mxu0 %v1710
      %1818 = vmatpush.bf16.msra.mxu0 %v1706
      %1819 = vmatpush.bf16.msra.mxu0 %v1702
      %1820 = vmatpush.bf16.msra.mxu0 %v1698
      %1821 = vmatmul.bf16.gmra.mxu0 %v1555
      %v1822 = vpop.f32.mrf.mxu0
      %v1823 = vadd.f32 %v1594, %v1822
      %v1824 = vpop.f32.mrf.mxu0
      %v1825 = vadd.f32 %v1594, %v1824
      %1826 = vmatmul.bf16.gmra.mxu0 %v1556
      %v1827 = vpop.f32.mrf.mxu0
      %v1828 = vadd.f32 %v1594, %v1827
      %v1829 = vpop.f32.mrf.mxu0
      %1830 = vdwg.mxu0
      %v1831 = vmul.f32 %v1769, %v1769
      %v1832 = vmul.f32 %v1787, %v1787
      %v1833 = vmul.f32 %v1805, %v1805
      %v1834 = vmul.f32 %v1823, %v1823
      %v1835 = vmul.f32 %v1771, %v1771
      %v1836 = vmul.f32 %v1789, %v1789
      %v1837 = vmul.f32 %v1807, %v1807
      %v1838 = vmul.f32 %v1825, %v1825
      %v1839 = vmul.f32 %v1774, %v1774
      %v1840 = vmul.f32 %v1792, %v1792
      %v1841 = vmul.f32 %v1810, %v1810
      %v1842 = vmul.f32 %v1828, %v1828
      %v1843 = vmul.f32 %v1769, %v1831
      %v1844 = vmul.f32 %v1787, %v1832
      %v1845 = vmul.f32 %v1805, %v1833
      %v1846 = vmul.f32 %v1823, %v1834
      %v1847 = vmul.f32 %v1771, %v1835
      %v1848 = vmul.f32 %v1789, %v1836
      %v1849 = vmul.f32 %v1807, %v1837
      %v1850 = vmul.f32 %v1825, %v1838
      %v1851 = vmul.f32 %v1774, %v1839
      %v1852 = vmul.f32 %v1792, %v1840
      %v1853 = vmul.f32 %v1810, %v1841
      %v1854 = vmul.f32 %v1828, %v1842
      %v1855 = vmul.f32 %v1843, 0.044715
      %v1856 = vmul.f32 %v1844, 0.044715
      %v1857 = vmul.f32 %v1845, 0.044715
      %v1858 = vmul.f32 %v1846, 0.044715
      %v1859 = vmul.f32 %v1847, 0.044715
      %v1860 = vmul.f32 %v1848, 0.044715
      %v1861 = vmul.f32 %v1849, 0.044715
      %v1862 = vmul.f32 %v1850, 0.044715
      %v1863 = vmul.f32 %v1851, 0.044715
      %v1864 = vmul.f32 %v1852, 0.044715
      %v1865 = vmul.f32 %v1853, 0.044715
      %v1866 = vmul.f32 %v1854, 0.044715
      %v1867 = vadd.f32 %v1769, %v1855
      %v1868 = vadd.f32 %v1787, %v1856
      %v1869 = vadd.f32 %v1805, %v1857
      %v1870 = vadd.f32 %v1823, %v1858
      %v1871 = vadd.f32 %v1771, %v1859
      %v1872 = vadd.f32 %v1789, %v1860
      %v1873 = vadd.f32 %v1807, %v1861
      %v1874 = vadd.f32 %v1825, %v1862
      %v1875 = vadd.f32 %v1774, %v1863
      %v1876 = vadd.f32 %v1792, %v1864
      %v1877 = vadd.f32 %v1810, %v1865
      %v1878 = vadd.f32 %v1828, %v1866
      %v1879 = vmul.f32 %v1867, 0.7978846
      %v1880 = vmul.f32 %v1868, 0.7978846
      %v1881 = vmul.f32 %v1869, 0.7978846
      %v1882 = vmul.f32 %v1870, 0.7978846
      %v1883 = vmul.f32 %v1871, 0.7978846
      %v1884 = vmul.f32 %v1872, 0.7978846
      %v1885 = vmul.f32 %v1873, 0.7978846
      %v1886 = vmul.f32 %v1874, 0.7978846
      %v1887 = vmul.f32 %v1875, 0.7978846
      %v1888 = vmul.f32 %v1876, 0.7978846
      %v1889 = vmul.f32 %v1877, 0.7978846
      %v1890 = vmul.f32 %v1878, 0.7978846
      %v1891 = vtanh.pop %v1879
      %v1892 = vtanh.pop %v1880
      %v1893 = vtanh.pop %v1881
      %v1894 = vtanh.pop %v1882
      %v1895 = vtanh.pop %v1883
      %v1896 = vtanh.pop %v1884
      %v1897 = vtanh.pop %v1885
      %v1898 = vtanh.pop %v1886
      %v1899 = vtanh.pop %v1887
      %v1900 = vtanh.pop %v1888
      %v1901 = vtanh.pop %v1889
      %v1902 = vtanh.pop %v1890
      %v1903 = vadd.f32 %v1891, 1.0
      %v1904 = vadd.f32 %v1892, 1.0
      %v1905 = vadd.f32 %v1893, 1.0
      %v1906 = vadd.f32 %v1894, 1.0
      %v1907 = vadd.f32 %v1895, 1.0
      %v1908 = vadd.f32 %v1896, 1.0
      %v1909 = vadd.f32 %v1897, 1.0
      %v1910 = vadd.f32 %v1898, 1.0
      %v1911 = vadd.f32 %v1899, 1.0
      %v1912 = vadd.f32 %v1900, 1.0
      %v1913 = vadd.f32 %v1901, 1.0
      %v1914 = vadd.f32 %v1902, 1.0
      %v1915 = vmul.f32 %v1903, 0.5
      %v1916 = vmul.f32 %v1904, 0.5
      %v1917 = vmul.f32 %v1905, 0.5
      %v1918 = vmul.f32 %v1906, 0.5
      %v1919 = vmul.f32 %v1907, 0.5
      %v1920 = vmul.f32 %v1908, 0.5
      %v1921 = vmul.f32 %v1909, 0.5
      %v1922 = vmul.f32 %v1910, 0.5
      %v1923 = vmul.f32 %v1911, 0.5
      %v1924 = vmul.f32 %v1912, 0.5
      %v1925 = vmul.f32 %v1913, 0.5
      %v1926 = vmul.f32 %v1914, 0.5
      %v1927 = vmul.f32 %v1769, %v1915
      %v1928 = vmul.f32 %v1787, %v1916
      %v1929 = vmul.f32 %v1805, %v1917
      %v1930 = vmul.f32 %v1823, %v1918
      %v1931 = vmul.f32 %v1771, %v1919
      %v1932 = vmul.f32 %v1789, %v1920
      %v1933 = vmul.f32 %v1807, %v1921
      %v1934 = vmul.f32 %v1825, %v1922
      %v1935 = vmul.f32 %v1774, %v1923
      %v1936 = vmul.f32 %v1792, %v1924
      %v1937 = vmul.f32 %v1810, %v1925
      %v1938 = vmul.f32 %v1828, %v1926
      %v1939 = vpack.c.bf16 %v1931, %v1927
      %v1940 = vpack.c.bf16 %v1932, %v1928
      %v1941 = vpack.c.bf16 %v1933, %v1929
      %v1942 = vpack.c.bf16 %v1934, %v1930
      %v1943 = vpack.c.bf16 %v1935, %v1935
      %v1944 = vpack.c.bf16 %v1936, %v1936
      %v1945 = vpack.c.bf16 %v1937, %v1937
      %v1946 = vpack.c.bf16 %v1938, %v1938
      %v1947 = vld [vmem:[%s566] sm:$0xf]
      %v1948 = vld [vmem:[%s566 + $0x4] sm:$0xf]
      %v1949 = vld [vmem:[%s566 + $0x8] sm:$0xf]
      %v1950 = vld [vmem:[%s566 + $0xc] sm:$0xf]
      %v1951 = vld [vmem:[%s566 + $0x10] sm:$0xf]
      %v1952 = vld [vmem:[%s566 + $0x14] sm:$0xf]
      %v1953 = vld [vmem:[%s566 + $0x18] sm:$0xf]
      %v1954 = vld [vmem:[%s566 + $0x1c] sm:$0xf]
      %v1955 = vld [vmem:[%s566 + $0x20] sm:$0xf]
      %v1956 = vld [vmem:[%s566 + $0x24] sm:$0xf]
      %v1957 = vld [vmem:[%s566 + $0x28] sm:$0xf]
      %v1958 = vld [vmem:[%s566 + $0x2c] sm:$0xf]
      %v1959 = vld [vmem:[%s566 + $0x30] sm:$0xf]
      %v1960 = vld [vmem:[%s566 + $0x34] sm:$0xf]
      %v1961 = vld [vmem:[%s566 + $0x38] sm:$0xf]
      %v1962 = vld [vmem:[%s566 + $0x3c] sm:$0xf]
      %v1963 = vld [vmem:[%s566 + $0x40] sm:$0xf]
      %v1964 = vld [vmem:[%s566 + $0x44] sm:$0xf]
      %v1965 = vld [vmem:[%s566 + $0x48] sm:$0xf]
      %v1966 = vld [vmem:[%s566 + $0x4c] sm:$0xf]
      %v1967 = vld [vmem:[%s566 + $0x50] sm:$0xf]
      %v1968 = vld [vmem:[%s566 + $0x54] sm:$0xf]
      %v1969 = vld [vmem:[%s566 + $0x58] sm:$0xf]
      %v1970 = vld [vmem:[%s566 + $0x5c] sm:$0xf]
      %v1971 = vld [vmem:[%s566 + $0x60] sm:$0xf]
      %v1972 = vld [vmem:[%s566 + $0x64] sm:$0xf]
      %v1973 = vld [vmem:[%s566 + $0x68] sm:$0xf]
      %v1974 = vld [vmem:[%s566 + $0x6c] sm:$0xf]
      %v1975 = vld [vmem:[%s566 + $0x70] sm:$0xf]
      %v1976 = vld [vmem:[%s566 + $0x74] sm:$0xf]
      %v1977 = vld [vmem:[%s566 + $0x78] sm:$0xf]
      %v1978 = vld [vmem:[%s566 + $0x7c] sm:$0xf]
      %v1979 = vld [vmem:[%s566 + $0x80] sm:$0xf]
      %v1980 = vld [vmem:[%s566 + $0x84] sm:$0xf]
      %v1981 = vld [vmem:[%s566 + $0x88] sm:$0xf]
      %v1982 = vld [vmem:[%s566 + $0x8c] sm:$0xf]
      %v1983 = vld [vmem:[%s566 + $0x90] sm:$0xf]
      %v1984 = vld [vmem:[%s566 + $0x94] sm:$0xf]
      %v1985 = vld [vmem:[%s566 + $0x98] sm:$0xf]
      %v1986 = vld [vmem:[%s566 + $0x9c] sm:$0xf]
      %v1987 = vld [vmem:[%s566 + $0xa0] sm:$0xf]
      %v1988 = vld [vmem:[%s566 + $0xa4] sm:$0xf]
      %v1989 = vld [vmem:[%s566 + $0xa8] sm:$0xf]
      %v1990 = vld [vmem:[%s566 + $0xac] sm:$0xf]
      %v1991 = vld [vmem:[%s566 + $0xb0] sm:$0xf]
      %v1992 = vld [vmem:[%s566 + $0xb4] sm:$0xf]
      %v1993 = vld [vmem:[%s566 + $0xb8] sm:$0xf]
      %v1994 = vld [vmem:[%s566 + $0xbc] sm:$0xf]
      %v1995 = vld [vmem:[%s566 + $0xc0] sm:$0xf]
      %v1996 = vld [vmem:[%s566 + $0xc4] sm:$0xf]
      %v1997 = vld [vmem:[%s566 + $0xc8] sm:$0xf]
      %v1998 = vld [vmem:[%s566 + $0xcc] sm:$0xf]
      %v1999 = vld [vmem:[%s566 + $0xd0] sm:$0xf]
      %v2000 = vld [vmem:[%s566 + $0xd4] sm:$0xf]
      %v2001 = vld [vmem:[%s566 + $0xd8] sm:$0xf]
      %v2002 = vld [vmem:[%s566 + $0xdc] sm:$0xf]
      %v2003 = vld [vmem:[%s566 + $0xe0] sm:$0xf]
      %v2004 = vld [vmem:[%s566 + $0xe4] sm:$0xf]
      %v2005 = vld [vmem:[%s566 + $0xe8] sm:$0xf]
      %v2006 = vld [vmem:[%s566 + $0xec] sm:$0xf]
      %v2007 = vld [vmem:[%s566 + $0xf0] sm:$0xf]
      %v2008 = vld [vmem:[%s566 + $0xf4] sm:$0xf]
      %v2009 = vld [vmem:[%s566 + $0xf8] sm:$0xf]
      %v2010 = vld [vmem:[%s566 + $0xfc] sm:$0xf]
      %v2011 = vld [vmem:[%s569] sm:$0x1]
      %v2013 = vperm.slane %v2011, 0
      %v2079 = vunpack.c.l.b16 %v1947
      %v2080 = vunpack.c.l.b16 %v1948
      %v2081 = vunpack.c.l.b16 %v1949
      %v2082 = vunpack.c.l.b16 %v1950
      %v2083 = vunpack.c.l.b16 %v1951
      %v2084 = vunpack.c.l.b16 %v1952
      %v2085 = vunpack.c.l.b16 %v1953
      %v2086 = vunpack.c.l.b16 %v1954
      %v2087 = vunpack.c.l.b16 %v1955
      %v2088 = vunpack.c.l.b16 %v1956
      %v2089 = vunpack.c.l.b16 %v1957
      %v2090 = vunpack.c.l.b16 %v1958
      %v2091 = vunpack.c.l.b16 %v1959
      %v2092 = vunpack.c.l.b16 %v1960
      %v2093 = vunpack.c.l.b16 %v1961
      %v2094 = vunpack.c.l.b16 %v1962
      %v2095 = vunpack.c.l.b16 %v1963
      %v2096 = vunpack.c.l.b16 %v1964
      %v2097 = vunpack.c.l.b16 %v1965
      %v2098 = vunpack.c.l.b16 %v1966
      %v2099 = vunpack.c.l.b16 %v1967
      %v2100 = vunpack.c.l.b16 %v1968
      %v2101 = vunpack.c.l.b16 %v1969
      %v2102 = vunpack.c.l.b16 %v1970
      %v2103 = vunpack.c.l.b16 %v1971
      %v2104 = vunpack.c.l.b16 %v1972
      %v2105 = vunpack.c.l.b16 %v1973
      %v2106 = vunpack.c.l.b16 %v1974
      %v2107 = vunpack.c.l.b16 %v1975
      %v2108 = vunpack.c.l.b16 %v1976
      %v2109 = vunpack.c.l.b16 %v1977
      %v2110 = vunpack.c.l.b16 %v1978
      %v2111 = vunpack.c.l.b16 %v1979
      %v2112 = vunpack.c.l.b16 %v1980
      %v2113 = vunpack.c.l.b16 %v1981
      %v2114 = vunpack.c.l.b16 %v1982
      %v2115 = vunpack.c.l.b16 %v1983
      %v2116 = vunpack.c.l.b16 %v1984
      %v2117 = vunpack.c.l.b16 %v1985
      %v2118 = vunpack.c.l.b16 %v1986
      %v2119 = vunpack.c.l.b16 %v1987
      %v2120 = vunpack.c.l.b16 %v1988
      %v2121 = vunpack.c.l.b16 %v1989
      %v2122 = vunpack.c.l.b16 %v1990
      %v2123 = vunpack.c.l.b16 %v1991
      %v2124 = vunpack.c.l.b16 %v1992
      %v2125 = vunpack.c.l.b16 %v1993
      %v2126 = vunpack.c.l.b16 %v1994
      %v2127 = vunpack.c.l.b16 %v1995
      %v2128 = vunpack.c.l.b16 %v1996
      %v2129 = vunpack.c.l.b16 %v1997
      %v2130 = vunpack.c.l.b16 %v1998
      %v2131 = vunpack.c.l.b16 %v1999
      %v2132 = vunpack.c.l.b16 %v2000
      %v2133 = vunpack.c.l.b16 %v2001
      %v2134 = vunpack.c.l.b16 %v2002
      %v2135 = vunpack.c.l.b16 %v2003
      %v2136 = vunpack.c.l.b16 %v2004
      %v2137 = vunpack.c.l.b16 %v2005
      %v2138 = vunpack.c.l.b16 %v2006
      %v2139 = vunpack.c.l.b16 %v2007
      %v2140 = vunpack.c.l.b16 %v2008
      %v2141 = vunpack.c.l.b16 %v2009
      %v2142 = vunpack.c.l.b16 %v2010
      %v2143 = vpack.c.b16 %v2080, %v2079
      %v2144 = vpack.c.b16 %v2082, %v2081
      %v2145 = vpack.c.b16 %v2084, %v2083
      %v2146 = vpack.c.b16 %v2086, %v2085
      %v2147 = vpack.c.b16 %v2088, %v2087
      %v2148 = vpack.c.b16 %v2090, %v2089
      %v2149 = vpack.c.b16 %v2092, %v2091
      %v2150 = vpack.c.b16 %v2094, %v2093
      %v2151 = vpack.c.b16 %v2096, %v2095
      %v2152 = vpack.c.b16 %v2098, %v2097
      %v2153 = vpack.c.b16 %v2100, %v2099
      %v2154 = vpack.c.b16 %v2102, %v2101
      %v2155 = vpack.c.b16 %v2104, %v2103
      %v2156 = vpack.c.b16 %v2106, %v2105
      %v2157 = vpack.c.b16 %v2108, %v2107
      %v2158 = vpack.c.b16 %v2110, %v2109
      %v2159 = vpack.c.b16 %v2112, %v2111
      %v2160 = vpack.c.b16 %v2114, %v2113
      %v2161 = vpack.c.b16 %v2116, %v2115
      %v2162 = vpack.c.b16 %v2118, %v2117
      %v2163 = vpack.c.b16 %v2120, %v2119
      %v2164 = vpack.c.b16 %v2122, %v2121
      %v2165 = vpack.c.b16 %v2124, %v2123
      %v2166 = vpack.c.b16 %v2126, %v2125
      %v2167 = vpack.c.b16 %v2128, %v2127
      %v2168 = vpack.c.b16 %v2130, %v2129
      %v2169 = vpack.c.b16 %v2132, %v2131
      %v2170 = vpack.c.b16 %v2134, %v2133
      %v2171 = vpack.c.b16 %v2136, %v2135
      %v2172 = vpack.c.b16 %v2138, %v2137
      %v2173 = vpack.c.b16 %v2140, %v2139
      %v2174 = vpack.c.b16 %v2142, %v2141
      %2207 = vmatpush.bf16.msra.mxu0 %v2150
      %2208 = vmatpush.bf16.msra.mxu0 %v2149
      %2209 = vmatpush.bf16.msra.mxu0 %v2148
      %2210 = vmatpush.bf16.msra.mxu0 %v2147
      %2211 = vmatpush.bf16.msra.mxu0 %v2146
      %2212 = vmatpush.bf16.msra.mxu0 %v2145
      %2213 = vmatpush.bf16.msra.mxu0 %v2144
      %2214 = vmatpush.bf16.msra.mxu0 %v2143
      %2215 = vmatmul.bf16.gmra.mxu0 %v1939
      %v2216 = vpop.f32.mrf.mxu0
      %v2217 = vadd.f32 %v2013, %v2216
      %v2218 = vpop.f32.mrf.mxu0
      %v2219 = vadd.f32 %v2013, %v2218
      %2220 = vmatmul.bf16.gmra.mxu0 %v1943
      %v2221 = vpop.f32.mrf.mxu0
      %v2222 = vadd.f32 %v2013, %v2221
      %v2223 = vpop.f32.mrf.mxu0
      %2224 = vdwg.mxu0
      %2225 = vmatpush.bf16.msra.mxu0 %v2158
      %2226 = vmatpush.bf16.msra.mxu0 %v2157
      %2227 = vmatpush.bf16.msra.mxu0 %v2156
      %2228 = vmatpush.bf16.msra.mxu0 %v2155
      %2229 = vmatpush.bf16.msra.mxu0 %v2154
      %2230 = vmatpush.bf16.msra.mxu0 %v2153
      %2231 = vmatpush.bf16.msra.mxu0 %v2152
      %2232 = vmatpush.bf16.msra.mxu0 %v2151
      %2233 = vmatmul.bf16.gmra.mxu0 %v1940
      %v2234 = vpop.f32.mrf.mxu0
      %v2235 = vadd.f32 %v2217, %v2234
      %v2236 = vpop.f32.mrf.mxu0
      %v2237 = vadd.f32 %v2219, %v2236
      %2238 = vmatmul.bf16.gmra.mxu0 %v1944
      %v2239 = vpop.f32.mrf.mxu0
      %v2240 = vadd.f32 %v2222, %v2239
      %v2241 = vpop.f32.mrf.mxu0
      %2242 = vdwg.mxu0
      %2243 = vmatpush.bf16.msra.mxu0 %v2166
      %2244 = vmatpush.bf16.msra.mxu0 %v2165
      %2245 = vmatpush.bf16.msra.mxu0 %v2164
      %2246 = vmatpush.bf16.msra.mxu0 %v2163
      %2247 = vmatpush.bf16.msra.mxu0 %v2162
      %2248 = vmatpush.bf16.msra.mxu0 %v2161
      %2249 = vmatpush.bf16.msra.mxu0 %v2160
      %2250 = vmatpush.bf16.msra.mxu0 %v2159
      %2251 = vmatmul.bf16.gmra.mxu0 %v1941
      %v2252 = vpop.f32.mrf.mxu0
      %v2253 = vadd.f32 %v2235, %v2252
      %v2254 = vpop.f32.mrf.mxu0
      %v2255 = vadd.f32 %v2237, %v2254
      %2256 = vmatmul.bf16.gmra.mxu0 %v1945
      %v2257 = vpop.f32.mrf.mxu0
      %v2258 = vadd.f32 %v2240, %v2257
      %v2259 = vpop.f32.mrf.mxu0
      %2260 = vdwg.mxu0
      %2261 = vmatpush.bf16.msra.mxu0 %v2174
      %2262 = vmatpush.bf16.msra.mxu0 %v2173
      %2263 = vmatpush.bf16.msra.mxu0 %v2172
      %2264 = vmatpush.bf16.msra.mxu0 %v2171
      %2265 = vmatpush.bf16.msra.mxu0 %v2170
      %2266 = vmatpush.bf16.msra.mxu0 %v2169
      %2267 = vmatpush.bf16.msra.mxu0 %v2168
      %2268 = vmatpush.bf16.msra.mxu0 %v2167
      %2269 = vmatmul.bf16.gmra.mxu0 %v1942
      %v2270 = vpop.f32.mrf.mxu0
      %v2271 = vadd.f32 %v2253, %v2270
      %v2272 = vpop.f32.mrf.mxu0
      %v2273 = vadd.f32 %v2255, %v2272
      %2274 = vmatmul.bf16.gmra.mxu0 %v1946
      %v2275 = vpop.f32.mrf.mxu0
      %v2276 = vadd.f32 %v2258, %v2275
      %v2277 = vpop.f32.mrf.mxu0
      %2278 = vdwg.mxu0
      %v2279 = vadd.f32 %v1480, %v2271
      %v2280 = vadd.f32 %v1481, %v2273
      %v2281 = vadd.f32 %v1482, %v2276
      %2282 = vst [vmem:[#allocation2] sm:$0xff] %v2279
      %2283 = vst [vmem:[#allocation2 + $0x8] sm:$0xff] %v2280
      %2284 = vst [vmem:[#allocation2 + $0x10] sm:$0x1] %v2281
      %p2285 = scmp.eq.s32.totalorder %s27, 1
      // Predicated region
      $region69: #{image_encoder_forward.4} parent=63 // pred_check
        %p2286 = pneg %p2285
      $region70: #{image_encoder_forward.4} parent=63 // pred_check_branch
        %2288 = sbr.rel (%p2286) target = $region72
      $region71: #{image_encoder_forward.4} parent=63 // pred_region
        %v2289 = vld [vmem:[#allocation2] sm:$0xff]
        %v2290 = vld [vmem:[#allocation2 + $0x8] sm:$0xff]
        %v2291 = vld [vmem:[#allocation2 + $0x10] sm:$0x1]
        %v2292 = vpack.c.bf16 %v2289, %v2289
        %v2293 = vpack.c.bf16 %v2290, %v2290
        %v2294 = vpack.c.bf16 %v2291, %v2291
        %2295 = vst [vmem:[%s574] sm:$0xf] %v2292
        %2296 = vst [vmem:[%s574 + $0x4] sm:$0xf] %v2293
        %vm2297 = vcmask 1040384
        %vm2298 = vsmask.f32 256
        %vm2299 = vmand %vm2297, %vm2298
        %v2300 = vld [vmem:[%s574 + $0x8] sm:$0x1]
        %v2301 = vsel %vm2299, %v2294, %v2300
        %2302 = vst [vmem:[%s574 + $0x8] sm:$0x1] %v2301
      $region72: #{image_encoder_forward.4} parent=63 // pred_fallthru
        _
      %p2303 = scmp.lt.s32.totalorder %s26, 1
      %s2304 = scalar_select %p2303, %s26, 1
      %s2305 = smul.addr %s2304, 3
      %s2306 = smul.addr %s2305, 4
      %s2307 = scalar_lea.vmem %s11, %s2306
      // Predicated region
      $region73: #{image_encoder_forward.4} parent=63 // pred_check
        %p2308 = pneg %p338
      $region74: #{image_encoder_forward.4} parent=63 // pred_check_branch
        %2310 = sbr.rel (%p2308) target = $region76
      $region75: #{image_encoder_forward.4} parent=63 // pred_region
        _
      $region76: #{image_encoder_forward.4} parent=63 // pred_fallthru
        _
    $region64: #{image_encoder_forward.4} parent=5 // pred_fallthru
      _
    %p2311 = scmp.le.s32.totalorder 2, %s17
    // Predicated region
    $region77: #{image_encoder_forward.4} parent=5 // pred_check
      %p2312 = pneg %p2311
    $region78: #{image_encoder_forward.4} parent=5 // pred_check_branch
      %2314 = sbr.rel (%p2312) target = $region80
    $region79: #{image_encoder_forward.4} parent=5 // pred_region
      %s2315 = ssub.s32 %s17, 2
      // Predicated region
      $region81: #{image_encoder_forward.4} parent=79 // pred_check
        %p2316 = pneg %p344
      $region82: #{image_encoder_forward.4} parent=79 // pred_check_branch
        %2318 = sbr.rel (%p2316) target = $region84
      $region83: #{image_encoder_forward.4} parent=79 // pred_region
        %p2319 = scmp.lt.s32.totalorder %s28, 1
        %s2320 = scalar_select %p2319, %s28, 1
        %s2321 = smul.addr %s2320, 3
        %s2322 = smul.addr %s2321, 4
        %s2323 = scalar_lea.vmem %s11, %s2322
      $region84: #{image_encoder_forward.4} parent=79 // pred_fallthru
        _
    $region80: #{image_encoder_forward.4} parent=5 // pred_fallthru
      _
  $region6: #{image_encoder_forward.4} parent=0 // loop_footer
    %s21 = sadd.s32 1, %s17
  $region7: #{image_encoder_forward.4} parent=0 // loop_footer_branch
    %16 = sbr.rel target = $region3
  $region8: #{image_encoder_forward.4} parent=0 // loop_exit
    _

</llo_original>
